<compile_context>
chip_gen: v7x
topology: tpu7x:2x2x1
jax: 0.10.0
libtpu: 0.0.40
codegen_flags: <defaults>
</compile_context>

<pallas_src>
import jax
import jax.numpy as jnp
from jax.experimental import pallas as pl
from jax.experimental.pallas import tpu as pltpu

EPS = 1e-5       # PyTorch BatchNorm default eps
CPAD = 128       # lane-dense padding of output channels


# ----------------------------------------------------------------------------
# Pallas kernels
# ----------------------------------------------------------------------------
def _conv_pool_kernel(x_ref, w_ref, o_ref):
    """Fused conv-GEMM (+folded BN/bias) + 2x2 max-pool + ReLU.

    x_ref: (4, tm, Kf) bf16 — the four 2x2-pool-window patch slabs; the last
           column of Kf is a "ones" column that carries the folded bias.
    w_ref: (Kf, 128) bf16 folded weight (bias in the last row).
    o_ref: (tm, 128) bf16 lane-dense output.
    Pool max is folded incrementally so only ~2 f32 (tm,128) tiles stay live.
    """
    w = w_ref[...]
    m = jnp.dot(x_ref[0], w, preferred_element_type=jnp.float32)
    m = jnp.maximum(m, jnp.dot(x_ref[1], w, preferred_element_type=jnp.float32))
    m = jnp.maximum(m, jnp.dot(x_ref[2], w, preferred_element_type=jnp.float32))
    m = jnp.maximum(m, jnp.dot(x_ref[3], w, preferred_element_type=jnp.float32))
    o_ref[...] = jnp.maximum(m, 0.0).astype(o_ref.dtype)   # ReLU commutes w/ max


def _fc_head_kernel(x_ref, w1_ref, w2_ref, w3_ref, b_ref, o_ref):
    """Fused fc1+bn3+relu -> fc2+bn4+relu -> fc3; intermediates stay on-chip.

    x_ref: (tm, 400) bf16, w1: (400,128) bf16, w2/w3: (128,128) bf16,
    b_ref: (8,128) f32 packed biases (row0=fc1, row1=fc2, row2=fc3).
    """
    h = jnp.dot(x_ref[...], w1_ref[...], preferred_element_type=jnp.float32)
    h = jnp.maximum(h + b_ref[0:1, :], 0.0)
    h = jnp.dot(h.astype(jnp.bfloat16), w2_ref[...],
                preferred_element_type=jnp.float32)
    h = jnp.maximum(h + b_ref[1:2, :], 0.0)
    o = jnp.dot(h.astype(jnp.bfloat16), w3_ref[...],
                preferred_element_type=jnp.float32)
    o_ref[...] = o + b_ref[2:3, :]


_COMPILER_PARAMS = pltpu.CompilerParams(
    dimension_semantics=("parallel",),          # shard M-tiles across TCs (v7x)
    vmem_limit_bytes=32 * 1024 * 1024,          # safe on v5e/v6e/v7x
)


# ----------------------------------------------------------------------------
# Helpers: BN folding, padding, tile picking
# ----------------------------------------------------------------------------
def _round_up(n, m):
    return ((n + m - 1) // m) * m


def _pick_tile(M, tile_m, *, min_steps=2, align=16):
    """Tile rows: multiple of 16 (bf16 sublanes), >=2 grid steps when possible."""
    if M <= align:
        return M                                  # block == full dim (legal)
    tm = _round_up(pl.cdiv(M, min_steps), align)
    return min(tm, _round_up(tile_m, align))


def fold_bn(w2d, b, gamma, beta, mean, var):
    """Fold inference-mode BatchNorm into a (K, Cout) weight + (Cout,) bias."""
    scale = gamma / jnp.sqrt(var + EPS)
    return w2d * scale[None, :], (b - mean) * scale + beta


# ----------------------------------------------------------------------------
# Wrappers around the kernels
# ----------------------------------------------------------------------------
def conv_bn_relu_pool(x_nhwc, conv_w, conv_b, gamma, beta, mean, var,
                      *, ksize=5, tile_m=1024):
    """Conv2d(valid) + BN(inference) + ReLU + MaxPool(2,2) in one pallas_call.

    x_nhwc: (N, H, W, Cin) (bf16 or f32).  Returns (N, Ho, Wo, 128) bf16 with
    the first Cout channels real (rest zero-padded, lane-dense).
    """
    x = x_nhwc.astype(jnp.bfloat16)
    N, H, W, Cin = x.shape
    Cout = conv_w.shape[0]
    F = Cin * ksize * ksize
    Kf = F + 1                                    # +1 "ones" column carries bias

    # Build the four pooling-window patch slabs directly with stride-2 patch
    # extraction on an (a, b)-offset view — no full-stride patches tensor, no
    # strided-slice glue.  Feature order is (cin, ky, kx), matching PyTorch's
    # conv weight layout.
    slabs = []
    Ho = Wo = None
    for a in (0, 1):                              # vertical offset in 2x2 window
        for b in (0, 1):                          # horizontal offset
            p = jax.lax.conv_general_dilated_patches(
                x[:, a:, b:, :], (ksize, ksize), (2, 2), 'VALID',
                dimension_numbers=('NHWC', 'HWIO', 'NHWC'))
            Ho, Wo = p.shape[1], p.shape[2]
            slabs.append(p.reshape(N * Ho * Wo, F))
    M = N * Ho * Wo
    slab = jnp.concatenate(
        [jnp.stack(slabs, axis=0), jnp.ones((4, M, 1), jnp.bfloat16)], axis=-1)

    # Fold BN + conv bias into a single (Kf, 128) bf16 matrix (fold in f32,
    # cast once); bias goes into the row that multiplies the "ones" column.
    w2d, bias = fold_bn(conv_w.reshape(Cout, F).T, conv_b,
                        gamma, beta, mean, var)               # (F,Cout),(Cout,)
    wk = jnp.concatenate([w2d, bias[None, :]], axis=0)        # (Kf, Cout) f32
    wk = jnp.pad(wk, ((0, 0), (0, CPAD - Cout))).astype(jnp.bfloat16)

    tm = _pick_tile(M, tile_m)
    out = pl.pallas_call(
        _conv_pool_kernel,
        out_shape=jax.ShapeDtypeStruct((M, CPAD), jnp.bfloat16),
        grid=(pl.cdiv(M, tm),),
        in_specs=[pl.BlockSpec((4, tm, Kf), lambda i: (0, i, 0)),
                  pl.BlockSpec((Kf, CPAD), lambda i: (0, 0))],
        out_specs=pl.BlockSpec((tm, CPAD), lambda i: (i, 0)),
        compiler_params=_COMPILER_PARAMS,
    )(slab, wk)
    return out.reshape(N, Ho, Wo, CPAD)


def fc_head(flat_hwc, p, *, tile_m=512):
    """Fused FC tail.  flat_hwc: (N, 400) flattened in (h, w, c) order."""
    N, Fin = flat_hwc.shape

    # Permute fc1 columns from PyTorch's (c, h, w) flatten order to our (h, w, c)
    # order so no activation transpose is needed on the forward path.
    hh, ww, cc = jnp.meshgrid(jnp.arange(5), jnp.arange(5), jnp.arange(16),
                              indexing='ij')
    perm = (cc * 25 + hh * 5 + ww).reshape(-1)                      # (400,)
    w1 = p['fc1_w'][:, perm]

    w1f, b1 = fold_bn(w1.T, p['fc1_b'],
                      p['bn3_gamma'], p['bn3_beta'], p['bn3_mean'], p['bn3_var'])
    w2f, b2 = fold_bn(p['fc2_w'].T, p['fc2_b'],
                      p['bn4_gamma'], p['bn4_beta'], p['bn4_mean'], p['bn4_var'])
    w3f, b3 = p['fc3_w'].T, p['fc3_b']

    # Resident weights: pad only the lane (output) dims to 128; W2/W3 rows are
    # padded to 128 so the on-chip (tm,128) intermediates feed them directly.
    W1 = jnp.pad(w1f, ((0, 0), (0, CPAD - w1f.shape[1]))).astype(jnp.bfloat16)
    W2 = jnp.pad(w2f, ((0, CPAD - w2f.shape[0]),
                       (0, CPAD - w2f.shape[1]))).astype(jnp.bfloat16)
    W3 = jnp.pad(w3f, ((0, CPAD - w3f.shape[0]),
                       (0, CPAD - w3f.shape[1]))).astype(jnp.bfloat16)
    B = jnp.stack([jnp.pad(b1, (0, CPAD - b1.shape[0])),
                   jnp.pad(b2, (0, CPAD - b2.shape[0])),
                   jnp.pad(b3, (0, CPAD - b3.shape[0]))], axis=0)
    B = jnp.pad(B, ((0, 8 - 3), (0, 0)))          # single (8,128) f32 bias block

    x = flat_hwc.astype(jnp.bfloat16)             # (N, 400), no K zero-padding

    tm = _pick_tile(N, tile_m)
    out = pl.pallas_call(
        _fc_head_kernel,
        out_shape=jax.ShapeDtypeStruct((N, CPAD), jnp.float32),
        grid=(pl.cdiv(N, tm),),
        in_specs=[pl.BlockSpec((tm, Fin), lambda i: (i, 0)),
                  pl.BlockSpec((Fin, CPAD), lambda i: (0, 0)),
                  pl.BlockSpec((CPAD, CPAD), lambda i: (0, 0)),
                  pl.BlockSpec((CPAD, CPAD), lambda i: (0, 0)),
                  pl.BlockSpec((8, CPAD), lambda i: (0, 0))],
        out_specs=pl.BlockSpec((tm, CPAD), lambda i: (i, 0)),
        compiler_params=_COMPILER_PARAMS,
    )(x, W1, W2, W3, B)
    return out[:, :10]


# ----------------------------------------------------------------------------
# Parameters
# ----------------------------------------------------------------------------
def init_lenet_params(key):
    ks = jax.random.split(key, 10)

    def u(k, shape, fan_in):
        bound = 1.0 / jnp.sqrt(jnp.float32(fan_in))
        return jax.random.uniform(k, shape, jnp.float32, -bound, bound)

    p = {
        "conv1_w": u(ks[0], (6, 3, 5, 5), 3 * 25),
        "conv1_b": u(ks[1], (6,), 3 * 25),
        "conv2_w": u(ks[2], (16, 6, 5, 5), 6 * 25),
        "conv2_b": u(ks[3], (16,), 6 * 25),
        "fc1_w": u(ks[4], (120, 400), 400),
        "fc1_b": u(ks[5], (120,), 400),
        "fc2_w": u(ks[6], (84, 120), 120),
        "fc2_b": u(ks[7], (84,), 120),
        "fc3_w": u(ks[8], (10, 84), 84),
        "fc3_b": u(ks[9], (10,), 84),
    }
    # BatchNorm at PyTorch defaults (gamma=1, beta=0, running stats 0/1).
    # TODO(synk): training-mode BN (batch statistics) not implemented; BN is
    # folded in inference mode.
    for name, c in (("bn1", 6), ("bn2", 16), ("bn3", 120), ("bn4", 84)):
        p[name + "_gamma"] = jnp.ones((c,), jnp.float32)
        p[name + "_beta"] = jnp.zeros((c,), jnp.float32)
        p[name + "_mean"] = jnp.zeros((c,), jnp.float32)
        p[name + "_var"] = jnp.ones((c,), jnp.float32)
    return p


# ----------------------------------------------------------------------------
# LeNet forward (Pallas path): 3 pallas_calls total
# ----------------------------------------------------------------------------
def lenet_forward(params, x_nchw):
    p = params
    x = jnp.transpose(x_nchw, (0, 2, 3, 1)).astype(jnp.bfloat16)   # NHWC bf16

    y = conv_bn_relu_pool(x, p['conv1_w'], p['conv1_b'],
                          p['bn1_gamma'], p['bn1_beta'],
                          p['bn1_mean'], p['bn1_var'])            # (N,14,14,128)
    y = conv_bn_relu_pool(y[..., :6], p['conv2_w'], p['conv2_b'],
                          p['bn2_gamma'], p['bn2_beta'],
                          p['bn2_mean'], p['bn2_var'])            # (N,5,5,128)
    N = y.shape[0]
    flat = y[..., :16].reshape(N, 400)                            # (h,w,c) order
    return fc_head(flat, p)                                       # (N,10) f32


# ----------------------------------------------------------------------------
# Pure-XLA f32 reference (independent of the Pallas path) for correctness check
# ----------------------------------------------------------------------------
def lenet_ref(params, x_nchw):
    p = params
    hi = jax.lax.Precision.HIGHEST

    def conv_block(x, w, b, g, bt, m, v):
        y = jax.lax.conv_general_dilated(
            x, w, (1, 1), 'VALID',
            dimension_numbers=('NCHW', 'OIHW', 'NCHW'), precision=hi)
        y = y + b[None, :, None, None]
        scale = g / jnp.sqrt(v + EPS)
        y = (y - m[None, :, None, None]) * scale[None, :, None, None] \
            + bt[None, :, None, None]
        y = jnp.maximum(y, 0.0)
        N, C, H, W = y.shape
        return y.reshape(N, C, H // 2, 2, W // 2, 2).max(axis=(3, 5))

    x = conv_block(x_nchw, p['conv1_w'], p['conv1_b'],
                   p['bn1_gamma'], p['bn1_beta'], p['bn1_mean'], p['bn1_var'])
    x = conv_block(x, p['conv2_w'], p['conv2_b'],
                   p['bn2_gamma'], p['bn2_beta'], p['bn2_mean'], p['bn2_var'])
    N = x.shape[0]
    flat = x.reshape(N, -1)                                       # PyTorch (c,h,w)

    def lin_bn_relu(x, w, b, g, bt, m, v):
        y = jnp.dot(x, w.T, precision=hi) + b
        scale = g / jnp.sqrt(v + EPS)
        return jnp.maximum((y - m) * scale + bt, 0.0)

    h = lin_bn_relu(flat, p['fc1_w'], p['fc1_b'],
                    p['bn3_gamma'], p['bn3_beta'], p['bn3_mean'], p['bn3_var'])
    h = lin_bn_relu(h, p['fc2_w'], p['fc2_b'],
                    p['bn4_gamma'], p['bn4_beta'], p['bn4_mean'], p['bn4_var'])
    return jnp.dot(h, p['fc3_w'].T, precision=hi) + p['fc3_b']


if __name__ == "__main__":
    key = jax.random.PRNGKey(0)
    pkey, xkey = jax.random.split(key)
    params = init_lenet_params(pkey)
    x = jax.random.normal(xkey, (2, 3, 32, 32), jnp.float32)      # LeNet expects 32x32

    out = jax.jit(lenet_forward)(params, x)
    out = jax.block_until_ready(out)
    assert out.shape == (2, 10)

    # bf16 operands with f32 accumulation vs. an f32 HIGHEST-precision
    # reference: tolerance sized for bf16 rounding, still catches any
    # structural bug (wrong layout/permutation errors are O(0.1+)).
    ref = lenet_ref(params, x)
    err = jnp.max(jnp.abs(out - ref))
    assert jnp.allclose(out, ref, atol=3e-2, rtol=3e-2), (err, out, ref)

    print("KERNEL_OK")
</pallas_src>

<mosaic_0001>
module attributes {stable_mosaic.version = 11 : i64} {
  func.func @_conv_pool_kernel(%arg0: i32, %arg1: memref<4x208x76xbf16, #tpu.memory_space<vmem>>, %arg2: memref<76x128xbf16, #tpu.memory_space<vmem>>, %arg3: memref<208x128xbf16, #tpu.memory_space<vmem>>) attributes {dimension_semantics = [#tpu.dimension_semantics<parallel>], iteration_bounds = array<i64: 2>, scalar_prefetch = 0 : i64, scratch_operands = 0 : i64, tpu.core_type = #tpu.core_type<tc>, window_params = [{transform_indices = @transform_0, window_bounds = array<i64: 4, 208, 76>}, {pipeline_mode = #tpu.pipeline_mode<synchronous>, transform_indices = @transform_1, window_bounds = array<i64: 76, 128>}, {transform_indices = @transform_2, window_bounds = array<i64: 208, 128>}]} {
    %c0 = arith.constant 0 : index
    %c0_0 = arith.constant 0 : index
    %0 = vector.load %arg2[%c0, %c0_0] : memref<76x128xbf16, #tpu.memory_space<vmem>>, vector<76x128xbf16>
    %c0_1 = arith.constant 0 : index
    %c0_2 = arith.constant 0 : index
    %c0_3 = arith.constant 0 : index
    %1 = vector.load %arg1[%c0_1, %c0_2, %c0_3] : memref<4x208x76xbf16, #tpu.memory_space<vmem>>, vector<1x208x76xbf16>
    %2 = vector.shape_cast %1 : vector<1x208x76xbf16> to vector<208x76xbf16>
    %cst = arith.constant dense<0.000000e+00> : vector<208x128xf32>
    %3 = tpu.matmul %2, %0, %cst {dimension_numbers = #tpu.dot_dimension_numbers<[1], [0], [0], [1], [0, 0, 1, 1], [], []>} : vector<208x76xbf16>, vector<76x128xbf16>, vector<208x128xf32> -> vector<208x128xf32>
    %c1 = arith.constant 1 : index
    %c0_4 = arith.constant 0 : index
    %c0_5 = arith.constant 0 : index
    %4 = vector.load %arg1[%c1, %c0_4, %c0_5] : memref<4x208x76xbf16, #tpu.memory_space<vmem>>, vector<1x208x76xbf16>
    %5 = vector.shape_cast %4 : vector<1x208x76xbf16> to vector<208x76xbf16>
    %cst_6 = arith.constant dense<0.000000e+00> : vector<208x128xf32>
    %6 = tpu.matmul %5, %0, %cst_6 {dimension_numbers = #tpu.dot_dimension_numbers<[1], [0], [0], [1], [0, 0, 1, 1], [], []>} : vector<208x76xbf16>, vector<76x128xbf16>, vector<208x128xf32> -> vector<208x128xf32>
    %7 = arith.maximumf %3, %6 : vector<208x128xf32>
    %c2 = arith.constant 2 : index
    %c0_7 = arith.constant 0 : index
    %c0_8 = arith.constant 0 : index
    %8 = vector.load %arg1[%c2, %c0_7, %c0_8] : memref<4x208x76xbf16, #tpu.memory_space<vmem>>, vector<1x208x76xbf16>
    %9 = vector.shape_cast %8 : vector<1x208x76xbf16> to vector<208x76xbf16>
    %cst_9 = arith.constant dense<0.000000e+00> : vector<208x128xf32>
    %10 = tpu.matmul %9, %0, %cst_9 {dimension_numbers = #tpu.dot_dimension_numbers<[1], [0], [0], [1], [0, 0, 1, 1], [], []>} : vector<208x76xbf16>, vector<76x128xbf16>, vector<208x128xf32> -> vector<208x128xf32>
    %11 = arith.maximumf %7, %10 : vector<208x128xf32>
    %c3 = arith.constant 3 : index
    %c0_10 = arith.constant 0 : index
    %c0_11 = arith.constant 0 : index
    %12 = vector.load %arg1[%c3, %c0_10, %c0_11] : memref<4x208x76xbf16, #tpu.memory_space<vmem>>, vector<1x208x76xbf16>
    %13 = vector.shape_cast %12 : vector<1x208x76xbf16> to vector<208x76xbf16>
    %cst_12 = arith.constant dense<0.000000e+00> : vector<208x128xf32>
    %14 = tpu.matmul %13, %0, %cst_12 {dimension_numbers = #tpu.dot_dimension_numbers<[1], [0], [0], [1], [0, 0, 1, 1], [], []>} : vector<208x76xbf16>, vector<76x128xbf16>, vector<208x128xf32> -> vector<208x128xf32>
    %15 = arith.maximumf %11, %14 : vector<208x128xf32>
    %cst_13 = arith.constant 0.000000e+00 : f32
    %16 = vector.broadcast %cst_13 : f32 to vector<208x128xf32>
    %17 = arith.maximumf %15, %16 : vector<208x128xf32>
    %18 = arith.truncf %17 : vector<208x128xf32> to vector<208x128xbf16>
    %c0_14 = arith.constant 0 : index
    %c0_15 = arith.constant 0 : index
    %19 = vector.load %arg3[%c0_14, %c0_15] : memref<208x128xbf16, #tpu.memory_space<vmem>>, vector<208x128xbf16>
    tpu.vector_store %arg3[%c0_14, %c0_15], %18 {strides = array<i32>} : memref<208x128xbf16, #tpu.memory_space<vmem>>, vector<208x128xbf16>,
    return
  }
  func.func @transform_0(%arg0: i32) -> (i32, i32, i32) {
    %c0_i32 = arith.constant 0 : i32
    %c0_i32_0 = arith.constant 0 : i32
    %c0_i32_1 = arith.constant 0 : i32
    return %c0_i32, %arg0, %c0_i32_0 : i32, i32, i32
  }
  func.func @transform_1(%arg0: i32) -> (i32, i32) {
    %c0_i32 = arith.constant 0 : i32
    %c0_i32_0 = arith.constant 0 : i32
    %c0_i32_1 = arith.constant 0 : i32
    return %c0_i32, %c0_i32_0 : i32, i32
  }
  func.func @transform_2(%arg0: i32) -> (i32, i32) {
    %c0_i32 = arith.constant 0 : i32
    %c0_i32_0 = arith.constant 0 : i32
    return %arg0, %c0_i32 : i32, i32
  }
}

module attributes {stable_mosaic.version = 11 : i64} {
  func.func @_conv_pool_kernel(%arg0: i32, %arg1: memref<4x32x151xbf16, #tpu.memory_space<vmem>>, %arg2: memref<151x128xbf16, #tpu.memory_space<vmem>>, %arg3: memref<32x128xbf16, #tpu.memory_space<vmem>>) attributes {dimension_semantics = [#tpu.dimension_semantics<parallel>], iteration_bounds = array<i64: 2>, scalar_prefetch = 0 : i64, scratch_operands = 0 : i64, tpu.core_type = #tpu.core_type<tc>, window_params = [{transform_indices = @transform_0, window_bounds = array<i64: 4, 32, 151>}, {pipeline_mode = #tpu.pipeline_mode<synchronous>, transform_indices = @transform_1, window_bounds = array<i64: 151, 128>}, {transform_indices = @transform_2, window_bounds = array<i64: 32, 128>}]} {
    %c0 = arith.constant 0 : index
    %c0_0 = arith.constant 0 : index
    %0 = vector.load %arg2[%c0, %c0_0] : memref<151x128xbf16, #tpu.memory_space<vmem>>, vector<151x128xbf16>
    %c0_1 = arith.constant 0 : index
    %c0_2 = arith.constant 0 : index
    %c0_3 = arith.constant 0 : index
    %1 = vector.load %arg1[%c0_1, %c0_2, %c0_3] : memref<4x32x151xbf16, #tpu.memory_space<vmem>>, vector<1x32x151xbf16>
    %2 = vector.shape_cast %1 : vector<1x32x151xbf16> to vector<32x151xbf16>
    %cst = arith.constant dense<0.000000e+00> : vector<32x128xf32>
    %3 = tpu.matmul %2, %0, %cst {dimension_numbers = #tpu.dot_dimension_numbers<[1], [0], [0], [1], [0, 0, 1, 1], [], []>} : vector<32x151xbf16>, vector<151x128xbf16>, vector<32x128xf32> -> vector<32x128xf32>
    %c1 = arith.constant 1 : index
    %c0_4 = arith.constant 0 : index
    %c0_5 = arith.constant 0 : index
    %4 = vector.load %arg1[%c1, %c0_4, %c0_5] : memref<4x32x151xbf16, #tpu.memory_space<vmem>>, vector<1x32x151xbf16>
    %5 = vector.shape_cast %4 : vector<1x32x151xbf16> to vector<32x151xbf16>
    %cst_6 = arith.constant dense<0.000000e+00> : vector<32x128xf32>
    %6 = tpu.matmul %5, %0, %cst_6 {dimension_numbers = #tpu.dot_dimension_numbers<[1], [0], [0], [1], [0, 0, 1, 1], [], []>} : vector<32x151xbf16>, vector<151x128xbf16>, vector<32x128xf32> -> vector<32x128xf32>
    %7 = arith.maximumf %3, %6 : vector<32x128xf32>
    %c2 = arith.constant 2 : index
    %c0_7 = arith.constant 0 : index
    %c0_8 = arith.constant 0 : index
    %8 = vector.load %arg1[%c2, %c0_7, %c0_8] : memref<4x32x151xbf16, #tpu.memory_space<vmem>>, vector<1x32x151xbf16>
    %9 = vector.shape_cast %8 : vector<1x32x151xbf16> to vector<32x151xbf16>
    %cst_9 = arith.constant dense<0.000000e+00> : vector<32x128xf32>
    %10 = tpu.matmul %9, %0, %cst_9 {dimension_numbers = #tpu.dot_dimension_numbers<[1], [0], [0], [1], [0, 0, 1, 1], [], []>} : vector<32x151xbf16>, vector<151x128xbf16>, vector<32x128xf32> -> vector<32x128xf32>
    %11 = arith.maximumf %7, %10 : vector<32x128xf32>
    %c3 = arith.constant 3 : index
    %c0_10 = arith.constant 0 : index
    %c0_11 = arith.constant 0 : index
    %12 = vector.load %arg1[%c3, %c0_10, %c0_11] : memref<4x32x151xbf16, #tpu.memory_space<vmem>>, vector<1x32x151xbf16>
    %13 = vector.shape_cast %12 : vector<1x32x151xbf16> to vector<32x151xbf16>
    %cst_12 = arith.constant dense<0.000000e+00> : vector<32x128xf32>
    %14 = tpu.matmul %13, %0, %cst_12 {dimension_numbers = #tpu.dot_dimension_numbers<[1], [0], [0], [1], [0, 0, 1, 1], [], []>} : vector<32x151xbf16>, vector<151x128xbf16>, vector<32x128xf32> -> vector<32x128xf32>
    %15 = arith.maximumf %11, %14 : vector<32x128xf32>
    %cst_13 = arith.constant 0.000000e+00 : f32
    %16 = vector.broadcast %cst_13 : f32 to vector<32x128xf32>
    %17 = arith.maximumf %15, %16 : vector<32x128xf32>
    %18 = arith.truncf %17 : vector<32x128xf32> to vector<32x128xbf16>
    %c0_14 = arith.constant 0 : index
    %c0_15 = arith.constant 0 : index
    %19 = vector.load %arg3[%c0_14, %c0_15] : memref<32x128xbf16, #tpu.memory_space<vmem>>, vector<32x128xbf16>
    tpu.vector_store %arg3[%c0_14, %c0_15], %18 {strides = array<i32>} : memref<32x128xbf16, #tpu.memory_space<vmem>>, vector<32x128xbf16>,
    return
  }
  func.func @transform_0(%arg0: i32) -> (i32, i32, i32) {
    %c0_i32 = arith.constant 0 : i32
    %c0_i32_0 = arith.constant 0 : i32
    %c0_i32_1 = arith.constant 0 : i32
    return %c0_i32, %arg0, %c0_i32_0 : i32, i32, i32
  }
  func.func @transform_1(%arg0: i32) -> (i32, i32) {
    %c0_i32 = arith.constant 0 : i32
    %c0_i32_0 = arith.constant 0 : i32
    %c0_i32_1 = arith.constant 0 : i32
    return %c0_i32, %c0_i32_0 : i32, i32
  }
  func.func @transform_2(%arg0: i32) -> (i32, i32) {
    %c0_i32 = arith.constant 0 : i32
    %c0_i32_0 = arith.constant 0 : i32
    return %arg0, %c0_i32 : i32, i32
  }
}

module attributes {stable_mosaic.version = 11 : i64} {
  func.func @_fc_head_kernel(%arg0: i32, %arg1: memref<2x400xbf16, #tpu.memory_space<vmem>>, %arg2: memref<400x128xbf16, #tpu.memory_space<vmem>>, %arg3: memref<128x128xbf16, #tpu.memory_space<vmem>>, %arg4: memref<128x128xbf16, #tpu.memory_space<vmem>>, %arg5: memref<8x128xf32, #tpu.memory_space<vmem>>, %arg6: memref<2x128xf32, #tpu.memory_space<vmem>>) attributes {dimension_semantics = [#tpu.dimension_semantics<parallel>], iteration_bounds = array<i64: 1>, scalar_prefetch = 0 : i64, scratch_operands = 0 : i64, tpu.core_type = #tpu.core_type<tc>, window_params = [{transform_indices = @transform_0, window_bounds = array<i64: 2, 400>}, {pipeline_mode = #tpu.pipeline_mode<synchronous>, transform_indices = @transform_1, window_bounds = array<i64: 400, 128>}, {pipeline_mode = #tpu.pipeline_mode<synchronous>, transform_indices = @transform_2, window_bounds = array<i64: 128, 128>}, {pipeline_mode = #tpu.pipeline_mode<synchronous>, transform_indices = @transform_3, window_bounds = array<i64: 128, 128>}, {pipeline_mode = #tpu.pipeline_mode<synchronous>, transform_indices = @transform_4, window_bounds = array<i64: 8, 128>}, {transform_indices = @transform_5, window_bounds = array<i64: 2, 128>}]} {
    %c0 = arith.constant 0 : index
    %c0_0 = arith.constant 0 : index
    %0 = vector.load %arg1[%c0, %c0_0] : memref<2x400xbf16, #tpu.memory_space<vmem>>, vector<2x400xbf16>
    %c0_1 = arith.constant 0 : index
    %c0_2 = arith.constant 0 : index
    %1 = vector.load %arg2[%c0_1, %c0_2] : memref<400x128xbf16, #tpu.memory_space<vmem>>, vector<400x128xbf16>
    %cst = arith.constant dense<0.000000e+00> : vector<2x128xf32>
    %2 = tpu.matmul %0, %1, %cst {dimension_numbers = #tpu.dot_dimension_numbers<[1], [0], [0], [1], [0, 0, 1, 1], [], []>} : vector<2x400xbf16>, vector<400x128xbf16>, vector<2x128xf32> -> vector<2x128xf32>
    %c0_3 = arith.constant 0 : index
    %c0_4 = arith.constant 0 : index
    %3 = vector.load %arg5[%c0_3, %c0_4] : memref<8x128xf32, #tpu.memory_space<vmem>>, vector<1x128xf32>
    %4 = vector.broadcast %3 : vector<1x128xf32> to vector<2x128xf32>
    %5 = arith.addf %2, %4 : vector<2x128xf32>
    %cst_5 = arith.constant 0.000000e+00 : f32
    %6 = vector.broadcast %cst_5 : f32 to vector<2x128xf32>
    %7 = arith.maximumf %5, %6 : vector<2x128xf32>
    %8 = arith.truncf %7 : vector<2x128xf32> to vector<2x128xbf16>
    %c0_6 = arith.constant 0 : index
    %c0_7 = arith.constant 0 : index
    %9 = vector.load %arg3[%c0_6, %c0_7] : memref<128x128xbf16, #tpu.memory_space<vmem>>, vector<128x128xbf16>
    %cst_8 = arith.constant dense<0.000000e+00> : vector<2x128xf32>
    %10 = tpu.matmul %8, %9, %cst_8 {dimension_numbers = #tpu.dot_dimension_numbers<[1], [0], [0], [1], [0, 0, 1, 1], [], []>} : vector<2x128xbf16>, vector<128x128xbf16>, vector<2x128xf32> -> vector<2x128xf32>
    %c1 = arith.constant 1 : index
    %c0_9 = arith.constant 0 : index
    %11 = vector.load %arg5[%c1, %c0_9] : memref<8x128xf32, #tpu.memory_space<vmem>>, vector<1x128xf32>
    %12 = vector.broadcast %11 : vector<1x128xf32> to vector<2x128xf32>
    %13 = arith.addf %10, %12 : vector<2x128xf32>
    %cst_10 = arith.constant 0.000000e+00 : f32
    %14 = vector.broadcast %cst_10 : f32 to vector<2x128xf32>
    %15 = arith.maximumf %13, %14 : vector<2x128xf32>
    %16 = arith.truncf %15 : vector<2x128xf32> to vector<2x128xbf16>
    %c0_11 = arith.constant 0 : index
    %c0_12 = arith.constant 0 : index
    %17 = vector.load %arg4[%c0_11, %c0_12] : memref<128x128xbf16, #tpu.memory_space<vmem>>, vector<128x128xbf16>
    %cst_13 = arith.constant dense<0.000000e+00> : vector<2x128xf32>
    %18 = tpu.matmul %16, %17, %cst_13 {dimension_numbers = #tpu.dot_dimension_numbers<[1], [0], [0], [1], [0, 0, 1, 1], [], []>} : vector<2x128xbf16>, vector<128x128xbf16>, vector<2x128xf32> -> vector<2x128xf32>
    %c2 = arith.constant 2 : index
    %c0_14 = arith.constant 0 : index
    %19 = vector.load %arg5[%c2, %c0_14] : memref<8x128xf32, #tpu.memory_space<vmem>>, vector<1x128xf32>
    %20 = vector.broadcast %19 : vector<1x128xf32> to vector<2x128xf32>
    %21 = arith.addf %18, %20 : vector<2x128xf32>
    %c0_15 = arith.constant 0 : index
    %c0_16 = arith.constant 0 : index
    %22 = vector.load %arg6[%c0_15, %c0_16] : memref<2x128xf32, #tpu.memory_space<vmem>>, vector<2x128xf32>
    tpu.vector_store %arg6[%c0_15, %c0_16], %21 {strides = array<i32>} : memref<2x128xf32, #tpu.memory_space<vmem>>, vector<2x128xf32>,
    return
  }
  func.func @transform_0(%arg0: i32) -> (i32, i32) {
    %c0_i32 = arith.constant 0 : i32
    %c0_i32_0 = arith.constant 0 : i32
    return %arg0, %c0_i32 : i32, i32
  }
  func.func @transform_1(%arg0: i32) -> (i32, i32) {
    %c0_i32 = arith.constant 0 : i32
    %c0_i32_0 = arith.constant 0 : i32
    %c0_i32_1 = arith.constant 0 : i32
    return %c0_i32, %c0_i32_0 : i32, i32
  }
  func.func @transform_2(%arg0: i32) -> (i32, i32) {
    %c0_i32 = arith.constant 0 : i32
    %c0_i32_0 = arith.constant 0 : i32
    %c0_i32_1 = arith.constant 0 : i32
    return %c0_i32, %c0_i32_0 : i32, i32
  }
  func.func @transform_3(%arg0: i32) -> (i32, i32) {
    %c0_i32 = arith.constant 0 : i32
    %c0_i32_0 = arith.constant 0 : i32
    %c0_i32_1 = arith.constant 0 : i32
    return %c0_i32, %c0_i32_0 : i32, i32
  }
  func.func @transform_4(%arg0: i32) -> (i32, i32) {
    %c0_i32 = arith.constant 0 : i32
    %c0_i32_0 = arith.constant 0 : i32
    %c0_i32_1 = arith.constant 0 : i32
    return %c0_i32, %c0_i32_0 : i32, i32
  }
  func.func @transform_5(%arg0: i32) -> (i32, i32) {
    %c0_i32 = arith.constant 0 : i32
    %c0_i32_0 = arith.constant 0 : i32
    return %arg0, %c0_i32 : i32, i32
  }
}

</mosaic_0001>

<llo_original>
// kernel: lenet_forward.3
$region0: #{lenet_forward.3}
  #allocation0 [shape = 'u32[]', space=smem, size = 0x4, offset = 0x4, fixed_abs, tag = 'smem constant byte address 0x4 - core index']
  #allocation1 [shape = 'u32[144,128]{1,0:T(1,128)}', space=vmem, size = 0x12000, scoped, tag = 'internal scratch']
  %s0 = inlined_call_operand.vmem [shape: bf16[4,392,76], index: 0, kind: input, shape index: {}]
  %s1 = inlined_call_operand.vmem [shape: bf16[76,128], index: 1, kind: input, shape index: {}]
  %s2 = inlined_call_operand.vmem [shape: bf16[392,128], index: 2, kind: output, shape index: {}]
  %s3 = sld [smem:[#allocation0]]
  $region147: #{lenet_forward.3} parent=0
    _
  %s5 = ssub.s32 1, %s3
  %s6 = scalar_select 0, %s5, %s3
  $region1: #{lenet_forward.3} parent=0
    #allocation2 [shape = 'u8[425984]{0}', space=vmem, size = 0x68000, scoped, tag = 'input window, operand 0']
    #allocation3 [shape = 'u8[106496]{0}', space=vmem, size = 0x1a000, scoped, tag = 'output window, operand 0']
    loop: start=0, step=1, limit=4
    $region2: #{lenet_forward.3} parent=1 // loop_pre_header
      _
    $region3: #{lenet_forward.3} parent=1 // loop_header
      %s8 = sphi 0, %s12
      %p9 = scmp.ge.s32.totalorder %s8, 4
      %s18 = sphi 0, %s20
      %s21 = sphi 0, %s18
      %s22 = sphi 0, %s21
      %s38 = sphi 0, %s22
      %s42 = sphi 0, %s42
      %s44 = sphi 0, %s42
      %s45 = sphi 0, %s44
      %s59 = sphi 0, %s45
      %s65 = sphi 0, %s67
      %s68 = sphi 0, %s65
      %s69 = sphi 0, %s68
      %s85 = sphi 0, %s69
    $region4: #{lenet_forward.3} parent=1 // loop_header_branch
      %11 = sbr.rel (%p9) target = $region8
    $region5: #{lenet_forward.3} parent=1 // loop_body
      %s13 = ssub.s32 %s8, 1
      %s14 = ssub.s32 %s8, 2
      %s15 = sadd.s32 %s8, 1
      %s16 = ssub.s32 %s8, %s15
      %p17 = scmp.eq.s32.totalorder %s16, 0
      %s19 = sadd.s32 %s18, 1
      %s20 = scalar_select %p17, %s18, %s19
      %p23 = pneg %p17
      %p24 = scmp.eq.s32.totalorder %s8, 1
      %p25 = por %p23, %p24
      %p26 = scmp.ne.s32.totalorder %s18, %s21
      %p27 = scmp.eq.s32.totalorder %s8, 0
      %p28 = por %p26, %p27
      %p29 = scmp.ne.s32.totalorder %s18, %s21
      %p30 = scmp.eq.s32.totalorder %s13, 1
      %p31 = por %p29, %p30
      %p32 = scmp.ne.s32.totalorder %s21, %s22
      %p33 = scmp.eq.s32.totalorder %s13, 0
      %p34 = por %p32, %p33
      %p35 = scmp.ne.s32.totalorder %s21, %s22
      %p36 = scmp.eq.s32.totalorder %s14, 1
      %p37 = por %p35, %p36
      %p39 = scmp.ne.s32.totalorder %s22, %s38
      %p40 = scmp.eq.s32.totalorder %s14, 0
      %p41 = por %p39, %p40
      %s43 = sadd.s32 %s42, 1
      %p46 = scmp.eq.s32.totalorder %s8, 1
      %p47 = scmp.ne.s32.totalorder %s42, %s44
      %p48 = scmp.eq.s32.totalorder %s8, 0
      %p49 = por %p47, %p48
      %p50 = scmp.ne.s32.totalorder %s42, %s44
      %p51 = scmp.eq.s32.totalorder %s13, 1
      %p52 = por %p50, %p51
      %p53 = scmp.ne.s32.totalorder %s44, %s45
      %p54 = scmp.eq.s32.totalorder %s13, 0
      %p55 = por %p53, %p54
      %p56 = scmp.ne.s32.totalorder %s44, %s45
      %p57 = scmp.eq.s32.totalorder %s14, 1
      %p58 = por %p56, %p57
      %p60 = scmp.ne.s32.totalorder %s45, %s59
      %p61 = scmp.eq.s32.totalorder %s14, 0
      %p62 = por %p60, %p61
      %s63 = ssub.s32 %s8, %s15
      %p64 = scmp.eq.s32.totalorder %s63, 0
      %s66 = sadd.s32 %s65, 1
      %s67 = scalar_select %p64, %s65, %s66
      %p70 = pneg %p64
      %p71 = scmp.eq.s32.totalorder %s8, 1
      %p72 = por %p70, %p71
      %p73 = scmp.ne.s32.totalorder %s65, %s68
      %p74 = scmp.eq.s32.totalorder %s8, 0
      %p75 = por %p73, %p74
      %p76 = scmp.ne.s32.totalorder %s65, %s68
      %p77 = scmp.eq.s32.totalorder %s13, 1
      %p78 = por %p76, %p77
      %p79 = scmp.ne.s32.totalorder %s68, %s69
      %p80 = scmp.eq.s32.totalorder %s13, 0
      %p81 = por %p79, %p80
      %p82 = scmp.ne.s32.totalorder %s68, %s69
      %p83 = scmp.eq.s32.totalorder %s14, 1
      %p84 = por %p82, %p83
      %p86 = scmp.ne.s32.totalorder %s69, %s85
      %p87 = scmp.eq.s32.totalorder %s14, 0
      %p88 = por %p86, %p87
      %p89 = scmp.le.s32.totalorder 1, %s8
      %p90 = scmp.lt.s32.totalorder %s8, 3
      %p91 = pnand %p89, %p90
      %p92 = pneg %p91
      // Predicated region
      $region9: #{lenet_forward.3} parent=5 // pred_check
        _
      $region10: #{lenet_forward.3} parent=5 // pred_check_branch
        %94 = sbr.rel (%p91) target = $region12
      $region11: #{lenet_forward.3} parent=5 // pred_region
        %s95 = ssub.s32 %s8, 1
        // Predicated region
        $region13: #{lenet_forward.3} parent=11 // pred_check
          %p96 = pneg %p55
        $region14: #{lenet_forward.3} parent=11 // pred_check_branch
          %98 = sbr.rel (%p96) target = $region16
        $region15: #{lenet_forward.3} parent=11 // pred_region
          _
        $region16: #{lenet_forward.3} parent=11 // pred_fallthru
          _
      $region12: #{lenet_forward.3} parent=5 // pred_fallthru
        _
      %p99 = scmp.lt.s32.totalorder %s8, 2
      // Predicated region
      $region17: #{lenet_forward.3} parent=5 // pred_check
        %p100 = pneg %p99
      $region18: #{lenet_forward.3} parent=5 // pred_check_branch
        %102 = sbr.rel (%p100) target = $region20
      $region19: #{lenet_forward.3} parent=5 // pred_region
        // Predicated region
        $region21: #{lenet_forward.3} parent=19 // pred_check
          %p103 = pneg %p28
        $region22: #{lenet_forward.3} parent=19 // pred_check_branch
          %105 = sbr.rel (%p103) target = $region24
        $region23: #{lenet_forward.3} parent=19 // pred_region
          %s106 = sand.u32 %s18, 1
          %s107 = sand.u32 %s18, 1
          %s108 = smul.addr %s107, 416
          %s109 = scalar_lea.vmem [#allocation2], %s108
          %s110 = smul.u32 26, %s8
          %s111 = ssub.s32 49, %s110
          %p112 = scmp.lt.s32.totalorder %s111, 26
          %s113 = scalar_select %p112, %s111, 26
          %s114 = smul.u32 256, %s113
          %p115 = scmp.ne.s32.totalorder 0, %s114
          %s116 = smul.addr %s110, 4
          %s117 = scalar_lea.vmem %s0, %s116
          // Predicated region
          $region25: #{lenet_forward.3} parent=23 // pred_check
            %p118 = pneg %p115
          $region26: #{lenet_forward.3} parent=23 // pred_check_branch
            %120 = sbr.rel (%p118) target = $region28
          $region27: #{lenet_forward.3} parent=23 // pred_region
            // Predicated region
            $region29: #{lenet_forward.3} parent=27 // pred_check
              _
            $region30: #{lenet_forward.3} parent=27 // pred_check_branch
              %122 = sbr.rel target = $region32
            $region31: #{lenet_forward.3} parent=27 // pred_region
              // Predicated region
              $region51: #{lenet_forward.3} parent=31 // pred_check
                _
              $region52: #{lenet_forward.3} parent=31 // pred_check_branch
                %303 = sbr.rel (0) target = $region54
              $region53: #{lenet_forward.3} parent=31 // pred_region
                %s304 = sdiv.u32.pop %s113, 26
                %s305 = srem.u32.pop %s113, 26
                // While loop
                $region55: #{lenet_forward.3} parent=53 // loop_pre_header
                  _
                $region56: #{lenet_forward.3} parent=53 // loop_header
                  %s307 = sphi 0, %s309
                  %p308 = scmp.ge.s32.totalorder %s307, %s304
                  %s312 = sphi 0, %s317
                  %s313 = sphi %s117, %s320
                  %s314 = sphi %s109, %s321
                $region57: #{lenet_forward.3} parent=53 // loop_header_branch
                  %311 = sbr.rel (%p308) target = $region61
                $region58: #{lenet_forward.3} parent=53 // loop_body
                  %s315 = sadd.s32 1, %s312
                  %p316 = scmp.ge.s32.totalorder %s315, %s304
                  %s317 = scalar_select %p316, 0, %s315
                  %s318 = smul.u32 %s317, 104
                  %s319 = smul.u32 %s317, 104
                  %s320 = scalar_lea.vmem %s117, %s318
                  %s321 = scalar_lea.vmem %s109, %s319 [#allocation2]
                $region59: #{lenet_forward.3} parent=53 // loop_footer
                  %s309 = sadd.s32 %s307, 1
                $region60: #{lenet_forward.3} parent=53 // loop_footer_branch
                  %306 = sbr.rel target = $region56
                $region61: #{lenet_forward.3} parent=53 // loop_exit
                  _
                %s322 = sdiv.u32.pop %s113, 26
                %s323 = srem.u32.pop %s113, 26
                %s324 = smul.u32 %s322, 26
                %s325 = smul.u32 4, %s324
                %s326 = scalar_lea.vmem %s117, %s325
                %s327 = smul.u32 4, %s324
                %s328 = scalar_lea.vmem %s109, %s327 [#allocation2]
                // While loop
                $region62: #{lenet_forward.3} parent=53 // loop_pre_header
                  _
                $region63: #{lenet_forward.3} parent=53 // loop_header
                  %s330 = sphi 0, %s332
                  %p331 = scmp.ge.s32.totalorder %s330, %s323
                  %s335 = sphi 0, %s340
                  %s336 = sphi %s326, %s343
                  %s337 = sphi %s328, %s344
                $region64: #{lenet_forward.3} parent=53 // loop_header_branch
                  %334 = sbr.rel (%p331) target = $region68
                $region65: #{lenet_forward.3} parent=53 // loop_body
                  %s338 = sadd.s32 1, %s335
                  %p339 = scmp.ge.s32.totalorder %s338, %s323
                  %s340 = scalar_select %p339, 0, %s338
                  %s341 = smul.u32 %s340, 4
                  %s342 = smul.u32 %s340, 4
                  %s343 = scalar_lea.vmem %s326, %s341
                  %s344 = scalar_lea.vmem %s328, %s342 [#allocation2]
                $region66: #{lenet_forward.3} parent=53 // loop_footer
                  %s332 = sadd.s32 %s330, 1
                $region67: #{lenet_forward.3} parent=53 // loop_footer_branch
                  %329 = sbr.rel target = $region63
                $region68: #{lenet_forward.3} parent=53 // loop_exit
                  _
                %s346 = sshrl.u32 %s113, 4
                // While loop
                $region69: #{lenet_forward.3} parent=53 // loop_pre_header
                  _
                $region70: #{lenet_forward.3} parent=53 // loop_header
                  %s348 = sphi 0, %s350
                  %p349 = scmp.ge.s32.totalorder %s348, %s346
                  %s353 = sphi 0, %s486
                  %s354 = sphi %s117, %s489
                  %s355 = sphi %s109, %s490
                $region71: #{lenet_forward.3} parent=53 // loop_header_branch
                  %352 = sbr.rel (%p349) target = $region75
                $region72: #{lenet_forward.3} parent=53 // loop_body
                  %v356 = vld [vmem:[%s354] sm:$0xf]
                  %357 = vst [vmem:[%s355] sm:$0xf] %v356
                  %v358 = vld [vmem:[%s354 + $0x4] sm:$0xf]
                  %359 = vst [vmem:[%s355 + $0x4] sm:$0xf] %v358
                  %v360 = vld [vmem:[%s354 + $0x8] sm:$0xf]
                  %361 = vst [vmem:[%s355 + $0x8] sm:$0xf] %v360
                  %v362 = vld [vmem:[%s354 + $0xc] sm:$0xf]
                  %363 = vst [vmem:[%s355 + $0xc] sm:$0xf] %v362
                  %v364 = vld [vmem:[%s354 + $0x10] sm:$0xf]
                  %365 = vst [vmem:[%s355 + $0x10] sm:$0xf] %v364
                  %v366 = vld [vmem:[%s354 + $0x14] sm:$0xf]
                  %367 = vst [vmem:[%s355 + $0x14] sm:$0xf] %v366
                  %v368 = vld [vmem:[%s354 + $0x18] sm:$0xf]
                  %369 = vst [vmem:[%s355 + $0x18] sm:$0xf] %v368
                  %v370 = vld [vmem:[%s354 + $0x1c] sm:$0xf]
                  %371 = vst [vmem:[%s355 + $0x1c] sm:$0xf] %v370
                  %v372 = vld [vmem:[%s354 + $0x20] sm:$0xf]
                  %373 = vst [vmem:[%s355 + $0x20] sm:$0xf] %v372
                  %v374 = vld [vmem:[%s354 + $0x24] sm:$0xf]
                  %375 = vst [vmem:[%s355 + $0x24] sm:$0xf] %v374
                  %v376 = vld [vmem:[%s354 + $0x28] sm:$0xf]
                  %377 = vst [vmem:[%s355 + $0x28] sm:$0xf] %v376
                  %v378 = vld [vmem:[%s354 + $0x2c] sm:$0xf]
                  %379 = vst [vmem:[%s355 + $0x2c] sm:$0xf] %v378
                  %v380 = vld [vmem:[%s354 + $0x30] sm:$0xf]
                  %381 = vst [vmem:[%s355 + $0x30] sm:$0xf] %v380
                  %v382 = vld [vmem:[%s354 + $0x34] sm:$0xf]
                  %383 = vst [vmem:[%s355 + $0x34] sm:$0xf] %v382
                  %v384 = vld [vmem:[%s354 + $0x38] sm:$0xf]
                  %385 = vst [vmem:[%s355 + $0x38] sm:$0xf] %v384
                  %v386 = vld [vmem:[%s354 + $0x3c] sm:$0xf]
                  %387 = vst [vmem:[%s355 + $0x3c] sm:$0xf] %v386
                  %v388 = vld [vmem:[%s354 + $0xc4] sm:$0xf]
                  %389 = vst [vmem:[%s355 + $0x68] sm:$0xf] %v388
                  %v390 = vld [vmem:[%s354 + $0xc8] sm:$0xf]
                  %391 = vst [vmem:[%s355 + $0x6c] sm:$0xf] %v390
                  %v392 = vld [vmem:[%s354 + $0xcc] sm:$0xf]
                  %393 = vst [vmem:[%s355 + $0x70] sm:$0xf] %v392
                  %v394 = vld [vmem:[%s354 + $0xd0] sm:$0xf]
                  %395 = vst [vmem:[%s355 + $0x74] sm:$0xf] %v394
                  %v396 = vld [vmem:[%s354 + $0xd4] sm:$0xf]
                  %397 = vst [vmem:[%s355 + $0x78] sm:$0xf] %v396
                  %v398 = vld [vmem:[%s354 + $0xd8] sm:$0xf]
                  %399 = vst [vmem:[%s355 + $0x7c] sm:$0xf] %v398
                  %v400 = vld [vmem:[%s354 + $0xdc] sm:$0xf]
                  %401 = vst [vmem:[%s355 + $0x80] sm:$0xf] %v400
                  %v402 = vld [vmem:[%s354 + $0xe0] sm:$0xf]
                  %403 = vst [vmem:[%s355 + $0x84] sm:$0xf] %v402
                  %v404 = vld [vmem:[%s354 + $0xe4] sm:$0xf]
                  %405 = vst [vmem:[%s355 + $0x88] sm:$0xf] %v404
                  %v406 = vld [vmem:[%s354 + $0xe8] sm:$0xf]
                  %407 = vst [vmem:[%s355 + $0x8c] sm:$0xf] %v406
                  %v408 = vld [vmem:[%s354 + $0xec] sm:$0xf]
                  %409 = vst [vmem:[%s355 + $0x90] sm:$0xf] %v408
                  %v410 = vld [vmem:[%s354 + $0xf0] sm:$0xf]
                  %411 = vst [vmem:[%s355 + $0x94] sm:$0xf] %v410
                  %v412 = vld [vmem:[%s354 + $0xf4] sm:$0xf]
                  %413 = vst [vmem:[%s355 + $0x98] sm:$0xf] %v412
                  %v414 = vld [vmem:[%s354 + $0xf8] sm:$0xf]
                  %415 = vst [vmem:[%s355 + $0x9c] sm:$0xf] %v414
                  %v416 = vld [vmem:[%s354 + $0xfc] sm:$0xf]
                  %417 = vst [vmem:[%s355 + $0xa0] sm:$0xf] %v416
                  %v418 = vld [vmem:[%s354 + $0x100] sm:$0xf]
                  %419 = vst [vmem:[%s355 + $0xa4] sm:$0xf] %v418
                  %v420 = vld [vmem:[%s354 + $0x188] sm:$0xf]
                  %421 = vst [vmem:[%s355 + $0xd0] sm:$0xf] %v420
                  %v422 = vld [vmem:[%s354 + $0x18c] sm:$0xf]
                  %423 = vst [vmem:[%s355 + $0xd4] sm:$0xf] %v422
                  %v424 = vld [vmem:[%s354 + $0x190] sm:$0xf]
                  %425 = vst [vmem:[%s355 + $0xd8] sm:$0xf] %v424
                  %v426 = vld [vmem:[%s354 + $0x194] sm:$0xf]
                  %427 = vst [vmem:[%s355 + $0xdc] sm:$0xf] %v426
                  %v428 = vld [vmem:[%s354 + $0x198] sm:$0xf]
                  %429 = vst [vmem:[%s355 + $0xe0] sm:$0xf] %v428
                  %v430 = vld [vmem:[%s354 + $0x19c] sm:$0xf]
                  %431 = vst [vmem:[%s355 + $0xe4] sm:$0xf] %v430
                  %v432 = vld [vmem:[%s354 + $0x1a0] sm:$0xf]
                  %433 = vst [vmem:[%s355 + $0xe8] sm:$0xf] %v432
                  %v434 = vld [vmem:[%s354 + $0x1a4] sm:$0xf]
                  %435 = vst [vmem:[%s355 + $0xec] sm:$0xf] %v434
                  %v436 = vld [vmem:[%s354 + $0x1a8] sm:$0xf]
                  %437 = vst [vmem:[%s355 + $0xf0] sm:$0xf] %v436
                  %v438 = vld [vmem:[%s354 + $0x1ac] sm:$0xf]
                  %439 = vst [vmem:[%s355 + $0xf4] sm:$0xf] %v438
                  %v440 = vld [vmem:[%s354 + $0x1b0] sm:$0xf]
                  %441 = vst [vmem:[%s355 + $0xf8] sm:$0xf] %v440
                  %v442 = vld [vmem:[%s354 + $0x1b4] sm:$0xf]
                  %443 = vst [vmem:[%s355 + $0xfc] sm:$0xf] %v442
                  %v444 = vld [vmem:[%s354 + $0x1b8] sm:$0xf]
                  %445 = vst [vmem:[%s355 + $0x100] sm:$0xf] %v444
                  %v446 = vld [vmem:[%s354 + $0x1bc] sm:$0xf]
                  %447 = vst [vmem:[%s355 + $0x104] sm:$0xf] %v446
                  %v448 = vld [vmem:[%s354 + $0x1c0] sm:$0xf]
                  %449 = vst [vmem:[%s355 + $0x108] sm:$0xf] %v448
                  %v450 = vld [vmem:[%s354 + $0x1c4] sm:$0xf]
                  %451 = vst [vmem:[%s355 + $0x10c] sm:$0xf] %v450
                  %v452 = vld [vmem:[%s354 + $0x24c] sm:$0xf]
                  %453 = vst [vmem:[%s355 + $0x138] sm:$0xf] %v452
                  %v454 = vld [vmem:[%s354 + $0x250] sm:$0xf]
                  %455 = vst [vmem:[%s355 + $0x13c] sm:$0xf] %v454
                  %v456 = vld [vmem:[%s354 + $0x254] sm:$0xf]
                  %457 = vst [vmem:[%s355 + $0x140] sm:$0xf] %v456
                  %v458 = vld [vmem:[%s354 + $0x258] sm:$0xf]
                  %459 = vst [vmem:[%s355 + $0x144] sm:$0xf] %v458
                  %v460 = vld [vmem:[%s354 + $0x25c] sm:$0xf]
                  %461 = vst [vmem:[%s355 + $0x148] sm:$0xf] %v460
                  %v462 = vld [vmem:[%s354 + $0x260] sm:$0xf]
                  %463 = vst [vmem:[%s355 + $0x14c] sm:$0xf] %v462
                  %v464 = vld [vmem:[%s354 + $0x264] sm:$0xf]
                  %465 = vst [vmem:[%s355 + $0x150] sm:$0xf] %v464
                  %v466 = vld [vmem:[%s354 + $0x268] sm:$0xf]
                  %467 = vst [vmem:[%s355 + $0x154] sm:$0xf] %v466
                  %v468 = vld [vmem:[%s354 + $0x26c] sm:$0xf]
                  %469 = vst [vmem:[%s355 + $0x158] sm:$0xf] %v468
                  %v470 = vld [vmem:[%s354 + $0x270] sm:$0xf]
                  %471 = vst [vmem:[%s355 + $0x15c] sm:$0xf] %v470
                  %v472 = vld [vmem:[%s354 + $0x274] sm:$0xf]
                  %473 = vst [vmem:[%s355 + $0x160] sm:$0xf] %v472
                  %v474 = vld [vmem:[%s354 + $0x278] sm:$0xf]
                  %475 = vst [vmem:[%s355 + $0x164] sm:$0xf] %v474
                  %v476 = vld [vmem:[%s354 + $0x27c] sm:$0xf]
                  %477 = vst [vmem:[%s355 + $0x168] sm:$0xf] %v476
                  %v478 = vld [vmem:[%s354 + $0x280] sm:$0xf]
                  %479 = vst [vmem:[%s355 + $0x16c] sm:$0xf] %v478
                  %v480 = vld [vmem:[%s354 + $0x284] sm:$0xf]
                  %481 = vst [vmem:[%s355 + $0x170] sm:$0xf] %v480
                  %v482 = vld [vmem:[%s354 + $0x288] sm:$0xf]
                  %483 = vst [vmem:[%s355 + $0x174] sm:$0xf] %v482
                  %s484 = sadd.s32 1, %s353
                  %p485 = scmp.ge.s32.totalorder %s484, %s346
                  %s486 = scalar_select %p485, 0, %s484
                  %s487 = smul.u32 %s486, 64
                  %s488 = smul.u32 %s486, 64
                  %s489 = scalar_lea.vmem %s117, %s487
                  %s490 = scalar_lea.vmem %s109, %s488 [#allocation2]
                $region73: #{lenet_forward.3} parent=53 // loop_footer
                  %s350 = sadd.s32 %s348, 1
                $region74: #{lenet_forward.3} parent=53 // loop_footer_branch
                  %347 = sbr.rel target = $region70
                $region75: #{lenet_forward.3} parent=53 // loop_exit
                  _
                %s491 = sshrl.u32 %s113, 4
                %s492 = sand.u32 %s113, 15
                %s493 = smul.u32 %s491, 16
                %s494 = smul.u32 4, %s493
                %s495 = scalar_lea.vmem %s117, %s494
                %s496 = smul.u32 4, %s493
                %s497 = scalar_lea.vmem %s109, %s496 [#allocation2]
                // While loop
                $region76: #{lenet_forward.3} parent=53 // loop_pre_header
                  _
                $region77: #{lenet_forward.3} parent=53 // loop_header
                  %s499 = sphi 0, %s501
                  %p500 = scmp.ge.s32.totalorder %s499, %s492
                  %s504 = sphi 0, %s517
                  %s505 = sphi %s495, %s520
                  %s506 = sphi %s497, %s521
                $region78: #{lenet_forward.3} parent=53 // loop_header_branch
                  %503 = sbr.rel (%p500) target = $region82
                $region79: #{lenet_forward.3} parent=53 // loop_body
                  %v507 = vld [vmem:[%s505] sm:$0xf]
                  %508 = vst [vmem:[%s506] sm:$0xf] %v507
                  %v509 = vld [vmem:[%s505 + $0xc4] sm:$0xf]
                  %510 = vst [vmem:[%s506 + $0x68] sm:$0xf] %v509
                  %v511 = vld [vmem:[%s505 + $0x188] sm:$0xf]
                  %512 = vst [vmem:[%s506 + $0xd0] sm:$0xf] %v511
                  %v513 = vld [vmem:[%s505 + $0x24c] sm:$0xf]
                  %514 = vst [vmem:[%s506 + $0x138] sm:$0xf] %v513
                  %s515 = sadd.s32 1, %s504
                  %p516 = scmp.ge.s32.totalorder %s515, %s492
                  %s517 = scalar_select %p516, 0, %s515
                  %s518 = smul.u32 %s517, 4
                  %s519 = smul.u32 %s517, 4
                  %s520 = scalar_lea.vmem %s495, %s518
                  %s521 = scalar_lea.vmem %s497, %s519 [#allocation2]
                $region80: #{lenet_forward.3} parent=53 // loop_footer
                  %s501 = sadd.s32 %s499, 1
                $region81: #{lenet_forward.3} parent=53 // loop_footer_branch
                  %498 = sbr.rel target = $region77
                $region82: #{lenet_forward.3} parent=53 // loop_exit
                  _
              $region54: #{lenet_forward.3} parent=31 // pred_fallthru
                _
            $region32: #{lenet_forward.3} parent=27 // pred_fallthru
              _
            // Predicated region
            $region33: #{lenet_forward.3} parent=27 // pred_check
              _
            $region34: #{lenet_forward.3} parent=27 // pred_check_branch
              %124 = sbr.rel (0) target = $region36
            $region35: #{lenet_forward.3} parent=27 // pred_region
              %s126 = sshrl.u32 %s113, 4
              // While loop
              $region37: #{lenet_forward.3} parent=35 // loop_pre_header
                _
              $region38: #{lenet_forward.3} parent=35 // loop_header
                %s128 = sphi 0, %s130
                %p129 = scmp.ge.s32.totalorder %s128, %s126
                %s133 = sphi 0, %s266
                %s134 = sphi %s117, %s269
                %s135 = sphi %s109, %s270
              $region39: #{lenet_forward.3} parent=35 // loop_header_branch
                %132 = sbr.rel (%p129) target = $region43
              $region40: #{lenet_forward.3} parent=35 // loop_body
                %v136 = vld [vmem:[%s134] sm:$0xf]
                %137 = vst [vmem:[%s135] sm:$0xf] %v136
                %v138 = vld [vmem:[%s134 + $0x4] sm:$0xf]
                %139 = vst [vmem:[%s135 + $0x4] sm:$0xf] %v138
                %v140 = vld [vmem:[%s134 + $0x8] sm:$0xf]
                %141 = vst [vmem:[%s135 + $0x8] sm:$0xf] %v140
                %v142 = vld [vmem:[%s134 + $0xc] sm:$0xf]
                %143 = vst [vmem:[%s135 + $0xc] sm:$0xf] %v142
                %v144 = vld [vmem:[%s134 + $0x10] sm:$0xf]
                %145 = vst [vmem:[%s135 + $0x10] sm:$0xf] %v144
                %v146 = vld [vmem:[%s134 + $0x14] sm:$0xf]
                %147 = vst [vmem:[%s135 + $0x14] sm:$0xf] %v146
                %v148 = vld [vmem:[%s134 + $0x18] sm:$0xf]
                %149 = vst [vmem:[%s135 + $0x18] sm:$0xf] %v148
                %v150 = vld [vmem:[%s134 + $0x1c] sm:$0xf]
                %151 = vst [vmem:[%s135 + $0x1c] sm:$0xf] %v150
                %v152 = vld [vmem:[%s134 + $0x20] sm:$0xf]
                %153 = vst [vmem:[%s135 + $0x20] sm:$0xf] %v152
                %v154 = vld [vmem:[%s134 + $0x24] sm:$0xf]
                %155 = vst [vmem:[%s135 + $0x24] sm:$0xf] %v154
                %v156 = vld [vmem:[%s134 + $0x28] sm:$0xf]
                %157 = vst [vmem:[%s135 + $0x28] sm:$0xf] %v156
                %v158 = vld [vmem:[%s134 + $0x2c] sm:$0xf]
                %159 = vst [vmem:[%s135 + $0x2c] sm:$0xf] %v158
                %v160 = vld [vmem:[%s134 + $0x30] sm:$0xf]
                %161 = vst [vmem:[%s135 + $0x30] sm:$0xf] %v160
                %v162 = vld [vmem:[%s134 + $0x34] sm:$0xf]
                %163 = vst [vmem:[%s135 + $0x34] sm:$0xf] %v162
                %v164 = vld [vmem:[%s134 + $0x38] sm:$0xf]
                %165 = vst [vmem:[%s135 + $0x38] sm:$0xf] %v164
                %v166 = vld [vmem:[%s134 + $0x3c] sm:$0xf]
                %167 = vst [vmem:[%s135 + $0x3c] sm:$0xf] %v166
                %v168 = vld [vmem:[%s134 + $0xc4] sm:$0xf]
                %169 = vst [vmem:[%s135 + $0x68] sm:$0xf] %v168
                %v170 = vld [vmem:[%s134 + $0xc8] sm:$0xf]
                %171 = vst [vmem:[%s135 + $0x6c] sm:$0xf] %v170
                %v172 = vld [vmem:[%s134 + $0xcc] sm:$0xf]
                %173 = vst [vmem:[%s135 + $0x70] sm:$0xf] %v172
                %v174 = vld [vmem:[%s134 + $0xd0] sm:$0xf]
                %175 = vst [vmem:[%s135 + $0x74] sm:$0xf] %v174
                %v176 = vld [vmem:[%s134 + $0xd4] sm:$0xf]
                %177 = vst [vmem:[%s135 + $0x78] sm:$0xf] %v176
                %v178 = vld [vmem:[%s134 + $0xd8] sm:$0xf]
                %179 = vst [vmem:[%s135 + $0x7c] sm:$0xf] %v178
                %v180 = vld [vmem:[%s134 + $0xdc] sm:$0xf]
                %181 = vst [vmem:[%s135 + $0x80] sm:$0xf] %v180
                %v182 = vld [vmem:[%s134 + $0xe0] sm:$0xf]
                %183 = vst [vmem:[%s135 + $0x84] sm:$0xf] %v182
                %v184 = vld [vmem:[%s134 + $0xe4] sm:$0xf]
                %185 = vst [vmem:[%s135 + $0x88] sm:$0xf] %v184
                %v186 = vld [vmem:[%s134 + $0xe8] sm:$0xf]
                %187 = vst [vmem:[%s135 + $0x8c] sm:$0xf] %v186
                %v188 = vld [vmem:[%s134 + $0xec] sm:$0xf]
                %189 = vst [vmem:[%s135 + $0x90] sm:$0xf] %v188
                %v190 = vld [vmem:[%s134 + $0xf0] sm:$0xf]
                %191 = vst [vmem:[%s135 + $0x94] sm:$0xf] %v190
                %v192 = vld [vmem:[%s134 + $0xf4] sm:$0xf]
                %193 = vst [vmem:[%s135 + $0x98] sm:$0xf] %v192
                %v194 = vld [vmem:[%s134 + $0xf8] sm:$0xf]
                %195 = vst [vmem:[%s135 + $0x9c] sm:$0xf] %v194
                %v196 = vld [vmem:[%s134 + $0xfc] sm:$0xf]
                %197 = vst [vmem:[%s135 + $0xa0] sm:$0xf] %v196
                %v198 = vld [vmem:[%s134 + $0x100] sm:$0xf]
                %199 = vst [vmem:[%s135 + $0xa4] sm:$0xf] %v198
                %v200 = vld [vmem:[%s134 + $0x188] sm:$0xf]
                %201 = vst [vmem:[%s135 + $0xd0] sm:$0xf] %v200
                %v202 = vld [vmem:[%s134 + $0x18c] sm:$0xf]
                %203 = vst [vmem:[%s135 + $0xd4] sm:$0xf] %v202
                %v204 = vld [vmem:[%s134 + $0x190] sm:$0xf]
                %205 = vst [vmem:[%s135 + $0xd8] sm:$0xf] %v204
                %v206 = vld [vmem:[%s134 + $0x194] sm:$0xf]
                %207 = vst [vmem:[%s135 + $0xdc] sm:$0xf] %v206
                %v208 = vld [vmem:[%s134 + $0x198] sm:$0xf]
                %209 = vst [vmem:[%s135 + $0xe0] sm:$0xf] %v208
                %v210 = vld [vmem:[%s134 + $0x19c] sm:$0xf]
                %211 = vst [vmem:[%s135 + $0xe4] sm:$0xf] %v210
                %v212 = vld [vmem:[%s134 + $0x1a0] sm:$0xf]
                %213 = vst [vmem:[%s135 + $0xe8] sm:$0xf] %v212
                %v214 = vld [vmem:[%s134 + $0x1a4] sm:$0xf]
                %215 = vst [vmem:[%s135 + $0xec] sm:$0xf] %v214
                %v216 = vld [vmem:[%s134 + $0x1a8] sm:$0xf]
                %217 = vst [vmem:[%s135 + $0xf0] sm:$0xf] %v216
                %v218 = vld [vmem:[%s134 + $0x1ac] sm:$0xf]
                %219 = vst [vmem:[%s135 + $0xf4] sm:$0xf] %v218
                %v220 = vld [vmem:[%s134 + $0x1b0] sm:$0xf]
                %221 = vst [vmem:[%s135 + $0xf8] sm:$0xf] %v220
                %v222 = vld [vmem:[%s134 + $0x1b4] sm:$0xf]
                %223 = vst [vmem:[%s135 + $0xfc] sm:$0xf] %v222
                %v224 = vld [vmem:[%s134 + $0x1b8] sm:$0xf]
                %225 = vst [vmem:[%s135 + $0x100] sm:$0xf] %v224
                %v226 = vld [vmem:[%s134 + $0x1bc] sm:$0xf]
                %227 = vst [vmem:[%s135 + $0x104] sm:$0xf] %v226
                %v228 = vld [vmem:[%s134 + $0x1c0] sm:$0xf]
                %229 = vst [vmem:[%s135 + $0x108] sm:$0xf] %v228
                %v230 = vld [vmem:[%s134 + $0x1c4] sm:$0xf]
                %231 = vst [vmem:[%s135 + $0x10c] sm:$0xf] %v230
                %v232 = vld [vmem:[%s134 + $0x24c] sm:$0xf]
                %233 = vst [vmem:[%s135 + $0x138] sm:$0xf] %v232
                %v234 = vld [vmem:[%s134 + $0x250] sm:$0xf]
                %235 = vst [vmem:[%s135 + $0x13c] sm:$0xf] %v234
                %v236 = vld [vmem:[%s134 + $0x254] sm:$0xf]
                %237 = vst [vmem:[%s135 + $0x140] sm:$0xf] %v236
                %v238 = vld [vmem:[%s134 + $0x258] sm:$0xf]
                %239 = vst [vmem:[%s135 + $0x144] sm:$0xf] %v238
                %v240 = vld [vmem:[%s134 + $0x25c] sm:$0xf]
                %241 = vst [vmem:[%s135 + $0x148] sm:$0xf] %v240
                %v242 = vld [vmem:[%s134 + $0x260] sm:$0xf]
                %243 = vst [vmem:[%s135 + $0x14c] sm:$0xf] %v242
                %v244 = vld [vmem:[%s134 + $0x264] sm:$0xf]
                %245 = vst [vmem:[%s135 + $0x150] sm:$0xf] %v244
                %v246 = vld [vmem:[%s134 + $0x268] sm:$0xf]
                %247 = vst [vmem:[%s135 + $0x154] sm:$0xf] %v246
                %v248 = vld [vmem:[%s134 + $0x26c] sm:$0xf]
                %249 = vst [vmem:[%s135 + $0x158] sm:$0xf] %v248
                %v250 = vld [vmem:[%s134 + $0x270] sm:$0xf]
                %251 = vst [vmem:[%s135 + $0x15c] sm:$0xf] %v250
                %v252 = vld [vmem:[%s134 + $0x274] sm:$0xf]
                %253 = vst [vmem:[%s135 + $0x160] sm:$0xf] %v252
                %v254 = vld [vmem:[%s134 + $0x278] sm:$0xf]
                %255 = vst [vmem:[%s135 + $0x164] sm:$0xf] %v254
                %v256 = vld [vmem:[%s134 + $0x27c] sm:$0xf]
                %257 = vst [vmem:[%s135 + $0x168] sm:$0xf] %v256
                %v258 = vld [vmem:[%s134 + $0x280] sm:$0xf]
                %259 = vst [vmem:[%s135 + $0x16c] sm:$0xf] %v258
                %v260 = vld [vmem:[%s134 + $0x284] sm:$0xf]
                %261 = vst [vmem:[%s135 + $0x170] sm:$0xf] %v260
                %v262 = vld [vmem:[%s134 + $0x288] sm:$0xf]
                %263 = vst [vmem:[%s135 + $0x174] sm:$0xf] %v262
                %s264 = sadd.s32 1, %s133
                %p265 = scmp.ge.s32.totalorder %s264, %s126
                %s266 = scalar_select %p265, 0, %s264
                %s267 = smul.u32 %s266, 64
                %s268 = smul.u32 %s266, 64
                %s269 = scalar_lea.vmem %s117, %s267
                %s270 = scalar_lea.vmem %s109, %s268 [#allocation2]
              $region41: #{lenet_forward.3} parent=35 // loop_footer
                %s130 = sadd.s32 %s128, 1
              $region42: #{lenet_forward.3} parent=35 // loop_footer_branch
                %127 = sbr.rel target = $region38
              $region43: #{lenet_forward.3} parent=35 // loop_exit
                _
              %s271 = sshrl.u32 %s113, 4
              %s272 = sand.u32 %s113, 15
              %s273 = smul.u32 %s271, 16
              %s274 = smul.u32 4, %s273
              %s275 = scalar_lea.vmem %s117, %s274
              %s276 = smul.u32 4, %s273
              %s277 = scalar_lea.vmem %s109, %s276 [#allocation2]
              // While loop
              $region44: #{lenet_forward.3} parent=35 // loop_pre_header
                _
              $region45: #{lenet_forward.3} parent=35 // loop_header
                %s279 = sphi 0, %s281
                %p280 = scmp.ge.s32.totalorder %s279, %s272
                %s284 = sphi 0, %s297
                %s285 = sphi %s275, %s300
                %s286 = sphi %s277, %s301
              $region46: #{lenet_forward.3} parent=35 // loop_header_branch
                %283 = sbr.rel (%p280) target = $region50
              $region47: #{lenet_forward.3} parent=35 // loop_body
                %v287 = vld [vmem:[%s285] sm:$0xf]
                %288 = vst [vmem:[%s286] sm:$0xf] %v287
                %v289 = vld [vmem:[%s285 + $0xc4] sm:$0xf]
                %290 = vst [vmem:[%s286 + $0x68] sm:$0xf] %v289
                %v291 = vld [vmem:[%s285 + $0x188] sm:$0xf]
                %292 = vst [vmem:[%s286 + $0xd0] sm:$0xf] %v291
                %v293 = vld [vmem:[%s285 + $0x24c] sm:$0xf]
                %294 = vst [vmem:[%s286 + $0x138] sm:$0xf] %v293
                %s295 = sadd.s32 1, %s284
                %p296 = scmp.ge.s32.totalorder %s295, %s272
                %s297 = scalar_select %p296, 0, %s295
                %s298 = smul.u32 %s297, 4
                %s299 = smul.u32 %s297, 4
                %s300 = scalar_lea.vmem %s275, %s298
                %s301 = scalar_lea.vmem %s277, %s299 [#allocation2]
              $region48: #{lenet_forward.3} parent=35 // loop_footer
                %s281 = sadd.s32 %s279, 1
              $region49: #{lenet_forward.3} parent=35 // loop_footer_branch
                %278 = sbr.rel target = $region45
              $region50: #{lenet_forward.3} parent=35 // loop_exit
                _
            $region36: #{lenet_forward.3} parent=27 // pred_fallthru
              _
          $region28: #{lenet_forward.3} parent=23 // pred_fallthru
            _
          %522 = vnop
        $region24: #{lenet_forward.3} parent=19 // pred_fallthru
          _
      $region20: #{lenet_forward.3} parent=5 // pred_fallthru
        _
      %p523 = scmp.le.s32.totalorder 1, %s8
      %p524 = scmp.lt.s32.totalorder %s8, 3
      %p525 = pnand %p523, %p524
      %p526 = pneg %p525
      // Predicated region
      $region83: #{lenet_forward.3} parent=5 // pred_check
        _
      $region84: #{lenet_forward.3} parent=5 // pred_check_branch
        %528 = sbr.rel (%p525) target = $region86
      $region85: #{lenet_forward.3} parent=5 // pred_region
        %s529 = ssub.s32 %s8, 1
        %s530 = sand.u32 %s21, 1
        %s531 = sand.u32 %s21, 1
        %s532 = smul.addr %s531, 416
        %s533 = scalar_lea.vmem [#allocation2], %s532
        // Predicated region
        $region87: #{lenet_forward.3} parent=85 // pred_check
          %p534 = pneg %p34
        $region88: #{lenet_forward.3} parent=85 // pred_check_branch
          %536 = sbr.rel (%p534) target = $region90
        $region89: #{lenet_forward.3} parent=85 // pred_region
          _
        $region90: #{lenet_forward.3} parent=85 // pred_fallthru
          _
        %s537 = sand.u32 %s21, 1
        %s538 = sand.u32 %s21, 1
        %s539 = smul.addr %s538, 416
        %s540 = scalar_lea.vmem [#allocation2], %s539
        %p541 = pneg %p34
        %p542 = pneg %p31
        %p543 = pneg %p55
        %p544 = pneg %p52
        %p545 = pneg %p81
        %p546 = pneg %p78
        %s547 = sand.u32 %s68, 1
        %s548 = sand.u32 %s68, 1
        %s549 = smul.addr %s548, 104
        %s550 = scalar_lea.vmem [#allocation3], %s549
        %s551 = smul.u32 26, %s13
        %s552 = ssub.s32 49, %s551
        %p553 = scmp.lt.s32.totalorder %s552, 26
        %s554 = scalar_select %p553, %s552, 26
        %s555 = smul.u32 256, %s554
        %s556 = smul.u32 26, %s13
        %s557 = ssub.s32 49, %s556
        %p558 = scmp.lt.s32.totalorder %s557, 26
        %s559 = scalar_select %p558, %s557, 26
        %s560 = smul.u32 64, %s559
        %v562 = vld [vmem:[%s1] sm:$0xf]
        %v563 = vld [vmem:[%s1 + $0x4] sm:$0xf]
        %v564 = vld [vmem:[%s1 + $0x8] sm:$0xf]
        %v565 = vld [vmem:[%s1 + $0xc] sm:$0xf]
        %v566 = vld [vmem:[%s1 + $0x10] sm:$0xf]
        %v567 = vld [vmem:[%s1 + $0x14] sm:$0xf]
        %v568 = vld [vmem:[%s1 + $0x18] sm:$0xf]
        %v569 = vld [vmem:[%s1 + $0x1c] sm:$0xf]
        %v570 = vld [vmem:[%s1 + $0x20] sm:$0xf]
        %v571 = vld [vmem:[%s1 + $0x24] sm:$0x3]
        %v572 = vld [vmem:[%s533] sm:$0xf]
        %v573 = vld [vmem:[%s533 + $0x4] sm:$0xf]
        %v574 = vld [vmem:[%s533 + $0x8] sm:$0xf]
        %v575 = vld [vmem:[%s533 + $0xc] sm:$0xf]
        %v576 = vld [vmem:[%s533 + $0x10] sm:$0xf]
        %v577 = vld [vmem:[%s533 + $0x14] sm:$0xf]
        %v578 = vld [vmem:[%s533 + $0x18] sm:$0xf]
        %v579 = vld [vmem:[%s533 + $0x1c] sm:$0xf]
        %v580 = vld [vmem:[%s533 + $0x20] sm:$0xf]
        %v581 = vld [vmem:[%s533 + $0x24] sm:$0xf]
        %v582 = vld [vmem:[%s533 + $0x28] sm:$0xf]
        %v583 = vld [vmem:[%s533 + $0x2c] sm:$0xf]
        %v584 = vld [vmem:[%s533 + $0x30] sm:$0xf]
        %v585 = vld [vmem:[%s533 + $0x34] sm:$0xf]
        %v586 = vld [vmem:[%s533 + $0x38] sm:$0xf]
        %v587 = vld [vmem:[%s533 + $0x3c] sm:$0xf]
        %v588 = vld [vmem:[%s533 + $0x40] sm:$0xf]
        %v589 = vld [vmem:[%s533 + $0x44] sm:$0xf]
        %v590 = vld [vmem:[%s533 + $0x48] sm:$0xf]
        %v591 = vld [vmem:[%s533 + $0x4c] sm:$0xf]
        %v592 = vld [vmem:[%s533 + $0x50] sm:$0xf]
        %v593 = vld [vmem:[%s533 + $0x54] sm:$0xf]
        %v594 = vld [vmem:[%s533 + $0x58] sm:$0xf]
        %v595 = vld [vmem:[%s533 + $0x5c] sm:$0xf]
        %v596 = vld [vmem:[%s533 + $0x60] sm:$0xf]
        %v597 = vld [vmem:[%s533 + $0x64] sm:$0xf]
        %v624 = vunpack.c.l.b16 %v572
        %v625 = vunpack.c.l.b16 %v573
        %v626 = vunpack.c.l.b16 %v574
        %v627 = vunpack.c.l.b16 %v575
        %v628 = vunpack.c.l.b16 %v576
        %v629 = vunpack.c.l.b16 %v577
        %v630 = vunpack.c.l.b16 %v578
        %v631 = vunpack.c.l.b16 %v579
        %v632 = vunpack.c.l.b16 %v580
        %v633 = vunpack.c.l.b16 %v581
        %v634 = vunpack.c.l.b16 %v582
        %v635 = vunpack.c.l.b16 %v583
        %v636 = vunpack.c.l.b16 %v584
        %v637 = vunpack.c.l.b16 %v585
        %v638 = vunpack.c.l.b16 %v586
        %v639 = vunpack.c.l.b16 %v587
        %v640 = vunpack.c.l.b16 %v588
        %v641 = vunpack.c.l.b16 %v589
        %v642 = vunpack.c.l.b16 %v590
        %v643 = vunpack.c.l.b16 %v591
        %v644 = vunpack.c.l.b16 %v592
        %v645 = vunpack.c.l.b16 %v593
        %v646 = vunpack.c.l.b16 %v594
        %v647 = vunpack.c.l.b16 %v595
        %v648 = vunpack.c.l.b16 %v596
        %v649 = vunpack.c.l.b16 %v597
        %v650 = vpack.c.b16 %v625, %v624
        %v651 = vpack.c.b16 %v627, %v626
        %v652 = vpack.c.b16 %v629, %v628
        %v653 = vpack.c.b16 %v631, %v630
        %v654 = vpack.c.b16 %v633, %v632
        %v655 = vpack.c.b16 %v635, %v634
        %v656 = vpack.c.b16 %v637, %v636
        %v657 = vpack.c.b16 %v639, %v638
        %v658 = vpack.c.b16 %v641, %v640
        %v659 = vpack.c.b16 %v643, %v642
        %v660 = vpack.c.b16 %v645, %v644
        %v661 = vpack.c.b16 %v647, %v646
        %v662 = vpack.c.b16 %v649, %v648
        %v673 = vunpack.c.l.b16 %v562
        %v674 = vunpack.c.l.b16 %v563
        %v675 = vunpack.c.l.b16 %v564
        %v676 = vunpack.c.l.b16 %v565
        %v677 = vunpack.c.l.b16 %v566
        %v678 = vunpack.c.l.b16 %v567
        %v679 = vunpack.c.l.b16 %v568
        %v680 = vunpack.c.l.b16 %v569
        %v681 = vunpack.c.l.b16 %v570
        %v682 = vunpack.c.l.b16 %v571
        %v683 = vpack.c.b16 %v674, %v673
        %v684 = vpack.c.b16 %v676, %v675
        %v685 = vpack.c.b16 %v678, %v677
        %v686 = vpack.c.b16 %v680, %v679
        %v687 = vpack.c.b16 %v682, %v681
        %vm692 = vcmask 621568
        %v694 = vsel %vm692, %v650, 0
        %v697 = vsel %vm692, %v651, 0
        %v700 = vsel %vm692, %v652, 0
        %v703 = vsel %vm692, %v653, 0
        %v706 = vsel %vm692, %v654, 0
        %v709 = vsel %vm692, %v655, 0
        %v712 = vsel %vm692, %v656, 0
        %v715 = vsel %vm692, %v657, 0
        %v718 = vsel %vm692, %v658, 0
        %v721 = vsel %vm692, %v659, 0
        %v724 = vsel %vm692, %v660, 0
        %v727 = vsel %vm692, %v661, 0
        %v730 = vsel %vm692, %v662, 0
        %vm732 = vcmask 1045504
        %v734 = vsel %vm732, %v687, 0
        %736 = vmatprep.subr.bf16.mxu0 0
        %737 = vmatpush1.bf16.msra.mxu0 %v683
        %738 = vmatprep.subr.bf16.mxu0 0
        %739 = vmatpush1.bf16.msra.mxu0 %v684
        %740 = vmatprep.subr.bf16.mxu0 0
        %741 = vmatpush1.bf16.msra.mxu0 %v685
        %742 = vmatprep.subr.bf16.mxu0 0
        %743 = vmatpush1.bf16.msra.mxu0 %v686
        %744 = vmatprep.subr.bf16.mxu0 0
        %745 = vmatpush1.bf16.msra.mxu0 %v734
        %746 = vmatprep.subr.bf16.mxu0 0
        %747 = vmatpush1.bf16.msra.mxu0 0
        %748 = vmatprep.subr.bf16.mxu0 0
        %749 = vmatpush1.bf16.msra.mxu0 0
        %750 = vmatprep.subr.bf16.mxu0 0
        %751 = vmatpush1.bf16.msra.mxu0 0
        %752 = vmatprep.subr.bf16.mxu0 0
        %753 = vmatpush1.bf16.msra.mxu0 0
        %754 = vmatprep.subr.bf16.mxu0 0
        %755 = vmatpush1.bf16.msra.mxu0 0
        %756 = vmatprep.subr.bf16.mxu0 0
        %757 = vmatpush1.bf16.msra.mxu0 0
        %758 = vmatprep.subr.bf16.mxu0 0
        %759 = vmatpush1.bf16.msra.mxu0 0
        %760 = vmatprep.subr.bf16.mxu0 0
        %761 = vmatpush1.bf16.msra.mxu0 0
        %762 = vmatprep.subr.bf16.mxu0 0
        %763 = vmatpush1.bf16.msra.mxu0 0
        %764 = vmatprep.subr.bf16.mxu0 0
        %765 = vmatpush1.bf16.msra.mxu0 0
        %766 = vmatprep.subr.bf16.mxu0 0
        %767 = vmatpush1.bf16.msra.mxu0 0
        %768 = vmatprep.mubr.bf16.mxu0 0
        %769 = vmatmul.mubr.bf16.gmra.mrb[0].mxu0 %v694
        %v770 = vpop.f32.mrb[0].mxu0
        %v771 = vadd.f32 0.0, %v770
        %v772 = vpop.f32.mrb[0].mxu0
        %v773 = vpop.f32.mrb[0].mxu0
        %v774 = vadd.f32 0.0, %v773
        %v775 = vpop.f32.mrb[0].mxu0
        %776 = vmatprep.mubr.bf16.mxu0 0
        %777 = vmatmul.mubr.bf16.gmra.mrb[0].mxu0 %v697
        %v778 = vpop.f32.mrb[0].mxu0
        %v779 = vadd.f32 0.0, %v778
        %v780 = vpop.f32.mrb[0].mxu0
        %v781 = vpop.f32.mrb[0].mxu0
        %v782 = vadd.f32 0.0, %v781
        %v783 = vpop.f32.mrb[0].mxu0
        %784 = vmatprep.mubr.bf16.mxu0 0
        %785 = vmatmul.mubr.bf16.gmra.mrb[0].mxu0 %v700
        %v786 = vpop.f32.mrb[0].mxu0
        %v787 = vadd.f32 0.0, %v786
        %v788 = vpop.f32.mrb[0].mxu0
        %v789 = vpop.f32.mrb[0].mxu0
        %v790 = vadd.f32 0.0, %v789
        %v791 = vpop.f32.mrb[0].mxu0
        %792 = vmatprep.mubr.bf16.mxu0 0
        %793 = vmatmul.mubr.bf16.gmra.mrb[0].mxu0 %v703
        %v794 = vpop.f32.mrb[0].mxu0
        %v795 = vadd.f32 0.0, %v794
        %v796 = vpop.f32.mrb[0].mxu0
        %v797 = vpop.f32.mrb[0].mxu0
        %v798 = vadd.f32 0.0, %v797
        %v799 = vpop.f32.mrb[0].mxu0
        %800 = vmatprep.mubr.bf16.mxu0 0
        %801 = vmatmul.mubr.bf16.gmra.mrb[0].mxu0 %v706
        %v802 = vpop.f32.mrb[0].mxu0
        %v803 = vadd.f32 0.0, %v802
        %v804 = vpop.f32.mrb[0].mxu0
        %v805 = vpop.f32.mrb[0].mxu0
        %v806 = vadd.f32 0.0, %v805
        %v807 = vpop.f32.mrb[0].mxu0
        %808 = vmatprep.mubr.bf16.mxu0 0
        %809 = vmatmul.mubr.bf16.gmra.mrb[0].mxu0 %v709
        %v810 = vpop.f32.mrb[0].mxu0
        %v811 = vadd.f32 0.0, %v810
        %v812 = vpop.f32.mrb[0].mxu0
        %v813 = vpop.f32.mrb[0].mxu0
        %v814 = vadd.f32 0.0, %v813
        %v815 = vpop.f32.mrb[0].mxu0
        %816 = vmatprep.mubr.bf16.mxu0 0
        %817 = vmatmul.mubr.bf16.gmra.mrb[0].mxu0 %v712
        %v818 = vpop.f32.mrb[0].mxu0
        %v819 = vadd.f32 0.0, %v818
        %v820 = vpop.f32.mrb[0].mxu0
        %v821 = vpop.f32.mrb[0].mxu0
        %v822 = vadd.f32 0.0, %v821
        %v823 = vpop.f32.mrb[0].mxu0
        %824 = vmatprep.mubr.bf16.mxu0 0
        %825 = vmatmul.mubr.bf16.gmra.mrb[0].mxu0 %v715
        %v826 = vpop.f32.mrb[0].mxu0
        %v827 = vadd.f32 0.0, %v826
        %v828 = vpop.f32.mrb[0].mxu0
        %v829 = vpop.f32.mrb[0].mxu0
        %v830 = vadd.f32 0.0, %v829
        %v831 = vpop.f32.mrb[0].mxu0
        %832 = vmatprep.mubr.bf16.mxu0 0
        %833 = vmatmul.mubr.bf16.gmra.mrb[0].mxu0 %v718
        %v834 = vpop.f32.mrb[0].mxu0
        %v835 = vadd.f32 0.0, %v834
        %v836 = vpop.f32.mrb[0].mxu0
        %v837 = vpop.f32.mrb[0].mxu0
        %v838 = vadd.f32 0.0, %v837
        %v839 = vpop.f32.mrb[0].mxu0
        %840 = vmatprep.mubr.bf16.mxu0 0
        %841 = vmatmul.mubr.bf16.gmra.mrb[0].mxu0 %v721
        %v842 = vpop.f32.mrb[0].mxu0
        %v843 = vadd.f32 0.0, %v842
        %v844 = vpop.f32.mrb[0].mxu0
        %v845 = vpop.f32.mrb[0].mxu0
        %v846 = vadd.f32 0.0, %v845
        %v847 = vpop.f32.mrb[0].mxu0
        %848 = vmatprep.mubr.bf16.mxu0 0
        %849 = vmatmul.mubr.bf16.gmra.mrb[0].mxu0 %v724
        %v850 = vpop.f32.mrb[0].mxu0
        %v851 = vadd.f32 0.0, %v850
        %v852 = vpop.f32.mrb[0].mxu0
        %v853 = vpop.f32.mrb[0].mxu0
        %v854 = vadd.f32 0.0, %v853
        %v855 = vpop.f32.mrb[0].mxu0
        %856 = vmatprep.mubr.bf16.mxu0 0
        %857 = vmatmul.mubr.bf16.gmra.mrb[0].mxu0 %v727
        %v858 = vpop.f32.mrb[0].mxu0
        %v859 = vadd.f32 0.0, %v858
        %v860 = vpop.f32.mrb[0].mxu0
        %v861 = vpop.f32.mrb[0].mxu0
        %v862 = vadd.f32 0.0, %v861
        %v863 = vpop.f32.mrb[0].mxu0
        %864 = vmatprep.mubr.bf16.mxu0 0
        %865 = vmatmul.mubr.bf16.gmra.mrb[0].mxu0 %v730
        %v866 = vpop.f32.mrb[0].mxu0
        %v867 = vadd.f32 0.0, %v866
        %v868 = vpop.f32.mrb[0].mxu0
        %v869 = vpop.f32.mrb[0].mxu0
        %v870 = vadd.f32 0.0, %v869
        %v871 = vpop.f32.mrb[0].mxu0
        %872 = vdwg.mxu0
        %s873 = scalar_lea.vmem %s533, 104 [#allocation2]
        %v874 = vld [vmem:[%s873] sm:$0xf]
        %v875 = vld [vmem:[%s873 + $0x4] sm:$0xf]
        %v876 = vld [vmem:[%s873 + $0x8] sm:$0xf]
        %v877 = vld [vmem:[%s873 + $0xc] sm:$0xf]
        %v878 = vld [vmem:[%s873 + $0x10] sm:$0xf]
        %v879 = vld [vmem:[%s873 + $0x14] sm:$0xf]
        %v880 = vld [vmem:[%s873 + $0x18] sm:$0xf]
        %v881 = vld [vmem:[%s873 + $0x1c] sm:$0xf]
        %v882 = vld [vmem:[%s873 + $0x20] sm:$0xf]
        %v883 = vld [vmem:[%s873 + $0x24] sm:$0xf]
        %v884 = vld [vmem:[%s873 + $0x28] sm:$0xf]
        %v885 = vld [vmem:[%s873 + $0x2c] sm:$0xf]
        %v886 = vld [vmem:[%s873 + $0x30] sm:$0xf]
        %v887 = vld [vmem:[%s873 + $0x34] sm:$0xf]
        %v888 = vld [vmem:[%s873 + $0x38] sm:$0xf]
        %v889 = vld [vmem:[%s873 + $0x3c] sm:$0xf]
        %v890 = vld [vmem:[%s873 + $0x40] sm:$0xf]
        %v891 = vld [vmem:[%s873 + $0x44] sm:$0xf]
        %v892 = vld [vmem:[%s873 + $0x48] sm:$0xf]
        %v893 = vld [vmem:[%s873 + $0x4c] sm:$0xf]
        %v894 = vld [vmem:[%s873 + $0x50] sm:$0xf]
        %v895 = vld [vmem:[%s873 + $0x54] sm:$0xf]
        %v896 = vld [vmem:[%s873 + $0x58] sm:$0xf]
        %v897 = vld [vmem:[%s873 + $0x5c] sm:$0xf]
        %v898 = vld [vmem:[%s873 + $0x60] sm:$0xf]
        %v899 = vld [vmem:[%s873 + $0x64] sm:$0xf]
        %v926 = vunpack.c.l.b16 %v874
        %v927 = vunpack.c.l.b16 %v875
        %v928 = vunpack.c.l.b16 %v876
        %v929 = vunpack.c.l.b16 %v877
        %v930 = vunpack.c.l.b16 %v878
        %v931 = vunpack.c.l.b16 %v879
        %v932 = vunpack.c.l.b16 %v880
        %v933 = vunpack.c.l.b16 %v881
        %v934 = vunpack.c.l.b16 %v882
        %v935 = vunpack.c.l.b16 %v883
        %v936 = vunpack.c.l.b16 %v884
        %v937 = vunpack.c.l.b16 %v885
        %v938 = vunpack.c.l.b16 %v886
        %v939 = vunpack.c.l.b16 %v887
        %v940 = vunpack.c.l.b16 %v888
        %v941 = vunpack.c.l.b16 %v889
        %v942 = vunpack.c.l.b16 %v890
        %v943 = vunpack.c.l.b16 %v891
        %v944 = vunpack.c.l.b16 %v892
        %v945 = vunpack.c.l.b16 %v893
        %v946 = vunpack.c.l.b16 %v894
        %v947 = vunpack.c.l.b16 %v895
        %v948 = vunpack.c.l.b16 %v896
        %v949 = vunpack.c.l.b16 %v897
        %v950 = vunpack.c.l.b16 %v898
        %v951 = vunpack.c.l.b16 %v899
        %v952 = vpack.c.b16 %v927, %v926
        %v953 = vpack.c.b16 %v929, %v928
        %v954 = vpack.c.b16 %v931, %v930
        %v955 = vpack.c.b16 %v933, %v932
        %v956 = vpack.c.b16 %v935, %v934
        %v957 = vpack.c.b16 %v937, %v936
        %v958 = vpack.c.b16 %v939, %v938
        %v959 = vpack.c.b16 %v941, %v940
        %v960 = vpack.c.b16 %v943, %v942
        %v961 = vpack.c.b16 %v945, %v944
        %v962 = vpack.c.b16 %v947, %v946
        %v963 = vpack.c.b16 %v949, %v948
        %v964 = vpack.c.b16 %v951, %v950
        %v966 = vsel %vm692, %v952, 0
        %v969 = vsel %vm692, %v953, 0
        %v972 = vsel %vm692, %v954, 0
        %v975 = vsel %vm692, %v955, 0
        %v978 = vsel %vm692, %v956, 0
        %v981 = vsel %vm692, %v957, 0
        %v984 = vsel %vm692, %v958, 0
        %v987 = vsel %vm692, %v959, 0
        %v990 = vsel %vm692, %v960, 0
        %v993 = vsel %vm692, %v961, 0
        %v996 = vsel %vm692, %v962, 0
        %v999 = vsel %vm692, %v963, 0
        %v1002 = vsel %vm692, %v964, 0
        %1004 = vmatprep.subr.bf16.mxu0 0
        %1005 = vmatpush1.bf16.msra.mxu0 %v683
        %1006 = vmatprep.subr.bf16.mxu0 0
        %1007 = vmatpush1.bf16.msra.mxu0 %v684
        %1008 = vmatprep.subr.bf16.mxu0 0
        %1009 = vmatpush1.bf16.msra.mxu0 %v685
        %1010 = vmatprep.subr.bf16.mxu0 0
        %1011 = vmatpush1.bf16.msra.mxu0 %v686
        %1012 = vmatprep.subr.bf16.mxu0 0
        %1013 = vmatpush1.bf16.msra.mxu0 %v734
        %1014 = vmatprep.subr.bf16.mxu0 0
        %1015 = vmatpush1.bf16.msra.mxu0 0
        %1016 = vmatprep.subr.bf16.mxu0 0
        %1017 = vmatpush1.bf16.msra.mxu0 0
        %1018 = vmatprep.subr.bf16.mxu0 0
        %1019 = vmatpush1.bf16.msra.mxu0 0
        %1020 = vmatprep.subr.bf16.mxu0 0
        %1021 = vmatpush1.bf16.msra.mxu0 0
        %1022 = vmatprep.subr.bf16.mxu0 0
        %1023 = vmatpush1.bf16.msra.mxu0 0
        %1024 = vmatprep.subr.bf16.mxu0 0
        %1025 = vmatpush1.bf16.msra.mxu0 0
        %1026 = vmatprep.subr.bf16.mxu0 0
        %1027 = vmatpush1.bf16.msra.mxu0 0
        %1028 = vmatprep.subr.bf16.mxu0 0
        %1029 = vmatpush1.bf16.msra.mxu0 0
        %1030 = vmatprep.subr.bf16.mxu0 0
        %1031 = vmatpush1.bf16.msra.mxu0 0
        %1032 = vmatprep.subr.bf16.mxu0 0
        %1033 = vmatpush1.bf16.msra.mxu0 0
        %1034 = vmatprep.subr.bf16.mxu0 0
        %1035 = vmatpush1.bf16.msra.mxu0 0
        %1036 = vmatprep.mubr.bf16.mxu0 0
        %1037 = vmatmul.mubr.bf16.gmra.mrb[0].mxu0 %v966
        %v1038 = vpop.f32.mrb[0].mxu0
        %v1039 = vadd.f32 0.0, %v1038
        %v1040 = vpop.f32.mrb[0].mxu0
        %v1041 = vpop.f32.mrb[0].mxu0
        %v1042 = vadd.f32 0.0, %v1041
        %v1043 = vpop.f32.mrb[0].mxu0
        %1044 = vmatprep.mubr.bf16.mxu0 0
        %1045 = vmatmul.mubr.bf16.gmra.mrb[0].mxu0 %v969
        %v1046 = vpop.f32.mrb[0].mxu0
        %v1047 = vadd.f32 0.0, %v1046
        %v1048 = vpop.f32.mrb[0].mxu0
        %v1049 = vpop.f32.mrb[0].mxu0
        %v1050 = vadd.f32 0.0, %v1049
        %v1051 = vpop.f32.mrb[0].mxu0
        %1052 = vmatprep.mubr.bf16.mxu0 0
        %1053 = vmatmul.mubr.bf16.gmra.mrb[0].mxu0 %v972
        %v1054 = vpop.f32.mrb[0].mxu0
        %v1055 = vadd.f32 0.0, %v1054
        %v1056 = vpop.f32.mrb[0].mxu0
        %v1057 = vpop.f32.mrb[0].mxu0
        %v1058 = vadd.f32 0.0, %v1057
        %v1059 = vpop.f32.mrb[0].mxu0
        %1060 = vmatprep.mubr.bf16.mxu0 0
        %1061 = vmatmul.mubr.bf16.gmra.mrb[0].mxu0 %v975
        %v1062 = vpop.f32.mrb[0].mxu0
        %v1063 = vadd.f32 0.0, %v1062
        %v1064 = vpop.f32.mrb[0].mxu0
        %v1065 = vpop.f32.mrb[0].mxu0
        %v1066 = vadd.f32 0.0, %v1065
        %v1067 = vpop.f32.mrb[0].mxu0
        %1068 = vmatprep.mubr.bf16.mxu0 0
        %1069 = vmatmul.mubr.bf16.gmra.mrb[0].mxu0 %v978
        %v1070 = vpop.f32.mrb[0].mxu0
        %v1071 = vadd.f32 0.0, %v1070
        %v1072 = vpop.f32.mrb[0].mxu0
        %v1073 = vpop.f32.mrb[0].mxu0
        %v1074 = vadd.f32 0.0, %v1073
        %v1075 = vpop.f32.mrb[0].mxu0
        %1076 = vmatprep.mubr.bf16.mxu0 0
        %1077 = vmatmul.mubr.bf16.gmra.mrb[0].mxu0 %v981
        %v1078 = vpop.f32.mrb[0].mxu0
        %v1079 = vadd.f32 0.0, %v1078
        %v1080 = vpop.f32.mrb[0].mxu0
        %v1081 = vpop.f32.mrb[0].mxu0
        %v1082 = vadd.f32 0.0, %v1081
        %v1083 = vpop.f32.mrb[0].mxu0
        %1084 = vmatprep.mubr.bf16.mxu0 0
        %1085 = vmatmul.mubr.bf16.gmra.mrb[0].mxu0 %v984
        %v1086 = vpop.f32.mrb[0].mxu0
        %v1087 = vadd.f32 0.0, %v1086
        %v1088 = vpop.f32.mrb[0].mxu0
        %v1089 = vpop.f32.mrb[0].mxu0
        %v1090 = vadd.f32 0.0, %v1089
        %v1091 = vpop.f32.mrb[0].mxu0
        %1092 = vmatprep.mubr.bf16.mxu0 0
        %1093 = vmatmul.mubr.bf16.gmra.mrb[0].mxu0 %v987
        %v1094 = vpop.f32.mrb[0].mxu0
        %v1095 = vadd.f32 0.0, %v1094
        %v1096 = vpop.f32.mrb[0].mxu0
        %v1097 = vpop.f32.mrb[0].mxu0
        %v1098 = vadd.f32 0.0, %v1097
        %v1099 = vpop.f32.mrb[0].mxu0
        %1100 = vmatprep.mubr.bf16.mxu0 0
        %1101 = vmatmul.mubr.bf16.gmra.mrb[0].mxu0 %v990
        %v1102 = vpop.f32.mrb[0].mxu0
        %v1103 = vadd.f32 0.0, %v1102
        %v1104 = vpop.f32.mrb[0].mxu0
        %v1105 = vpop.f32.mrb[0].mxu0
        %v1106 = vadd.f32 0.0, %v1105
        %v1107 = vpop.f32.mrb[0].mxu0
        %1108 = vmatprep.mubr.bf16.mxu0 0
        %1109 = vmatmul.mubr.bf16.gmra.mrb[0].mxu0 %v993
        %v1110 = vpop.f32.mrb[0].mxu0
        %v1111 = vadd.f32 0.0, %v1110
        %v1112 = vpop.f32.mrb[0].mxu0
        %v1113 = vpop.f32.mrb[0].mxu0
        %v1114 = vadd.f32 0.0, %v1113
        %v1115 = vpop.f32.mrb[0].mxu0
        %1116 = vmatprep.mubr.bf16.mxu0 0
        %1117 = vmatmul.mubr.bf16.gmra.mrb[0].mxu0 %v996
        %v1118 = vpop.f32.mrb[0].mxu0
        %v1119 = vadd.f32 0.0, %v1118
        %v1120 = vpop.f32.mrb[0].mxu0
        %v1121 = vpop.f32.mrb[0].mxu0
        %v1122 = vadd.f32 0.0, %v1121
        %v1123 = vpop.f32.mrb[0].mxu0
        %1124 = vmatprep.mubr.bf16.mxu0 0
        %1125 = vmatmul.mubr.bf16.gmra.mrb[0].mxu0 %v999
        %v1126 = vpop.f32.mrb[0].mxu0
        %v1127 = vadd.f32 0.0, %v1126
        %v1128 = vpop.f32.mrb[0].mxu0
        %v1129 = vpop.f32.mrb[0].mxu0
        %v1130 = vadd.f32 0.0, %v1129
        %v1131 = vpop.f32.mrb[0].mxu0
        %1132 = vmatprep.mubr.bf16.mxu0 0
        %1133 = vmatmul.mubr.bf16.gmra.mrb[0].mxu0 %v1002
        %v1134 = vpop.f32.mrb[0].mxu0
        %v1135 = vadd.f32 0.0, %v1134
        %v1136 = vpop.f32.mrb[0].mxu0
        %v1137 = vpop.f32.mrb[0].mxu0
        %v1138 = vadd.f32 0.0, %v1137
        %v1139 = vpop.f32.mrb[0].mxu0
        %1140 = vdwg.mxu0
        %v1141 = vmax.f32 %v771, %v1039
        %v1142 = vmax.f32 %v774, %v1042
        %v1143 = vmax.f32 %v779, %v1047
        %v1144 = vmax.f32 %v782, %v1050
        %v1145 = vmax.f32 %v787, %v1055
        %v1146 = vmax.f32 %v790, %v1058
        %v1147 = vmax.f32 %v795, %v1063
        %v1148 = vmax.f32 %v798, %v1066
        %v1149 = vmax.f32 %v803, %v1071
        %v1150 = vmax.f32 %v806, %v1074
        %v1151 = vmax.f32 %v811, %v1079
        %v1152 = vmax.f32 %v814, %v1082
        %v1153 = vmax.f32 %v819, %v1087
        %v1154 = vmax.f32 %v822, %v1090
        %v1155 = vmax.f32 %v827, %v1095
        %v1156 = vmax.f32 %v830, %v1098
        %v1157 = vmax.f32 %v835, %v1103
        %v1158 = vmax.f32 %v838, %v1106
        %v1159 = vmax.f32 %v843, %v1111
        %v1160 = vmax.f32 %v846, %v1114
        %v1161 = vmax.f32 %v851, %v1119
        %v1162 = vmax.f32 %v854, %v1122
        %v1163 = vmax.f32 %v859, %v1127
        %v1164 = vmax.f32 %v862, %v1130
        %v1165 = vmax.f32 %v867, %v1135
        %v1166 = vmax.f32 %v870, %v1138
        %s1167 = scalar_lea.vmem %s533, 208 [#allocation2]
        %v1168 = vld [vmem:[%s1167] sm:$0xf]
        %v1169 = vld [vmem:[%s1167 + $0x4] sm:$0xf]
        %v1170 = vld [vmem:[%s1167 + $0x8] sm:$0xf]
        %v1171 = vld [vmem:[%s1167 + $0xc] sm:$0xf]
        %v1172 = vld [vmem:[%s1167 + $0x10] sm:$0xf]
        %v1173 = vld [vmem:[%s1167 + $0x14] sm:$0xf]
        %v1174 = vld [vmem:[%s1167 + $0x18] sm:$0xf]
        %v1175 = vld [vmem:[%s1167 + $0x1c] sm:$0xf]
        %v1176 = vld [vmem:[%s1167 + $0x20] sm:$0xf]
        %v1177 = vld [vmem:[%s1167 + $0x24] sm:$0xf]
        %v1178 = vld [vmem:[%s1167 + $0x28] sm:$0xf]
        %v1179 = vld [vmem:[%s1167 + $0x2c] sm:$0xf]
        %v1180 = vld [vmem:[%s1167 + $0x30] sm:$0xf]
        %v1181 = vld [vmem:[%s1167 + $0x34] sm:$0xf]
        %v1182 = vld [vmem:[%s1167 + $0x38] sm:$0xf]
        %v1183 = vld [vmem:[%s1167 + $0x3c] sm:$0xf]
        %v1184 = vld [vmem:[%s1167 + $0x40] sm:$0xf]
        %v1185 = vld [vmem:[%s1167 + $0x44] sm:$0xf]
        %v1186 = vld [vmem:[%s1167 + $0x48] sm:$0xf]
        %v1187 = vld [vmem:[%s1167 + $0x4c] sm:$0xf]
        %v1188 = vld [vmem:[%s1167 + $0x50] sm:$0xf]
        %v1189 = vld [vmem:[%s1167 + $0x54] sm:$0xf]
        %v1190 = vld [vmem:[%s1167 + $0x58] sm:$0xf]
        %v1191 = vld [vmem:[%s1167 + $0x5c] sm:$0xf]
        %v1192 = vld [vmem:[%s1167 + $0x60] sm:$0xf]
        %v1193 = vld [vmem:[%s1167 + $0x64] sm:$0xf]
        %v1220 = vunpack.c.l.b16 %v1168
        %v1221 = vunpack.c.l.b16 %v1169
        %v1222 = vunpack.c.l.b16 %v1170
        %v1223 = vunpack.c.l.b16 %v1171
        %v1224 = vunpack.c.l.b16 %v1172
        %v1225 = vunpack.c.l.b16 %v1173
        %v1226 = vunpack.c.l.b16 %v1174
        %v1227 = vunpack.c.l.b16 %v1175
        %v1228 = vunpack.c.l.b16 %v1176
        %v1229 = vunpack.c.l.b16 %v1177
        %v1230 = vunpack.c.l.b16 %v1178
        %v1231 = vunpack.c.l.b16 %v1179
        %v1232 = vunpack.c.l.b16 %v1180
        %v1233 = vunpack.c.l.b16 %v1181
        %v1234 = vunpack.c.l.b16 %v1182
        %v1235 = vunpack.c.l.b16 %v1183
        %v1236 = vunpack.c.l.b16 %v1184
        %v1237 = vunpack.c.l.b16 %v1185
        %v1238 = vunpack.c.l.b16 %v1186
        %v1239 = vunpack.c.l.b16 %v1187
        %v1240 = vunpack.c.l.b16 %v1188
        %v1241 = vunpack.c.l.b16 %v1189
        %v1242 = vunpack.c.l.b16 %v1190
        %v1243 = vunpack.c.l.b16 %v1191
        %v1244 = vunpack.c.l.b16 %v1192
        %v1245 = vunpack.c.l.b16 %v1193
        %v1246 = vpack.c.b16 %v1221, %v1220
        %v1247 = vpack.c.b16 %v1223, %v1222
        %v1248 = vpack.c.b16 %v1225, %v1224
        %v1249 = vpack.c.b16 %v1227, %v1226
        %v1250 = vpack.c.b16 %v1229, %v1228
        %v1251 = vpack.c.b16 %v1231, %v1230
        %v1252 = vpack.c.b16 %v1233, %v1232
        %v1253 = vpack.c.b16 %v1235, %v1234
        %v1254 = vpack.c.b16 %v1237, %v1236
        %v1255 = vpack.c.b16 %v1239, %v1238
        %v1256 = vpack.c.b16 %v1241, %v1240
        %v1257 = vpack.c.b16 %v1243, %v1242
        %v1258 = vpack.c.b16 %v1245, %v1244
        %v1260 = vsel %vm692, %v1246, 0
        %v1263 = vsel %vm692, %v1247, 0
        %v1266 = vsel %vm692, %v1248, 0
        %v1269 = vsel %vm692, %v1249, 0
        %v1272 = vsel %vm692, %v1250, 0
        %v1275 = vsel %vm692, %v1251, 0
        %v1278 = vsel %vm692, %v1252, 0
        %v1281 = vsel %vm692, %v1253, 0
        %v1284 = vsel %vm692, %v1254, 0
        %v1287 = vsel %vm692, %v1255, 0
        %v1290 = vsel %vm692, %v1256, 0
        %v1293 = vsel %vm692, %v1257, 0
        %v1296 = vsel %vm692, %v1258, 0
        %1298 = vmatprep.subr.bf16.mxu0 0
        %1299 = vmatpush1.bf16.msra.mxu0 %v683
        %1300 = vmatprep.subr.bf16.mxu0 0
        %1301 = vmatpush1.bf16.msra.mxu0 %v684
        %1302 = vmatprep.subr.bf16.mxu0 0
        %1303 = vmatpush1.bf16.msra.mxu0 %v685
        %1304 = vmatprep.subr.bf16.mxu0 0
        %1305 = vmatpush1.bf16.msra.mxu0 %v686
        %1306 = vmatprep.subr.bf16.mxu0 0
        %1307 = vmatpush1.bf16.msra.mxu0 %v734
        %1308 = vmatprep.subr.bf16.mxu0 0
        %1309 = vmatpush1.bf16.msra.mxu0 0
        %1310 = vmatprep.subr.bf16.mxu0 0
        %1311 = vmatpush1.bf16.msra.mxu0 0
        %1312 = vmatprep.subr.bf16.mxu0 0
        %1313 = vmatpush1.bf16.msra.mxu0 0
        %1314 = vmatprep.subr.bf16.mxu0 0
        %1315 = vmatpush1.bf16.msra.mxu0 0
        %1316 = vmatprep.subr.bf16.mxu0 0
        %1317 = vmatpush1.bf16.msra.mxu0 0
        %1318 = vmatprep.subr.bf16.mxu0 0
        %1319 = vmatpush1.bf16.msra.mxu0 0
        %1320 = vmatprep.subr.bf16.mxu0 0
        %1321 = vmatpush1.bf16.msra.mxu0 0
        %1322 = vmatprep.subr.bf16.mxu0 0
        %1323 = vmatpush1.bf16.msra.mxu0 0
        %1324 = vmatprep.subr.bf16.mxu0 0
        %1325 = vmatpush1.bf16.msra.mxu0 0
        %1326 = vmatprep.subr.bf16.mxu0 0
        %1327 = vmatpush1.bf16.msra.mxu0 0
        %1328 = vmatprep.subr.bf16.mxu0 0
        %1329 = vmatpush1.bf16.msra.mxu0 0
        %1330 = vmatprep.mubr.bf16.mxu0 0
        %1331 = vmatmul.mubr.bf16.gmra.mrb[0].mxu0 %v1260
        %v1332 = vpop.f32.mrb[0].mxu0
        %v1333 = vadd.f32 0.0, %v1332
        %v1334 = vpop.f32.mrb[0].mxu0
        %v1335 = vpop.f32.mrb[0].mxu0
        %v1336 = vadd.f32 0.0, %v1335
        %v1337 = vpop.f32.mrb[0].mxu0
        %1338 = vmatprep.mubr.bf16.mxu0 0
        %1339 = vmatmul.mubr.bf16.gmra.mrb[0].mxu0 %v1263
        %v1340 = vpop.f32.mrb[0].mxu0
        %v1341 = vadd.f32 0.0, %v1340
        %v1342 = vpop.f32.mrb[0].mxu0
        %v1343 = vpop.f32.mrb[0].mxu0
        %v1344 = vadd.f32 0.0, %v1343
        %v1345 = vpop.f32.mrb[0].mxu0
        %1346 = vmatprep.mubr.bf16.mxu0 0
        %1347 = vmatmul.mubr.bf16.gmra.mrb[0].mxu0 %v1266
        %v1348 = vpop.f32.mrb[0].mxu0
        %v1349 = vadd.f32 0.0, %v1348
        %v1350 = vpop.f32.mrb[0].mxu0
        %v1351 = vpop.f32.mrb[0].mxu0
        %v1352 = vadd.f32 0.0, %v1351
        %v1353 = vpop.f32.mrb[0].mxu0
        %1354 = vmatprep.mubr.bf16.mxu0 0
        %1355 = vmatmul.mubr.bf16.gmra.mrb[0].mxu0 %v1269
        %v1356 = vpop.f32.mrb[0].mxu0
        %v1357 = vadd.f32 0.0, %v1356
        %v1358 = vpop.f32.mrb[0].mxu0
        %v1359 = vpop.f32.mrb[0].mxu0
        %v1360 = vadd.f32 0.0, %v1359
        %v1361 = vpop.f32.mrb[0].mxu0
        %1362 = vmatprep.mubr.bf16.mxu0 0
        %1363 = vmatmul.mubr.bf16.gmra.mrb[0].mxu0 %v1272
        %v1364 = vpop.f32.mrb[0].mxu0
        %v1365 = vadd.f32 0.0, %v1364
        %v1366 = vpop.f32.mrb[0].mxu0
        %v1367 = vpop.f32.mrb[0].mxu0
        %v1368 = vadd.f32 0.0, %v1367
        %v1369 = vpop.f32.mrb[0].mxu0
        %1370 = vmatprep.mubr.bf16.mxu0 0
        %1371 = vmatmul.mubr.bf16.gmra.mrb[0].mxu0 %v1275
        %v1372 = vpop.f32.mrb[0].mxu0
        %v1373 = vadd.f32 0.0, %v1372
        %v1374 = vpop.f32.mrb[0].mxu0
        %v1375 = vpop.f32.mrb[0].mxu0
        %v1376 = vadd.f32 0.0, %v1375
        %v1377 = vpop.f32.mrb[0].mxu0
        %1378 = vmatprep.mubr.bf16.mxu0 0
        %1379 = vmatmul.mubr.bf16.gmra.mrb[0].mxu0 %v1278
        %v1380 = vpop.f32.mrb[0].mxu0
        %v1381 = vadd.f32 0.0, %v1380
        %v1382 = vpop.f32.mrb[0].mxu0
        %v1383 = vpop.f32.mrb[0].mxu0
        %v1384 = vadd.f32 0.0, %v1383
        %v1385 = vpop.f32.mrb[0].mxu0
        %1386 = vmatprep.mubr.bf16.mxu0 0
        %1387 = vmatmul.mubr.bf16.gmra.mrb[0].mxu0 %v1281
        %v1388 = vpop.f32.mrb[0].mxu0
        %v1389 = vadd.f32 0.0, %v1388
        %v1390 = vpop.f32.mrb[0].mxu0
        %v1391 = vpop.f32.mrb[0].mxu0
        %v1392 = vadd.f32 0.0, %v1391
        %v1393 = vpop.f32.mrb[0].mxu0
        %1394 = vmatprep.mubr.bf16.mxu0 0
        %1395 = vmatmul.mubr.bf16.gmra.mrb[0].mxu0 %v1284
        %v1396 = vpop.f32.mrb[0].mxu0
        %v1397 = vadd.f32 0.0, %v1396
        %v1398 = vpop.f32.mrb[0].mxu0
        %v1399 = vpop.f32.mrb[0].mxu0
        %v1400 = vadd.f32 0.0, %v1399
        %v1401 = vpop.f32.mrb[0].mxu0
        %1402 = vmatprep.mubr.bf16.mxu0 0
        %1403 = vmatmul.mubr.bf16.gmra.mrb[0].mxu0 %v1287
        %v1404 = vpop.f32.mrb[0].mxu0
        %v1405 = vadd.f32 0.0, %v1404
        %v1406 = vpop.f32.mrb[0].mxu0
        %v1407 = vpop.f32.mrb[0].mxu0
        %v1408 = vadd.f32 0.0, %v1407
        %v1409 = vpop.f32.mrb[0].mxu0
        %1410 = vmatprep.mubr.bf16.mxu0 0
        %1411 = vmatmul.mubr.bf16.gmra.mrb[0].mxu0 %v1290
        %v1412 = vpop.f32.mrb[0].mxu0
        %v1413 = vadd.f32 0.0, %v1412
        %v1414 = vpop.f32.mrb[0].mxu0
        %v1415 = vpop.f32.mrb[0].mxu0
        %v1416 = vadd.f32 0.0, %v1415
        %v1417 = vpop.f32.mrb[0].mxu0
        %1418 = vmatprep.mubr.bf16.mxu0 0
        %1419 = vmatmul.mubr.bf16.gmra.mrb[0].mxu0 %v1293
        %v1420 = vpop.f32.mrb[0].mxu0
        %v1421 = vadd.f32 0.0, %v1420
        %v1422 = vpop.f32.mrb[0].mxu0
        %v1423 = vpop.f32.mrb[0].mxu0
        %v1424 = vadd.f32 0.0, %v1423
        %v1425 = vpop.f32.mrb[0].mxu0
        %1426 = vmatprep.mubr.bf16.mxu0 0
        %1427 = vmatmul.mubr.bf16.gmra.mrb[0].mxu0 %v1296
        %v1428 = vpop.f32.mrb[0].mxu0
        %v1429 = vadd.f32 0.0, %v1428
        %v1430 = vpop.f32.mrb[0].mxu0
        %v1431 = vpop.f32.mrb[0].mxu0
        %v1432 = vadd.f32 0.0, %v1431
        %v1433 = vpop.f32.mrb[0].mxu0
        %1434 = vdwg.mxu0
        %v1435 = vmax.f32 %v1141, %v1333
        %v1436 = vmax.f32 %v1142, %v1336
        %v1437 = vmax.f32 %v1143, %v1341
        %v1438 = vmax.f32 %v1144, %v1344
        %v1439 = vmax.f32 %v1145, %v1349
        %v1440 = vmax.f32 %v1146, %v1352
        %v1441 = vmax.f32 %v1147, %v1357
        %v1442 = vmax.f32 %v1148, %v1360
        %v1443 = vmax.f32 %v1149, %v1365
        %v1444 = vmax.f32 %v1150, %v1368
        %v1445 = vmax.f32 %v1151, %v1373
        %v1446 = vmax.f32 %v1152, %v1376
        %v1447 = vmax.f32 %v1153, %v1381
        %v1448 = vmax.f32 %v1154, %v1384
        %v1449 = vmax.f32 %v1155, %v1389
        %v1450 = vmax.f32 %v1156, %v1392
        %v1451 = vmax.f32 %v1157, %v1397
        %v1452 = vmax.f32 %v1158, %v1400
        %v1453 = vmax.f32 %v1159, %v1405
        %v1454 = vmax.f32 %v1160, %v1408
        %v1455 = vmax.f32 %v1161, %v1413
        %v1456 = vmax.f32 %v1162, %v1416
        %v1457 = vmax.f32 %v1163, %v1421
        %v1458 = vmax.f32 %v1164, %v1424
        %v1459 = vmax.f32 %v1165, %v1429
        %v1460 = vmax.f32 %v1166, %v1432
        %s1461 = scalar_lea.vmem %s533, 312 [#allocation2]
        %v1462 = vld [vmem:[%s1461] sm:$0xf]
        %v1463 = vld [vmem:[%s1461 + $0x4] sm:$0xf]
        %v1464 = vld [vmem:[%s1461 + $0x8] sm:$0xf]
        %v1465 = vld [vmem:[%s1461 + $0xc] sm:$0xf]
        %v1466 = vld [vmem:[%s1461 + $0x10] sm:$0xf]
        %v1467 = vld [vmem:[%s1461 + $0x14] sm:$0xf]
        %v1468 = vld [vmem:[%s1461 + $0x18] sm:$0xf]
        %v1469 = vld [vmem:[%s1461 + $0x1c] sm:$0xf]
        %v1470 = vld [vmem:[%s1461 + $0x20] sm:$0xf]
        %v1471 = vld [vmem:[%s1461 + $0x24] sm:$0xf]
        %v1472 = vld [vmem:[%s1461 + $0x28] sm:$0xf]
        %v1473 = vld [vmem:[%s1461 + $0x2c] sm:$0xf]
        %v1474 = vld [vmem:[%s1461 + $0x30] sm:$0xf]
        %v1475 = vld [vmem:[%s1461 + $0x34] sm:$0xf]
        %v1476 = vld [vmem:[%s1461 + $0x38] sm:$0xf]
        %v1477 = vld [vmem:[%s1461 + $0x3c] sm:$0xf]
        %v1478 = vld [vmem:[%s1461 + $0x40] sm:$0xf]
        %v1479 = vld [vmem:[%s1461 + $0x44] sm:$0xf]
        %v1480 = vld [vmem:[%s1461 + $0x48] sm:$0xf]
        %v1481 = vld [vmem:[%s1461 + $0x4c] sm:$0xf]
        %v1482 = vld [vmem:[%s1461 + $0x50] sm:$0xf]
        %v1483 = vld [vmem:[%s1461 + $0x54] sm:$0xf]
        %v1484 = vld [vmem:[%s1461 + $0x58] sm:$0xf]
        %v1485 = vld [vmem:[%s1461 + $0x5c] sm:$0xf]
        %v1486 = vld [vmem:[%s1461 + $0x60] sm:$0xf]
        %v1487 = vld [vmem:[%s1461 + $0x64] sm:$0xf]
        %v1514 = vunpack.c.l.b16 %v1462
        %v1515 = vunpack.c.l.b16 %v1463
        %v1516 = vunpack.c.l.b16 %v1464
        %v1517 = vunpack.c.l.b16 %v1465
        %v1518 = vunpack.c.l.b16 %v1466
        %v1519 = vunpack.c.l.b16 %v1467
        %v1520 = vunpack.c.l.b16 %v1468
        %v1521 = vunpack.c.l.b16 %v1469
        %v1522 = vunpack.c.l.b16 %v1470
        %v1523 = vunpack.c.l.b16 %v1471
        %v1524 = vunpack.c.l.b16 %v1472
        %v1525 = vunpack.c.l.b16 %v1473
        %v1526 = vunpack.c.l.b16 %v1474
        %v1527 = vunpack.c.l.b16 %v1475
        %v1528 = vunpack.c.l.b16 %v1476
        %v1529 = vunpack.c.l.b16 %v1477
        %v1530 = vunpack.c.l.b16 %v1478
        %v1531 = vunpack.c.l.b16 %v1479
        %v1532 = vunpack.c.l.b16 %v1480
        %v1533 = vunpack.c.l.b16 %v1481
        %v1534 = vunpack.c.l.b16 %v1482
        %v1535 = vunpack.c.l.b16 %v1483
        %v1536 = vunpack.c.l.b16 %v1484
        %v1537 = vunpack.c.l.b16 %v1485
        %v1538 = vunpack.c.l.b16 %v1486
        %v1539 = vunpack.c.l.b16 %v1487
        %v1540 = vpack.c.b16 %v1515, %v1514
        %v1541 = vpack.c.b16 %v1517, %v1516
        %v1542 = vpack.c.b16 %v1519, %v1518
        %v1543 = vpack.c.b16 %v1521, %v1520
        %v1544 = vpack.c.b16 %v1523, %v1522
        %v1545 = vpack.c.b16 %v1525, %v1524
        %v1546 = vpack.c.b16 %v1527, %v1526
        %v1547 = vpack.c.b16 %v1529, %v1528
        %v1548 = vpack.c.b16 %v1531, %v1530
        %v1549 = vpack.c.b16 %v1533, %v1532
        %v1550 = vpack.c.b16 %v1535, %v1534
        %v1551 = vpack.c.b16 %v1537, %v1536
        %v1552 = vpack.c.b16 %v1539, %v1538
        %v1554 = vsel %vm692, %v1540, 0
        %v1557 = vsel %vm692, %v1541, 0
        %v1560 = vsel %vm692, %v1542, 0
        %v1563 = vsel %vm692, %v1543, 0
        %v1566 = vsel %vm692, %v1544, 0
        %v1569 = vsel %vm692, %v1545, 0
        %v1572 = vsel %vm692, %v1546, 0
        %v1575 = vsel %vm692, %v1547, 0
        %v1578 = vsel %vm692, %v1548, 0
        %v1581 = vsel %vm692, %v1549, 0
        %v1584 = vsel %vm692, %v1550, 0
        %v1587 = vsel %vm692, %v1551, 0
        %v1590 = vsel %vm692, %v1552, 0
        %1592 = vmatprep.subr.bf16.mxu0 0
        %1593 = vmatpush1.bf16.msra.mxu0 %v683
        %1594 = vmatprep.subr.bf16.mxu0 0
        %1595 = vmatpush1.bf16.msra.mxu0 %v684
        %1596 = vmatprep.subr.bf16.mxu0 0
        %1597 = vmatpush1.bf16.msra.mxu0 %v685
        %1598 = vmatprep.subr.bf16.mxu0 0
        %1599 = vmatpush1.bf16.msra.mxu0 %v686
        %1600 = vmatprep.subr.bf16.mxu0 0
        %1601 = vmatpush1.bf16.msra.mxu0 %v734
        %1602 = vmatprep.subr.bf16.mxu0 0
        %1603 = vmatpush1.bf16.msra.mxu0 0
        %1604 = vmatprep.subr.bf16.mxu0 0
        %1605 = vmatpush1.bf16.msra.mxu0 0
        %1606 = vmatprep.subr.bf16.mxu0 0
        %1607 = vmatpush1.bf16.msra.mxu0 0
        %1608 = vmatprep.subr.bf16.mxu0 0
        %1609 = vmatpush1.bf16.msra.mxu0 0
        %1610 = vmatprep.subr.bf16.mxu0 0
        %1611 = vmatpush1.bf16.msra.mxu0 0
        %1612 = vmatprep.subr.bf16.mxu0 0
        %1613 = vmatpush1.bf16.msra.mxu0 0
        %1614 = vmatprep.subr.bf16.mxu0 0
        %1615 = vmatpush1.bf16.msra.mxu0 0
        %1616 = vmatprep.subr.bf16.mxu0 0
        %1617 = vmatpush1.bf16.msra.mxu0 0
        %1618 = vmatprep.subr.bf16.mxu0 0
        %1619 = vmatpush1.bf16.msra.mxu0 0
        %1620 = vmatprep.subr.bf16.mxu0 0
        %1621 = vmatpush1.bf16.msra.mxu0 0
        %1622 = vmatprep.subr.bf16.mxu0 0
        %1623 = vmatpush1.bf16.msra.mxu0 0
        %1624 = vmatprep.mubr.bf16.mxu0 0
        %1625 = vmatmul.mubr.bf16.gmra.mrb[0].mxu0 %v1554
        %v1626 = vpop.f32.mrb[0].mxu0
        %v1627 = vadd.f32 0.0, %v1626
        %v1628 = vpop.f32.mrb[0].mxu0
        %v1629 = vpop.f32.mrb[0].mxu0
        %v1630 = vadd.f32 0.0, %v1629
        %v1631 = vpop.f32.mrb[0].mxu0
        %1632 = vmatprep.mubr.bf16.mxu0 0
        %1633 = vmatmul.mubr.bf16.gmra.mrb[0].mxu0 %v1557
        %v1634 = vpop.f32.mrb[0].mxu0
        %v1635 = vadd.f32 0.0, %v1634
        %v1636 = vpop.f32.mrb[0].mxu0
        %v1637 = vpop.f32.mrb[0].mxu0
        %v1638 = vadd.f32 0.0, %v1637
        %v1639 = vpop.f32.mrb[0].mxu0
        %1640 = vmatprep.mubr.bf16.mxu0 0
        %1641 = vmatmul.mubr.bf16.gmra.mrb[0].mxu0 %v1560
        %v1642 = vpop.f32.mrb[0].mxu0
        %v1643 = vadd.f32 0.0, %v1642
        %v1644 = vpop.f32.mrb[0].mxu0
        %v1645 = vpop.f32.mrb[0].mxu0
        %v1646 = vadd.f32 0.0, %v1645
        %v1647 = vpop.f32.mrb[0].mxu0
        %1648 = vmatprep.mubr.bf16.mxu0 0
        %1649 = vmatmul.mubr.bf16.gmra.mrb[0].mxu0 %v1563
        %v1650 = vpop.f32.mrb[0].mxu0
        %v1651 = vadd.f32 0.0, %v1650
        %v1652 = vpop.f32.mrb[0].mxu0
        %v1653 = vpop.f32.mrb[0].mxu0
        %v1654 = vadd.f32 0.0, %v1653
        %v1655 = vpop.f32.mrb[0].mxu0
        %1656 = vmatprep.mubr.bf16.mxu0 0
        %1657 = vmatmul.mubr.bf16.gmra.mrb[0].mxu0 %v1566
        %v1658 = vpop.f32.mrb[0].mxu0
        %v1659 = vadd.f32 0.0, %v1658
        %v1660 = vpop.f32.mrb[0].mxu0
        %v1661 = vpop.f32.mrb[0].mxu0
        %v1662 = vadd.f32 0.0, %v1661
        %v1663 = vpop.f32.mrb[0].mxu0
        %1664 = vmatprep.mubr.bf16.mxu0 0
        %1665 = vmatmul.mubr.bf16.gmra.mrb[0].mxu0 %v1569
        %v1666 = vpop.f32.mrb[0].mxu0
        %v1667 = vadd.f32 0.0, %v1666
        %v1668 = vpop.f32.mrb[0].mxu0
        %v1669 = vpop.f32.mrb[0].mxu0
        %v1670 = vadd.f32 0.0, %v1669
        %v1671 = vpop.f32.mrb[0].mxu0
        %1672 = vmatprep.mubr.bf16.mxu0 0
        %1673 = vmatmul.mubr.bf16.gmra.mrb[0].mxu0 %v1572
        %v1674 = vpop.f32.mrb[0].mxu0
        %v1675 = vadd.f32 0.0, %v1674
        %v1676 = vpop.f32.mrb[0].mxu0
        %v1677 = vpop.f32.mrb[0].mxu0
        %v1678 = vadd.f32 0.0, %v1677
        %v1679 = vpop.f32.mrb[0].mxu0
        %1680 = vmatprep.mubr.bf16.mxu0 0
        %1681 = vmatmul.mubr.bf16.gmra.mrb[0].mxu0 %v1575
        %v1682 = vpop.f32.mrb[0].mxu0
        %v1683 = vadd.f32 0.0, %v1682
        %v1684 = vpop.f32.mrb[0].mxu0
        %v1685 = vpop.f32.mrb[0].mxu0
        %v1686 = vadd.f32 0.0, %v1685
        %v1687 = vpop.f32.mrb[0].mxu0
        %1688 = vmatprep.mubr.bf16.mxu0 0
        %1689 = vmatmul.mubr.bf16.gmra.mrb[0].mxu0 %v1578
        %v1690 = vpop.f32.mrb[0].mxu0
        %v1691 = vadd.f32 0.0, %v1690
        %v1692 = vpop.f32.mrb[0].mxu0
        %v1693 = vpop.f32.mrb[0].mxu0
        %v1694 = vadd.f32 0.0, %v1693
        %v1695 = vpop.f32.mrb[0].mxu0
        %1696 = vmatprep.mubr.bf16.mxu0 0
        %1697 = vmatmul.mubr.bf16.gmra.mrb[0].mxu0 %v1581
        %v1698 = vpop.f32.mrb[0].mxu0
        %v1699 = vadd.f32 0.0, %v1698
        %v1700 = vpop.f32.mrb[0].mxu0
        %v1701 = vpop.f32.mrb[0].mxu0
        %v1702 = vadd.f32 0.0, %v1701
        %v1703 = vpop.f32.mrb[0].mxu0
        %1704 = vmatprep.mubr.bf16.mxu0 0
        %1705 = vmatmul.mubr.bf16.gmra.mrb[0].mxu0 %v1584
        %v1706 = vpop.f32.mrb[0].mxu0
        %v1707 = vadd.f32 0.0, %v1706
        %v1708 = vpop.f32.mrb[0].mxu0
        %v1709 = vpop.f32.mrb[0].mxu0
        %v1710 = vadd.f32 0.0, %v1709
        %v1711 = vpop.f32.mrb[0].mxu0
        %1712 = vmatprep.mubr.bf16.mxu0 0
        %1713 = vmatmul.mubr.bf16.gmra.mrb[0].mxu0 %v1587
        %v1714 = vpop.f32.mrb[0].mxu0
        %v1715 = vadd.f32 0.0, %v1714
        %v1716 = vpop.f32.mrb[0].mxu0
        %v1717 = vpop.f32.mrb[0].mxu0
        %v1718 = vadd.f32 0.0, %v1717
        %v1719 = vpop.f32.mrb[0].mxu0
        %1720 = vmatprep.mubr.bf16.mxu0 0
        %1721 = vmatmul.mubr.bf16.gmra.mrb[0].mxu0 %v1590
        %v1722 = vpop.f32.mrb[0].mxu0
        %v1723 = vadd.f32 0.0, %v1722
        %v1724 = vpop.f32.mrb[0].mxu0
        %v1725 = vpop.f32.mrb[0].mxu0
        %v1726 = vadd.f32 0.0, %v1725
        %v1727 = vpop.f32.mrb[0].mxu0
        %1728 = vdwg.mxu0
        %v1729 = vmax.f32 %v1435, %v1627
        %v1730 = vmax.f32 %v1436, %v1630
        %v1731 = vmax.f32 %v1437, %v1635
        %v1732 = vmax.f32 %v1438, %v1638
        %v1733 = vmax.f32 %v1439, %v1643
        %v1734 = vmax.f32 %v1440, %v1646
        %v1735 = vmax.f32 %v1441, %v1651
        %v1736 = vmax.f32 %v1442, %v1654
        %v1737 = vmax.f32 %v1443, %v1659
        %v1738 = vmax.f32 %v1444, %v1662
        %v1739 = vmax.f32 %v1445, %v1667
        %v1740 = vmax.f32 %v1446, %v1670
        %v1741 = vmax.f32 %v1447, %v1675
        %v1742 = vmax.f32 %v1448, %v1678
        %v1743 = vmax.f32 %v1449, %v1683
        %v1744 = vmax.f32 %v1450, %v1686
        %v1745 = vmax.f32 %v1451, %v1691
        %v1746 = vmax.f32 %v1452, %v1694
        %v1747 = vmax.f32 %v1453, %v1699
        %v1748 = vmax.f32 %v1454, %v1702
        %v1749 = vmax.f32 %v1455, %v1707
        %v1750 = vmax.f32 %v1456, %v1710
        %v1751 = vmax.f32 %v1457, %v1715
        %v1752 = vmax.f32 %v1458, %v1718
        %v1753 = vmax.f32 %v1459, %v1723
        %v1754 = vmax.f32 %v1460, %v1726
        %v1755 = vmax.f32 %v1729, 0.0
        %v1756 = vmax.f32 %v1730, 0.0
        %v1757 = vmax.f32 %v1731, 0.0
        %v1758 = vmax.f32 %v1732, 0.0
        %v1759 = vmax.f32 %v1733, 0.0
        %v1760 = vmax.f32 %v1734, 0.0
        %v1761 = vmax.f32 %v1735, 0.0
        %v1762 = vmax.f32 %v1736, 0.0
        %v1763 = vmax.f32 %v1737, 0.0
        %v1764 = vmax.f32 %v1738, 0.0
        %v1765 = vmax.f32 %v1739, 0.0
        %v1766 = vmax.f32 %v1740, 0.0
        %v1767 = vmax.f32 %v1741, 0.0
        %v1768 = vmax.f32 %v1742, 0.0
        %v1769 = vmax.f32 %v1743, 0.0
        %v1770 = vmax.f32 %v1744, 0.0
        %v1771 = vmax.f32 %v1745, 0.0
        %v1772 = vmax.f32 %v1746, 0.0
        %v1773 = vmax.f32 %v1747, 0.0
        %v1774 = vmax.f32 %v1748, 0.0
        %v1775 = vmax.f32 %v1749, 0.0
        %v1776 = vmax.f32 %v1750, 0.0
        %v1777 = vmax.f32 %v1751, 0.0
        %v1778 = vmax.f32 %v1752, 0.0
        %v1779 = vmax.f32 %v1753, 0.0
        %v1780 = vmax.f32 %v1754, 0.0
        %v1781 = vpack.c.bf16 %v1756, %v1755
        %v1782 = vpack.c.bf16 %v1758, %v1757
        %v1783 = vpack.c.bf16 %v1760, %v1759
        %v1784 = vpack.c.bf16 %v1762, %v1761
        %v1785 = vpack.c.bf16 %v1764, %v1763
        %v1786 = vpack.c.bf16 %v1766, %v1765
        %v1787 = vpack.c.bf16 %v1768, %v1767
        %v1788 = vpack.c.bf16 %v1770, %v1769
        %v1789 = vpack.c.bf16 %v1772, %v1771
        %v1790 = vpack.c.bf16 %v1774, %v1773
        %v1791 = vpack.c.bf16 %v1776, %v1775
        %v1792 = vpack.c.bf16 %v1778, %v1777
        %v1793 = vpack.c.bf16 %v1780, %v1779
        %v1807 = vunpack.c.l.b16 %v1781
        %v1808 = vunpack.c.h.b16 %v1781
        %v1809 = vunpack.c.l.b16 %v1782
        %v1810 = vunpack.c.h.b16 %v1782
        %v1811 = vunpack.c.l.b16 %v1783
        %v1812 = vunpack.c.h.b16 %v1783
        %v1813 = vunpack.c.l.b16 %v1784
        %v1814 = vunpack.c.h.b16 %v1784
        %v1815 = vunpack.c.l.b16 %v1785
        %v1816 = vunpack.c.h.b16 %v1785
        %v1817 = vunpack.c.l.b16 %v1786
        %v1818 = vunpack.c.h.b16 %v1786
        %v1819 = vunpack.c.l.b16 %v1787
        %v1820 = vunpack.c.h.b16 %v1787
        %v1821 = vunpack.c.l.b16 %v1788
        %v1822 = vunpack.c.h.b16 %v1788
        %v1823 = vunpack.c.l.b16 %v1789
        %v1824 = vunpack.c.h.b16 %v1789
        %v1825 = vunpack.c.l.b16 %v1790
        %v1826 = vunpack.c.h.b16 %v1790
        %v1827 = vunpack.c.l.b16 %v1791
        %v1828 = vunpack.c.h.b16 %v1791
        %v1829 = vunpack.c.l.b16 %v1792
        %v1830 = vunpack.c.h.b16 %v1792
        %v1831 = vunpack.c.l.b16 %v1793
        %v1832 = vunpack.c.h.b16 %v1793
        %v1833 = vpack.c.b16 %v1807, %v1807
        %v1834 = vpack.c.b16 %v1808, %v1808
        %v1835 = vpack.c.b16 %v1809, %v1809
        %v1836 = vpack.c.b16 %v1810, %v1810
        %v1837 = vpack.c.b16 %v1811, %v1811
        %v1838 = vpack.c.b16 %v1812, %v1812
        %v1839 = vpack.c.b16 %v1813, %v1813
        %v1840 = vpack.c.b16 %v1814, %v1814
        %v1841 = vpack.c.b16 %v1815, %v1815
        %v1842 = vpack.c.b16 %v1816, %v1816
        %v1843 = vpack.c.b16 %v1817, %v1817
        %v1844 = vpack.c.b16 %v1818, %v1818
        %v1845 = vpack.c.b16 %v1819, %v1819
        %v1846 = vpack.c.b16 %v1820, %v1820
        %v1847 = vpack.c.b16 %v1821, %v1821
        %v1848 = vpack.c.b16 %v1822, %v1822
        %v1849 = vpack.c.b16 %v1823, %v1823
        %v1850 = vpack.c.b16 %v1824, %v1824
        %v1851 = vpack.c.b16 %v1825, %v1825
        %v1852 = vpack.c.b16 %v1826, %v1826
        %v1853 = vpack.c.b16 %v1827, %v1827
        %v1854 = vpack.c.b16 %v1828, %v1828
        %v1855 = vpack.c.b16 %v1829, %v1829
        %v1856 = vpack.c.b16 %v1830, %v1830
        %v1857 = vpack.c.b16 %v1831, %v1831
        %v1858 = vpack.c.b16 %v1832, %v1832
        %1885 = vst [vmem:[%s550] sm:$0xf] %v1833
        %1886 = vst [vmem:[%s550 + $0x4] sm:$0xf] %v1834
        %1887 = vst [vmem:[%s550 + $0x8] sm:$0xf] %v1835
        %1888 = vst [vmem:[%s550 + $0xc] sm:$0xf] %v1836
        %1889 = vst [vmem:[%s550 + $0x10] sm:$0xf] %v1837
        %1890 = vst [vmem:[%s550 + $0x14] sm:$0xf] %v1838
        %1891 = vst [vmem:[%s550 + $0x18] sm:$0xf] %v1839
        %1892 = vst [vmem:[%s550 + $0x1c] sm:$0xf] %v1840
        %1893 = vst [vmem:[%s550 + $0x20] sm:$0xf] %v1841
        %1894 = vst [vmem:[%s550 + $0x24] sm:$0xf] %v1842
        %1895 = vst [vmem:[%s550 + $0x28] sm:$0xf] %v1843
        %1896 = vst [vmem:[%s550 + $0x2c] sm:$0xf] %v1844
        %1897 = vst [vmem:[%s550 + $0x30] sm:$0xf] %v1845
        %1898 = vst [vmem:[%s550 + $0x34] sm:$0xf] %v1846
        %1899 = vst [vmem:[%s550 + $0x38] sm:$0xf] %v1847
        %1900 = vst [vmem:[%s550 + $0x3c] sm:$0xf] %v1848
        %1901 = vst [vmem:[%s550 + $0x40] sm:$0xf] %v1849
        %1902 = vst [vmem:[%s550 + $0x44] sm:$0xf] %v1850
        %1903 = vst [vmem:[%s550 + $0x48] sm:$0xf] %v1851
        %1904 = vst [vmem:[%s550 + $0x4c] sm:$0xf] %v1852
        %1905 = vst [vmem:[%s550 + $0x50] sm:$0xf] %v1853
        %1906 = vst [vmem:[%s550 + $0x54] sm:$0xf] %v1854
        %1907 = vst [vmem:[%s550 + $0x58] sm:$0xf] %v1855
        %1908 = vst [vmem:[%s550 + $0x5c] sm:$0xf] %v1856
        %1909 = vst [vmem:[%s550 + $0x60] sm:$0xf] %v1857
        %1910 = vst [vmem:[%s550 + $0x64] sm:$0xf] %v1858
        %s1911 = sand.u32 %s68, 1
        %s1912 = sand.u32 %s68, 1
        %s1913 = smul.addr %s1912, 104
        %s1914 = scalar_lea.vmem [#allocation3], %s1913
        // Predicated region
        $region91: #{lenet_forward.3} parent=85 // pred_check
          %p1915 = pneg %p78
        $region92: #{lenet_forward.3} parent=85 // pred_check_branch
          %1917 = sbr.rel (%p1915) target = $region94
        $region93: #{lenet_forward.3} parent=85 // pred_region
          %s1918 = smul.u32 26, %s13
          %s1919 = ssub.s32 49, %s1918
          %p1920 = scmp.lt.s32.totalorder %s1919, 26
          %s1921 = scalar_select %p1920, %s1919, 26
          %s1922 = smul.u32 64, %s1921
          %p1923 = scmp.ne.s32.totalorder 0, %s1922
          %s1924 = smul.addr %s1918, 4
          %s1925 = scalar_lea.vmem %s2, %s1924
          // Predicated region
          $region95: #{lenet_forward.3} parent=93 // pred_check
            %p1926 = pneg %p1923
          $region96: #{lenet_forward.3} parent=93 // pred_check_branch
            %1928 = sbr.rel (%p1926) target = $region98
          $region97: #{lenet_forward.3} parent=93 // pred_region
            // Predicated region
            $region99: #{lenet_forward.3} parent=97 // pred_check
              _
            $region100: #{lenet_forward.3} parent=97 // pred_check_branch
              %1930 = sbr.rel target = $region102
            $region101: #{lenet_forward.3} parent=97 // pred_region
              // Predicated region
              $region121: #{lenet_forward.3} parent=101 // pred_check
                _
              $region122: #{lenet_forward.3} parent=101 // pred_check_branch
                %2030 = sbr.rel (0) target = $region124
              $region123: #{lenet_forward.3} parent=101 // pred_region
                %s2032 = sdiv.u32.pop %s1921, 26
                %s2033 = srem.u32.pop %s1921, 26
                // While loop
                $region125: #{lenet_forward.3} parent=123 // loop_pre_header
                  _
                $region126: #{lenet_forward.3} parent=123 // loop_header
                  %s2035 = sphi 0, %s2037
                  %p2036 = scmp.ge.s32.totalorder %s2035, %s2032
                  %s2040 = sphi 0, %s2097
                  %s2041 = sphi %s1914, %s2100
                  %s2042 = sphi %s1925, %s2101
                $region127: #{lenet_forward.3} parent=123 // loop_header_branch
                  %2039 = sbr.rel (%p2036) target = $region131
                $region128: #{lenet_forward.3} parent=123 // loop_body
                  %v2043 = vld [vmem:[%s2041] sm:$0xf]
                  %2044 = vst [vmem:[%s2042] sm:$0xf] %v2043
                  %v2045 = vld [vmem:[%s2041 + $0x4] sm:$0xf]
                  %2046 = vst [vmem:[%s2042 + $0x4] sm:$0xf] %v2045
                  %v2047 = vld [vmem:[%s2041 + $0x8] sm:$0xf]
                  %2048 = vst [vmem:[%s2042 + $0x8] sm:$0xf] %v2047
                  %v2049 = vld [vmem:[%s2041 + $0xc] sm:$0xf]
                  %2050 = vst [vmem:[%s2042 + $0xc] sm:$0xf] %v2049
                  %v2051 = vld [vmem:[%s2041 + $0x10] sm:$0xf]
                  %2052 = vst [vmem:[%s2042 + $0x10] sm:$0xf] %v2051
                  %v2053 = vld [vmem:[%s2041 + $0x14] sm:$0xf]
                  %2054 = vst [vmem:[%s2042 + $0x14] sm:$0xf] %v2053
                  %v2055 = vld [vmem:[%s2041 + $0x18] sm:$0xf]
                  %2056 = vst [vmem:[%s2042 + $0x18] sm:$0xf] %v2055
                  %v2057 = vld [vmem:[%s2041 + $0x1c] sm:$0xf]
                  %2058 = vst [vmem:[%s2042 + $0x1c] sm:$0xf] %v2057
                  %v2059 = vld [vmem:[%s2041 + $0x20] sm:$0xf]
                  %2060 = vst [vmem:[%s2042 + $0x20] sm:$0xf] %v2059
                  %v2061 = vld [vmem:[%s2041 + $0x24] sm:$0xf]
                  %2062 = vst [vmem:[%s2042 + $0x24] sm:$0xf] %v2061
                  %v2063 = vld [vmem:[%s2041 + $0x28] sm:$0xf]
                  %2064 = vst [vmem:[%s2042 + $0x28] sm:$0xf] %v2063
                  %v2065 = vld [vmem:[%s2041 + $0x2c] sm:$0xf]
                  %2066 = vst [vmem:[%s2042 + $0x2c] sm:$0xf] %v2065
                  %v2067 = vld [vmem:[%s2041 + $0x30] sm:$0xf]
                  %2068 = vst [vmem:[%s2042 + $0x30] sm:$0xf] %v2067
                  %v2069 = vld [vmem:[%s2041 + $0x34] sm:$0xf]
                  %2070 = vst [vmem:[%s2042 + $0x34] sm:$0xf] %v2069
                  %v2071 = vld [vmem:[%s2041 + $0x38] sm:$0xf]
                  %2072 = vst [vmem:[%s2042 + $0x38] sm:$0xf] %v2071
                  %v2073 = vld [vmem:[%s2041 + $0x3c] sm:$0xf]
                  %2074 = vst [vmem:[%s2042 + $0x3c] sm:$0xf] %v2073
                  %v2075 = vld [vmem:[%s2041 + $0x40] sm:$0xf]
                  %2076 = vst [vmem:[%s2042 + $0x40] sm:$0xf] %v2075
                  %v2077 = vld [vmem:[%s2041 + $0x44] sm:$0xf]
                  %2078 = vst [vmem:[%s2042 + $0x44] sm:$0xf] %v2077
                  %v2079 = vld [vmem:[%s2041 + $0x48] sm:$0xf]
                  %2080 = vst [vmem:[%s2042 + $0x48] sm:$0xf] %v2079
                  %v2081 = vld [vmem:[%s2041 + $0x4c] sm:$0xf]
                  %2082 = vst [vmem:[%s2042 + $0x4c] sm:$0xf] %v2081
                  %v2083 = vld [vmem:[%s2041 + $0x50] sm:$0xf]
                  %2084 = vst [vmem:[%s2042 + $0x50] sm:$0xf] %v2083
                  %v2085 = vld [vmem:[%s2041 + $0x54] sm:$0xf]
                  %2086 = vst [vmem:[%s2042 + $0x54] sm:$0xf] %v2085
                  %v2087 = vld [vmem:[%s2041 + $0x58] sm:$0xf]
                  %2088 = vst [vmem:[%s2042 + $0x58] sm:$0xf] %v2087
                  %v2089 = vld [vmem:[%s2041 + $0x5c] sm:$0xf]
                  %2090 = vst [vmem:[%s2042 + $0x5c] sm:$0xf] %v2089
                  %v2091 = vld [vmem:[%s2041 + $0x60] sm:$0xf]
                  %2092 = vst [vmem:[%s2042 + $0x60] sm:$0xf] %v2091
                  %v2093 = vld [vmem:[%s2041 + $0x64] sm:$0xf]
                  %2094 = vst [vmem:[%s2042 + $0x64] sm:$0xf] %v2093
                  %s2095 = sadd.s32 1, %s2040
                  %p2096 = scmp.ge.s32.totalorder %s2095, %s2032
                  %s2097 = scalar_select %p2096, 0, %s2095
                  %s2098 = smul.u32 %s2097, 104
                  %s2099 = smul.u32 %s2097, 104
                  %s2100 = scalar_lea.vmem %s1914, %s2098 [#allocation3]
                  %s2101 = scalar_lea.vmem %s1925, %s2099
                $region129: #{lenet_forward.3} parent=123 // loop_footer
                  %s2037 = sadd.s32 %s2035, 1
                $region130: #{lenet_forward.3} parent=123 // loop_footer_branch
                  %2034 = sbr.rel target = $region126
                $region131: #{lenet_forward.3} parent=123 // loop_exit
                  _
                %s2102 = sdiv.u32.pop %s1921, 26
                %s2103 = srem.u32.pop %s1921, 26
                %s2104 = smul.u32 %s2102, 26
                %s2105 = smul.u32 4, %s2104
                %s2106 = scalar_lea.vmem %s1914, %s2105 [#allocation3]
                %s2107 = smul.u32 4, %s2104
                %s2108 = scalar_lea.vmem %s1925, %s2107
                // While loop
                $region132: #{lenet_forward.3} parent=123 // loop_pre_header
                  _
                $region133: #{lenet_forward.3} parent=123 // loop_header
                  %s2110 = sphi 0, %s2112
                  %p2111 = scmp.ge.s32.totalorder %s2110, %s2103
                  %s2115 = sphi 0, %s2122
                  %s2116 = sphi %s2106, %s2125
                  %s2117 = sphi %s2108, %s2126
                $region134: #{lenet_forward.3} parent=123 // loop_header_branch
                  %2114 = sbr.rel (%p2111) target = $region138
                $region135: #{lenet_forward.3} parent=123 // loop_body
                  %v2118 = vld [vmem:[%s2116] sm:$0xf]
                  %2119 = vst [vmem:[%s2117] sm:$0xf] %v2118
                  %s2120 = sadd.s32 1, %s2115
                  %p2121 = scmp.ge.s32.totalorder %s2120, %s2103
                  %s2122 = scalar_select %p2121, 0, %s2120
                  %s2123 = smul.u32 %s2122, 4
                  %s2124 = smul.u32 %s2122, 4
                  %s2125 = scalar_lea.vmem %s2106, %s2123 [#allocation3]
                  %s2126 = scalar_lea.vmem %s2108, %s2124
                $region136: #{lenet_forward.3} parent=123 // loop_footer
                  %s2112 = sadd.s32 %s2110, 1
                $region137: #{lenet_forward.3} parent=123 // loop_footer_branch
                  %2109 = sbr.rel target = $region133
                $region138: #{lenet_forward.3} parent=123 // loop_exit
                  _
              $region124: #{lenet_forward.3} parent=101 // pred_fallthru
                _
            $region102: #{lenet_forward.3} parent=97 // pred_fallthru
              _
            // Predicated region
            $region103: #{lenet_forward.3} parent=97 // pred_check
              _
            $region104: #{lenet_forward.3} parent=97 // pred_check_branch
              %1932 = sbr.rel (0) target = $region106
            $region105: #{lenet_forward.3} parent=97 // pred_region
              %s1934 = sdiv.u32.pop %s1921, 26
              %s1935 = srem.u32.pop %s1921, 26
              // While loop
              $region107: #{lenet_forward.3} parent=105 // loop_pre_header
                _
              $region108: #{lenet_forward.3} parent=105 // loop_header
                %s1937 = sphi 0, %s1939
                %p1938 = scmp.ge.s32.totalorder %s1937, %s1934
                %s1942 = sphi 0, %s1999
                %s1943 = sphi %s1914, %s2002
                %s1944 = sphi %s1925, %s2003
              $region109: #{lenet_forward.3} parent=105 // loop_header_branch
                %1941 = sbr.rel (%p1938) target = $region113
              $region110: #{lenet_forward.3} parent=105 // loop_body
                %v1945 = vld [vmem:[%s1943] sm:$0xf]
                %1946 = vst [vmem:[%s1944] sm:$0xf] %v1945
                %v1947 = vld [vmem:[%s1943 + $0x4] sm:$0xf]
                %1948 = vst [vmem:[%s1944 + $0x4] sm:$0xf] %v1947
                %v1949 = vld [vmem:[%s1943 + $0x8] sm:$0xf]
                %1950 = vst [vmem:[%s1944 + $0x8] sm:$0xf] %v1949
                %v1951 = vld [vmem:[%s1943 + $0xc] sm:$0xf]
                %1952 = vst [vmem:[%s1944 + $0xc] sm:$0xf] %v1951
                %v1953 = vld [vmem:[%s1943 + $0x10] sm:$0xf]
                %1954 = vst [vmem:[%s1944 + $0x10] sm:$0xf] %v1953
                %v1955 = vld [vmem:[%s1943 + $0x14] sm:$0xf]
                %1956 = vst [vmem:[%s1944 + $0x14] sm:$0xf] %v1955
                %v1957 = vld [vmem:[%s1943 + $0x18] sm:$0xf]
                %1958 = vst [vmem:[%s1944 + $0x18] sm:$0xf] %v1957
                %v1959 = vld [vmem:[%s1943 + $0x1c] sm:$0xf]
                %1960 = vst [vmem:[%s1944 + $0x1c] sm:$0xf] %v1959
                %v1961 = vld [vmem:[%s1943 + $0x20] sm:$0xf]
                %1962 = vst [vmem:[%s1944 + $0x20] sm:$0xf] %v1961
                %v1963 = vld [vmem:[%s1943 + $0x24] sm:$0xf]
                %1964 = vst [vmem:[%s1944 + $0x24] sm:$0xf] %v1963
                %v1965 = vld [vmem:[%s1943 + $0x28] sm:$0xf]
                %1966 = vst [vmem:[%s1944 + $0x28] sm:$0xf] %v1965
                %v1967 = vld [vmem:[%s1943 + $0x2c] sm:$0xf]
                %1968 = vst [vmem:[%s1944 + $0x2c] sm:$0xf] %v1967
                %v1969 = vld [vmem:[%s1943 + $0x30] sm:$0xf]
                %1970 = vst [vmem:[%s1944 + $0x30] sm:$0xf] %v1969
                %v1971 = vld [vmem:[%s1943 + $0x34] sm:$0xf]
                %1972 = vst [vmem:[%s1944 + $0x34] sm:$0xf] %v1971
                %v1973 = vld [vmem:[%s1943 + $0x38] sm:$0xf]
                %1974 = vst [vmem:[%s1944 + $0x38] sm:$0xf] %v1973
                %v1975 = vld [vmem:[%s1943 + $0x3c] sm:$0xf]
                %1976 = vst [vmem:[%s1944 + $0x3c] sm:$0xf] %v1975
                %v1977 = vld [vmem:[%s1943 + $0x40] sm:$0xf]
                %1978 = vst [vmem:[%s1944 + $0x40] sm:$0xf] %v1977
                %v1979 = vld [vmem:[%s1943 + $0x44] sm:$0xf]
                %1980 = vst [vmem:[%s1944 + $0x44] sm:$0xf] %v1979
                %v1981 = vld [vmem:[%s1943 + $0x48] sm:$0xf]
                %1982 = vst [vmem:[%s1944 + $0x48] sm:$0xf] %v1981
                %v1983 = vld [vmem:[%s1943 + $0x4c] sm:$0xf]
                %1984 = vst [vmem:[%s1944 + $0x4c] sm:$0xf] %v1983
                %v1985 = vld [vmem:[%s1943 + $0x50] sm:$0xf]
                %1986 = vst [vmem:[%s1944 + $0x50] sm:$0xf] %v1985
                %v1987 = vld [vmem:[%s1943 + $0x54] sm:$0xf]
                %1988 = vst [vmem:[%s1944 + $0x54] sm:$0xf] %v1987
                %v1989 = vld [vmem:[%s1943 + $0x58] sm:$0xf]
                %1990 = vst [vmem:[%s1944 + $0x58] sm:$0xf] %v1989
                %v1991 = vld [vmem:[%s1943 + $0x5c] sm:$0xf]
                %1992 = vst [vmem:[%s1944 + $0x5c] sm:$0xf] %v1991
                %v1993 = vld [vmem:[%s1943 + $0x60] sm:$0xf]
                %1994 = vst [vmem:[%s1944 + $0x60] sm:$0xf] %v1993
                %v1995 = vld [vmem:[%s1943 + $0x64] sm:$0xf]
                %1996 = vst [vmem:[%s1944 + $0x64] sm:$0xf] %v1995
                %s1997 = sadd.s32 1, %s1942
                %p1998 = scmp.ge.s32.totalorder %s1997, %s1934
                %s1999 = scalar_select %p1998, 0, %s1997
                %s2000 = smul.u32 %s1999, 104
                %s2001 = smul.u32 %s1999, 104
                %s2002 = scalar_lea.vmem %s1914, %s2000 [#allocation3]
                %s2003 = scalar_lea.vmem %s1925, %s2001
              $region111: #{lenet_forward.3} parent=105 // loop_footer
                %s1939 = sadd.s32 %s1937, 1
              $region112: #{lenet_forward.3} parent=105 // loop_footer_branch
                %1936 = sbr.rel target = $region108
              $region113: #{lenet_forward.3} parent=105 // loop_exit
                _
              %s2004 = sdiv.u32.pop %s1921, 26
              %s2005 = srem.u32.pop %s1921, 26
              %s2006 = smul.u32 %s2004, 26
              %s2007 = smul.u32 4, %s2006
              %s2008 = scalar_lea.vmem %s1914, %s2007 [#allocation3]
              %s2009 = smul.u32 4, %s2006
              %s2010 = scalar_lea.vmem %s1925, %s2009
              // While loop
              $region114: #{lenet_forward.3} parent=105 // loop_pre_header
                _
              $region115: #{lenet_forward.3} parent=105 // loop_header
                %s2012 = sphi 0, %s2014
                %p2013 = scmp.ge.s32.totalorder %s2012, %s2005
                %s2017 = sphi 0, %s2024
                %s2018 = sphi %s2008, %s2027
                %s2019 = sphi %s2010, %s2028
              $region116: #{lenet_forward.3} parent=105 // loop_header_branch
                %2016 = sbr.rel (%p2013) target = $region120
              $region117: #{lenet_forward.3} parent=105 // loop_body
                %v2020 = vld [vmem:[%s2018] sm:$0xf]
                %2021 = vst [vmem:[%s2019] sm:$0xf] %v2020
                %s2022 = sadd.s32 1, %s2017
                %p2023 = scmp.ge.s32.totalorder %s2022, %s2005
                %s2024 = scalar_select %p2023, 0, %s2022
                %s2025 = smul.u32 %s2024, 4
                %s2026 = smul.u32 %s2024, 4
                %s2027 = scalar_lea.vmem %s2008, %s2025 [#allocation3]
                %s2028 = scalar_lea.vmem %s2010, %s2026
              $region118: #{lenet_forward.3} parent=105 // loop_footer
                %s2014 = sadd.s32 %s2012, 1
              $region119: #{lenet_forward.3} parent=105 // loop_footer_branch
                %2011 = sbr.rel target = $region115
              $region120: #{lenet_forward.3} parent=105 // loop_exit
                _
            $region106: #{lenet_forward.3} parent=97 // pred_fallthru
              _
          $region98: #{lenet_forward.3} parent=93 // pred_fallthru
            _
          %2127 = vnop
        $region94: #{lenet_forward.3} parent=85 // pred_fallthru
          _
      $region86: #{lenet_forward.3} parent=5 // pred_fallthru
        _
      %p2128 = scmp.le.s32.totalorder 2, %s8
      // Predicated region
      $region139: #{lenet_forward.3} parent=5 // pred_check
        %p2129 = pneg %p2128
      $region140: #{lenet_forward.3} parent=5 // pred_check_branch
        %2131 = sbr.rel (%p2129) target = $region142
      $region141: #{lenet_forward.3} parent=5 // pred_region
        %s2132 = ssub.s32 %s8, 2
        // Predicated region
        $region143: #{lenet_forward.3} parent=141 // pred_check
          %p2133 = pneg %p84
        $region144: #{lenet_forward.3} parent=141 // pred_check_branch
          %2135 = sbr.rel (%p2133) target = $region146
        $region145: #{lenet_forward.3} parent=141 // pred_region
          %s2136 = sand.u32 %s69, 1
          %s2137 = sand.u32 %s69, 1
          %s2138 = smul.addr %s2137, 104
          %s2139 = scalar_lea.vmem [#allocation3], %s2138
        $region146: #{lenet_forward.3} parent=141 // pred_fallthru
          _
      $region142: #{lenet_forward.3} parent=5 // pred_fallthru
        _
    $region6: #{lenet_forward.3} parent=1 // loop_footer
      %s12 = sadd.s32 1, %s8
    $region7: #{lenet_forward.3} parent=1 // loop_footer_branch
      %7 = sbr.rel target = $region3
    $region8: #{lenet_forward.3} parent=1 // loop_exit
      _

// kernel: lenet_forward.4
$region0: #{lenet_forward.4}
  #allocation0 [shape = 'u32[]', space=smem, size = 0x4, offset = 0x4, fixed_abs, tag = 'smem constant byte address 0x4 - core index']
  #allocation1 [shape = 'u32[144,128]{1,0:T(1,128)}', space=vmem, size = 0x12000, scoped, tag = 'internal scratch']
  %s0 = inlined_call_operand.vmem [shape: bf16[4,50,151], index: 0, kind: input, shape index: {}]
  %s1 = inlined_call_operand.vmem [shape: bf16[151,128], index: 1, kind: input, shape index: {}]
  %s2 = inlined_call_operand.vmem [shape: bf16[50,128], index: 2, kind: output, shape index: {}]
  %s3 = sld [smem:[#allocation0]]
  $region137: #{lenet_forward.4} parent=0
    _
  %s5 = ssub.s32 1, %s3
  %s6 = scalar_select 0, %s5, %s3
  $region1: #{lenet_forward.4} parent=0
    #allocation2 [shape = 'u8[131072]{0}', space=vmem, size = 0x20000, scoped, tag = 'input window, operand 0']
    #allocation3 [shape = 'u8[16384]{0}', space=vmem, size = 0x4000, scoped, tag = 'output window, operand 0']
    loop: start=0, step=1, limit=4
    $region2: #{lenet_forward.4} parent=1 // loop_pre_header
      _
    $region3: #{lenet_forward.4} parent=1 // loop_header
      %s8 = sphi 0, %s12
      %p9 = scmp.ge.s32.totalorder %s8, 4
      %s18 = sphi 0, %s20
      %s21 = sphi 0, %s18
      %s22 = sphi 0, %s21
      %s38 = sphi 0, %s22
      %s42 = sphi 0, %s42
      %s44 = sphi 0, %s42
      %s45 = sphi 0, %s44
      %s59 = sphi 0, %s45
      %s65 = sphi 0, %s67
      %s68 = sphi 0, %s65
      %s69 = sphi 0, %s68
      %s85 = sphi 0, %s69
    $region4: #{lenet_forward.4} parent=1 // loop_header_branch
      %11 = sbr.rel (%p9) target = $region8
    $region5: #{lenet_forward.4} parent=1 // loop_body
      %s13 = ssub.s32 %s8, 1
      %s14 = ssub.s32 %s8, 2
      %s15 = sadd.s32 %s8, 1
      %s16 = ssub.s32 %s8, %s15
      %p17 = scmp.eq.s32.totalorder %s16, 0
      %s19 = sadd.s32 %s18, 1
      %s20 = scalar_select %p17, %s18, %s19
      %p23 = pneg %p17
      %p24 = scmp.eq.s32.totalorder %s8, 1
      %p25 = por %p23, %p24
      %p26 = scmp.ne.s32.totalorder %s18, %s21
      %p27 = scmp.eq.s32.totalorder %s8, 0
      %p28 = por %p26, %p27
      %p29 = scmp.ne.s32.totalorder %s18, %s21
      %p30 = scmp.eq.s32.totalorder %s13, 1
      %p31 = por %p29, %p30
      %p32 = scmp.ne.s32.totalorder %s21, %s22
      %p33 = scmp.eq.s32.totalorder %s13, 0
      %p34 = por %p32, %p33
      %p35 = scmp.ne.s32.totalorder %s21, %s22
      %p36 = scmp.eq.s32.totalorder %s14, 1
      %p37 = por %p35, %p36
      %p39 = scmp.ne.s32.totalorder %s22, %s38
      %p40 = scmp.eq.s32.totalorder %s14, 0
      %p41 = por %p39, %p40
      %s43 = sadd.s32 %s42, 1
      %p46 = scmp.eq.s32.totalorder %s8, 1
      %p47 = scmp.ne.s32.totalorder %s42, %s44
      %p48 = scmp.eq.s32.totalorder %s8, 0
      %p49 = por %p47, %p48
      %p50 = scmp.ne.s32.totalorder %s42, %s44
      %p51 = scmp.eq.s32.totalorder %s13, 1
      %p52 = por %p50, %p51
      %p53 = scmp.ne.s32.totalorder %s44, %s45
      %p54 = scmp.eq.s32.totalorder %s13, 0
      %p55 = por %p53, %p54
      %p56 = scmp.ne.s32.totalorder %s44, %s45
      %p57 = scmp.eq.s32.totalorder %s14, 1
      %p58 = por %p56, %p57
      %p60 = scmp.ne.s32.totalorder %s45, %s59
      %p61 = scmp.eq.s32.totalorder %s14, 0
      %p62 = por %p60, %p61
      %s63 = ssub.s32 %s8, %s15
      %p64 = scmp.eq.s32.totalorder %s63, 0
      %s66 = sadd.s32 %s65, 1
      %s67 = scalar_select %p64, %s65, %s66
      %p70 = pneg %p64
      %p71 = scmp.eq.s32.totalorder %s8, 1
      %p72 = por %p70, %p71
      %p73 = scmp.ne.s32.totalorder %s65, %s68
      %p74 = scmp.eq.s32.totalorder %s8, 0
      %p75 = por %p73, %p74
      %p76 = scmp.ne.s32.totalorder %s65, %s68
      %p77 = scmp.eq.s32.totalorder %s13, 1
      %p78 = por %p76, %p77
      %p79 = scmp.ne.s32.totalorder %s68, %s69
      %p80 = scmp.eq.s32.totalorder %s13, 0
      %p81 = por %p79, %p80
      %p82 = scmp.ne.s32.totalorder %s68, %s69
      %p83 = scmp.eq.s32.totalorder %s14, 1
      %p84 = por %p82, %p83
      %p86 = scmp.ne.s32.totalorder %s69, %s85
      %p87 = scmp.eq.s32.totalorder %s14, 0
      %p88 = por %p86, %p87
      %p89 = scmp.le.s32.totalorder 1, %s8
      %p90 = scmp.lt.s32.totalorder %s8, 3
      %p91 = pnand %p89, %p90
      %p92 = pneg %p91
      // Predicated region
      $region9: #{lenet_forward.4} parent=5 // pred_check
        _
      $region10: #{lenet_forward.4} parent=5 // pred_check_branch
        %94 = sbr.rel (%p91) target = $region12
      $region11: #{lenet_forward.4} parent=5 // pred_region
        %s95 = ssub.s32 %s8, 1
        // Predicated region
        $region13: #{lenet_forward.4} parent=11 // pred_check
          %p96 = pneg %p55
        $region14: #{lenet_forward.4} parent=11 // pred_check_branch
          %98 = sbr.rel (%p96) target = $region16
        $region15: #{lenet_forward.4} parent=11 // pred_region
          _
        $region16: #{lenet_forward.4} parent=11 // pred_fallthru
          _
      $region12: #{lenet_forward.4} parent=5 // pred_fallthru
        _
      %p99 = scmp.lt.s32.totalorder %s8, 2
      // Predicated region
      $region17: #{lenet_forward.4} parent=5 // pred_check
        %p100 = pneg %p99
      $region18: #{lenet_forward.4} parent=5 // pred_check_branch
        %102 = sbr.rel (%p100) target = $region20
      $region19: #{lenet_forward.4} parent=5 // pred_region
        // Predicated region
        $region21: #{lenet_forward.4} parent=19 // pred_check
          %p103 = pneg %p28
        $region22: #{lenet_forward.4} parent=19 // pred_check_branch
          %105 = sbr.rel (%p103) target = $region24
        $region23: #{lenet_forward.4} parent=19 // pred_region
          %s106 = sand.u32 %s18, 1
          %s107 = sand.u32 %s18, 1
          %s108 = smul.addr %s107, 128
          %s109 = scalar_lea.vmem [#allocation2], %s108
          %s110 = smul.u32 4, %s8
          %s111 = ssub.s32 7, %s110
          %p112 = scmp.lt.s32.totalorder %s111, 4
          %s113 = scalar_select %p112, %s111, 4
          %s114 = smul.u32 256, %s113
          %s115 = smul.u32 %s114, 2
          %p116 = scmp.ne.s32.totalorder 0, %s115
          %s117 = smul.addr %s110, 2
          %s118 = smul.addr %s117, 4
          %s119 = scalar_lea.vmem %s0, %s118
          // Predicated region
          $region25: #{lenet_forward.4} parent=23 // pred_check
            %p120 = pneg %p116
          $region26: #{lenet_forward.4} parent=23 // pred_check_branch
            %122 = sbr.rel (%p120) target = $region28
          $region27: #{lenet_forward.4} parent=23 // pred_region
            // Predicated region
            $region29: #{lenet_forward.4} parent=27 // pred_check
              _
            $region30: #{lenet_forward.4} parent=27 // pred_check_branch
              %124 = sbr.rel (0) target = $region32
            $region31: #{lenet_forward.4} parent=27 // pred_region
              // Predicated region
              $region51: #{lenet_forward.4} parent=31 // pred_check
                _
              $region52: #{lenet_forward.4} parent=31 // pred_check_branch
                %209 = sbr.rel (0) target = $region54
              $region53: #{lenet_forward.4} parent=31 // pred_region
                %s210 = sshrl.u32 %s113, 2
                // While loop
                $region55: #{lenet_forward.4} parent=53 // loop_pre_header
                  _
                $region56: #{lenet_forward.4} parent=53 // loop_header
                  %s212 = sphi 0, %s214
                  %p213 = scmp.ge.s32.totalorder %s212, %s210
                  %s217 = sphi 0, %s254
                  %s218 = sphi %s119, %s257
                  %s219 = sphi %s109, %s258
                $region57: #{lenet_forward.4} parent=53 // loop_header_branch
                  %216 = sbr.rel (%p213) target = $region61
                $region58: #{lenet_forward.4} parent=53 // loop_body
                  %v220 = vld [vmem:[%s218] sm:$0xff]
                  %221 = vst [vmem:[%s219] sm:$0xff] %v220
                  %v222 = vld [vmem:[%s218 + $0x8] sm:$0xff]
                  %223 = vst [vmem:[%s219 + $0x8] sm:$0xff] %v222
                  %v224 = vld [vmem:[%s218 + $0x10] sm:$0xff]
                  %225 = vst [vmem:[%s219 + $0x10] sm:$0xff] %v224
                  %v226 = vld [vmem:[%s218 + $0x18] sm:$0xff]
                  %227 = vst [vmem:[%s219 + $0x18] sm:$0xff] %v226
                  %v228 = vld [vmem:[%s218 + $0x38] sm:$0xff]
                  %229 = vst [vmem:[%s219 + $0x20] sm:$0xff] %v228
                  %v230 = vld [vmem:[%s218 + $0x40] sm:$0xff]
                  %231 = vst [vmem:[%s219 + $0x28] sm:$0xff] %v230
                  %v232 = vld [vmem:[%s218 + $0x48] sm:$0xff]
                  %233 = vst [vmem:[%s219 + $0x30] sm:$0xff] %v232
                  %v234 = vld [vmem:[%s218 + $0x50] sm:$0xff]
                  %235 = vst [vmem:[%s219 + $0x38] sm:$0xff] %v234
                  %v236 = vld [vmem:[%s218 + $0x70] sm:$0xff]
                  %237 = vst [vmem:[%s219 + $0x40] sm:$0xff] %v236
                  %v238 = vld [vmem:[%s218 + $0x78] sm:$0xff]
                  %239 = vst [vmem:[%s219 + $0x48] sm:$0xff] %v238
                  %v240 = vld [vmem:[%s218 + $0x80] sm:$0xff]
                  %241 = vst [vmem:[%s219 + $0x50] sm:$0xff] %v240
                  %v242 = vld [vmem:[%s218 + $0x88] sm:$0xff]
                  %243 = vst [vmem:[%s219 + $0x58] sm:$0xff] %v242
                  %v244 = vld [vmem:[%s218 + $0xa8] sm:$0xff]
                  %245 = vst [vmem:[%s219 + $0x60] sm:$0xff] %v244
                  %v246 = vld [vmem:[%s218 + $0xb0] sm:$0xff]
                  %247 = vst [vmem:[%s219 + $0x68] sm:$0xff] %v246
                  %v248 = vld [vmem:[%s218 + $0xb8] sm:$0xff]
                  %249 = vst [vmem:[%s219 + $0x70] sm:$0xff] %v248
                  %v250 = vld [vmem:[%s218 + $0xc0] sm:$0xff]
                  %251 = vst [vmem:[%s219 + $0x78] sm:$0xff] %v250
                  %s252 = sadd.s32 1, %s217
                  %p253 = scmp.ge.s32.totalorder %s252, %s210
                  %s254 = scalar_select %p253, 0, %s252
                  %s255 = smul.u32 %s254, 32
                  %s256 = smul.u32 %s254, 32
                  %s257 = scalar_lea.vmem %s119, %s255
                  %s258 = scalar_lea.vmem %s109, %s256 [#allocation2]
                $region59: #{lenet_forward.4} parent=53 // loop_footer
                  %s214 = sadd.s32 %s212, 1
                $region60: #{lenet_forward.4} parent=53 // loop_footer_branch
                  %211 = sbr.rel target = $region56
                $region61: #{lenet_forward.4} parent=53 // loop_exit
                  _
                %s259 = sshrl.u32 %s113, 2
                %s260 = sand.u32 %s113, 3
                %s261 = smul.u32 %s259, 4
                %s262 = smul.u32 8, %s261
                %s263 = scalar_lea.vmem %s119, %s262
                %s264 = smul.u32 8, %s261
                %s265 = scalar_lea.vmem %s109, %s264 [#allocation2]
                // While loop
                $region62: #{lenet_forward.4} parent=53 // loop_pre_header
                  _
                $region63: #{lenet_forward.4} parent=53 // loop_header
                  %s267 = sphi 0, %s269
                  %p268 = scmp.ge.s32.totalorder %s267, %s260
                  %s272 = sphi 0, %s285
                  %s273 = sphi %s263, %s288
                  %s274 = sphi %s265, %s289
                $region64: #{lenet_forward.4} parent=53 // loop_header_branch
                  %271 = sbr.rel (%p268) target = $region68
                $region65: #{lenet_forward.4} parent=53 // loop_body
                  %v275 = vld [vmem:[%s273] sm:$0xff]
                  %276 = vst [vmem:[%s274] sm:$0xff] %v275
                  %v277 = vld [vmem:[%s273 + $0x38] sm:$0xff]
                  %278 = vst [vmem:[%s274 + $0x20] sm:$0xff] %v277
                  %v279 = vld [vmem:[%s273 + $0x70] sm:$0xff]
                  %280 = vst [vmem:[%s274 + $0x40] sm:$0xff] %v279
                  %v281 = vld [vmem:[%s273 + $0xa8] sm:$0xff]
                  %282 = vst [vmem:[%s274 + $0x60] sm:$0xff] %v281
                  %s283 = sadd.s32 1, %s272
                  %p284 = scmp.ge.s32.totalorder %s283, %s260
                  %s285 = scalar_select %p284, 0, %s283
                  %s286 = smul.u32 %s285, 8
                  %s287 = smul.u32 %s285, 8
                  %s288 = scalar_lea.vmem %s263, %s286
                  %s289 = scalar_lea.vmem %s265, %s287 [#allocation2]
                $region66: #{lenet_forward.4} parent=53 // loop_footer
                  %s269 = sadd.s32 %s267, 1
                $region67: #{lenet_forward.4} parent=53 // loop_footer_branch
                  %266 = sbr.rel target = $region63
                $region68: #{lenet_forward.4} parent=53 // loop_exit
                  _
              $region54: #{lenet_forward.4} parent=31 // pred_fallthru
                _
              // Predicated region
              $region69: #{lenet_forward.4} parent=31 // pred_check
                _
              $region70: #{lenet_forward.4} parent=31 // pred_check_branch
                %291 = sbr.rel target = $region72
              $region71: #{lenet_forward.4} parent=31 // pred_region
                _
              $region72: #{lenet_forward.4} parent=31 // pred_fallthru
                _
            $region32: #{lenet_forward.4} parent=27 // pred_fallthru
              _
            // Predicated region
            $region33: #{lenet_forward.4} parent=27 // pred_check
              _
            $region34: #{lenet_forward.4} parent=27 // pred_check_branch
              %126 = sbr.rel target = $region36
            $region35: #{lenet_forward.4} parent=27 // pred_region
              %s128 = sshrl.u32 %s113, 2
              // While loop
              $region37: #{lenet_forward.4} parent=35 // loop_pre_header
                _
              $region38: #{lenet_forward.4} parent=35 // loop_header
                %s130 = sphi 0, %s132
                %p131 = scmp.ge.s32.totalorder %s130, %s128
                %s135 = sphi 0, %s172
                %s136 = sphi %s119, %s175
                %s137 = sphi %s109, %s176
              $region39: #{lenet_forward.4} parent=35 // loop_header_branch
                %134 = sbr.rel (%p131) target = $region43
              $region40: #{lenet_forward.4} parent=35 // loop_body
                %v138 = vld [vmem:[%s136] sm:$0xff]
                %139 = vst [vmem:[%s137] sm:$0xff] %v138
                %v140 = vld [vmem:[%s136 + $0x8] sm:$0xff]
                %141 = vst [vmem:[%s137 + $0x8] sm:$0xff] %v140
                %v142 = vld [vmem:[%s136 + $0x10] sm:$0xff]
                %143 = vst [vmem:[%s137 + $0x10] sm:$0xff] %v142
                %v144 = vld [vmem:[%s136 + $0x18] sm:$0xff]
                %145 = vst [vmem:[%s137 + $0x18] sm:$0xff] %v144
                %v146 = vld [vmem:[%s136 + $0x38] sm:$0xff]
                %147 = vst [vmem:[%s137 + $0x20] sm:$0xff] %v146
                %v148 = vld [vmem:[%s136 + $0x40] sm:$0xff]
                %149 = vst [vmem:[%s137 + $0x28] sm:$0xff] %v148
                %v150 = vld [vmem:[%s136 + $0x48] sm:$0xff]
                %151 = vst [vmem:[%s137 + $0x30] sm:$0xff] %v150
                %v152 = vld [vmem:[%s136 + $0x50] sm:$0xff]
                %153 = vst [vmem:[%s137 + $0x38] sm:$0xff] %v152
                %v154 = vld [vmem:[%s136 + $0x70] sm:$0xff]
                %155 = vst [vmem:[%s137 + $0x40] sm:$0xff] %v154
                %v156 = vld [vmem:[%s136 + $0x78] sm:$0xff]
                %157 = vst [vmem:[%s137 + $0x48] sm:$0xff] %v156
                %v158 = vld [vmem:[%s136 + $0x80] sm:$0xff]
                %159 = vst [vmem:[%s137 + $0x50] sm:$0xff] %v158
                %v160 = vld [vmem:[%s136 + $0x88] sm:$0xff]
                %161 = vst [vmem:[%s137 + $0x58] sm:$0xff] %v160
                %v162 = vld [vmem:[%s136 + $0xa8] sm:$0xff]
                %163 = vst [vmem:[%s137 + $0x60] sm:$0xff] %v162
                %v164 = vld [vmem:[%s136 + $0xb0] sm:$0xff]
                %165 = vst [vmem:[%s137 + $0x68] sm:$0xff] %v164
                %v166 = vld [vmem:[%s136 + $0xb8] sm:$0xff]
                %167 = vst [vmem:[%s137 + $0x70] sm:$0xff] %v166
                %v168 = vld [vmem:[%s136 + $0xc0] sm:$0xff]
                %169 = vst [vmem:[%s137 + $0x78] sm:$0xff] %v168
                %s170 = sadd.s32 1, %s135
                %p171 = scmp.ge.s32.totalorder %s170, %s128
                %s172 = scalar_select %p171, 0, %s170
                %s173 = smul.u32 %s172, 32
                %s174 = smul.u32 %s172, 32
                %s175 = scalar_lea.vmem %s119, %s173
                %s176 = scalar_lea.vmem %s109, %s174 [#allocation2]
              $region41: #{lenet_forward.4} parent=35 // loop_footer
                %s132 = sadd.s32 %s130, 1
              $region42: #{lenet_forward.4} parent=35 // loop_footer_branch
                %129 = sbr.rel target = $region38
              $region43: #{lenet_forward.4} parent=35 // loop_exit
                _
              %s177 = sshrl.u32 %s113, 2
              %s178 = sand.u32 %s113, 3
              %s179 = smul.u32 %s177, 4
              %s180 = smul.u32 8, %s179
              %s181 = scalar_lea.vmem %s119, %s180
              %s182 = smul.u32 8, %s179
              %s183 = scalar_lea.vmem %s109, %s182 [#allocation2]
              // While loop
              $region44: #{lenet_forward.4} parent=35 // loop_pre_header
                _
              $region45: #{lenet_forward.4} parent=35 // loop_header
                %s185 = sphi 0, %s187
                %p186 = scmp.ge.s32.totalorder %s185, %s178
                %s190 = sphi 0, %s203
                %s191 = sphi %s181, %s206
                %s192 = sphi %s183, %s207
              $region46: #{lenet_forward.4} parent=35 // loop_header_branch
                %189 = sbr.rel (%p186) target = $region50
              $region47: #{lenet_forward.4} parent=35 // loop_body
                %v193 = vld [vmem:[%s191] sm:$0xff]
                %194 = vst [vmem:[%s192] sm:$0xff] %v193
                %v195 = vld [vmem:[%s191 + $0x38] sm:$0xff]
                %196 = vst [vmem:[%s192 + $0x20] sm:$0xff] %v195
                %v197 = vld [vmem:[%s191 + $0x70] sm:$0xff]
                %198 = vst [vmem:[%s192 + $0x40] sm:$0xff] %v197
                %v199 = vld [vmem:[%s191 + $0xa8] sm:$0xff]
                %200 = vst [vmem:[%s192 + $0x60] sm:$0xff] %v199
                %s201 = sadd.s32 1, %s190
                %p202 = scmp.ge.s32.totalorder %s201, %s178
                %s203 = scalar_select %p202, 0, %s201
                %s204 = smul.u32 %s203, 8
                %s205 = smul.u32 %s203, 8
                %s206 = scalar_lea.vmem %s181, %s204
                %s207 = scalar_lea.vmem %s183, %s205 [#allocation2]
              $region48: #{lenet_forward.4} parent=35 // loop_footer
                %s187 = sadd.s32 %s185, 1
              $region49: #{lenet_forward.4} parent=35 // loop_footer_branch
                %184 = sbr.rel target = $region45
              $region50: #{lenet_forward.4} parent=35 // loop_exit
                _
            $region36: #{lenet_forward.4} parent=27 // pred_fallthru
              _
          $region28: #{lenet_forward.4} parent=23 // pred_fallthru
            _
          %292 = vnop
        $region24: #{lenet_forward.4} parent=19 // pred_fallthru
          _
      $region20: #{lenet_forward.4} parent=5 // pred_fallthru
        _
      %p293 = scmp.le.s32.totalorder 1, %s8
      %p294 = scmp.lt.s32.totalorder %s8, 3
      %p295 = pnand %p293, %p294
      %p296 = pneg %p295
      // Predicated region
      $region73: #{lenet_forward.4} parent=5 // pred_check
        _
      $region74: #{lenet_forward.4} parent=5 // pred_check_branch
        %298 = sbr.rel (%p295) target = $region76
      $region75: #{lenet_forward.4} parent=5 // pred_region
        %s299 = ssub.s32 %s8, 1
        %s300 = sand.u32 %s21, 1
        %s301 = sand.u32 %s21, 1
        %s302 = smul.addr %s301, 128
        %s303 = scalar_lea.vmem [#allocation2], %s302
        // Predicated region
        $region77: #{lenet_forward.4} parent=75 // pred_check
          %p304 = pneg %p34
        $region78: #{lenet_forward.4} parent=75 // pred_check_branch
          %306 = sbr.rel (%p304) target = $region80
        $region79: #{lenet_forward.4} parent=75 // pred_region
          _
        $region80: #{lenet_forward.4} parent=75 // pred_fallthru
          _
        %s307 = sand.u32 %s21, 1
        %s308 = sand.u32 %s21, 1
        %s309 = smul.addr %s308, 128
        %s310 = scalar_lea.vmem [#allocation2], %s309
        %p311 = pneg %p34
        %p312 = pneg %p31
        %p313 = pneg %p55
        %p314 = pneg %p52
        %p315 = pneg %p81
        %p316 = pneg %p78
        %s317 = sand.u32 %s68, 1
        %s318 = sand.u32 %s68, 1
        %s319 = smul.addr %s318, 16
        %s320 = scalar_lea.vmem [#allocation3], %s319
        %s321 = smul.u32 4, %s13
        %s322 = ssub.s32 7, %s321
        %p323 = scmp.lt.s32.totalorder %s322, 4
        %s324 = scalar_select %p323, %s322, 4
        %s325 = smul.u32 256, %s324
        %s326 = smul.u32 %s325, 2
        %s327 = smul.u32 4, %s13
        %s328 = ssub.s32 7, %s327
        %p329 = scmp.lt.s32.totalorder %s328, 4
        %s330 = scalar_select %p329, %s328, 4
        %s331 = smul.u32 64, %s330
        %v333 = vld [vmem:[%s1] sm:$0xf]
        %v334 = vld [vmem:[%s1 + $0x4] sm:$0xf]
        %v335 = vld [vmem:[%s1 + $0x8] sm:$0xf]
        %v336 = vld [vmem:[%s1 + $0xc] sm:$0xf]
        %v337 = vld [vmem:[%s1 + $0x10] sm:$0xf]
        %v338 = vld [vmem:[%s1 + $0x14] sm:$0xf]
        %v339 = vld [vmem:[%s1 + $0x18] sm:$0xf]
        %v340 = vld [vmem:[%s1 + $0x1c] sm:$0xf]
        %v341 = vld [vmem:[%s1 + $0x20] sm:$0xf]
        %v342 = vld [vmem:[%s1 + $0x24] sm:$0xf]
        %v343 = vld [vmem:[%s1 + $0x28] sm:$0xf]
        %v344 = vld [vmem:[%s1 + $0x2c] sm:$0xf]
        %v345 = vld [vmem:[%s1 + $0x30] sm:$0xf]
        %v346 = vld [vmem:[%s1 + $0x34] sm:$0xf]
        %v347 = vld [vmem:[%s1 + $0x38] sm:$0xf]
        %v348 = vld [vmem:[%s1 + $0x3c] sm:$0xf]
        %v349 = vld [vmem:[%s1 + $0x40] sm:$0xf]
        %v350 = vld [vmem:[%s1 + $0x44] sm:$0xf]
        %v351 = vld [vmem:[%s1 + $0x48] sm:$0xf]
        %v352 = vld [vmem:[%s303] sm:$0xff]
        %v353 = vld [vmem:[%s303 + $0x8] sm:$0xff]
        %v354 = vld [vmem:[%s303 + $0x10] sm:$0xff]
        %v355 = vld [vmem:[%s303 + $0x18] sm:$0xff]
        %v360 = vunpack.c.l.b16 %v352
        %v361 = vunpack.c.h.b16 %v352
        %v362 = vunpack.c.l.b16 %v353
        %v363 = vunpack.c.h.b16 %v353
        %v364 = vunpack.c.l.b16 %v354
        %v365 = vunpack.c.h.b16 %v354
        %v366 = vunpack.c.l.b16 %v355
        %v367 = vunpack.c.h.b16 %v355
        %v368 = vpack.c.b16 %v362, %v360
        %v369 = vpack.c.b16 %v363, %v361
        %v370 = vpack.c.b16 %v366, %v364
        %v371 = vpack.c.b16 %v367, %v365
        %v393 = vunpack.c.l.b16 %v333
        %v394 = vunpack.c.l.b16 %v334
        %v395 = vunpack.c.l.b16 %v335
        %v396 = vunpack.c.l.b16 %v336
        %v397 = vunpack.c.l.b16 %v337
        %v398 = vunpack.c.l.b16 %v338
        %v399 = vunpack.c.l.b16 %v339
        %v400 = vunpack.c.l.b16 %v340
        %v401 = vunpack.c.l.b16 %v341
        %v402 = vunpack.c.l.b16 %v342
        %v403 = vunpack.c.l.b16 %v343
        %v404 = vunpack.c.l.b16 %v344
        %v405 = vunpack.c.l.b16 %v345
        %v406 = vunpack.c.l.b16 %v346
        %v407 = vunpack.c.l.b16 %v347
        %v408 = vunpack.c.l.b16 %v348
        %v409 = vunpack.c.l.b16 %v349
        %v410 = vunpack.c.l.b16 %v350
        %v411 = vunpack.c.l.b16 %v351
        %v412 = vpack.c.b16 %v394, %v393
        %v413 = vpack.c.b16 %v396, %v395
        %v414 = vpack.c.b16 %v398, %v397
        %v415 = vpack.c.b16 %v400, %v399
        %v416 = vpack.c.b16 %v402, %v401
        %v417 = vpack.c.b16 %v404, %v403
        %v418 = vpack.c.b16 %v406, %v405
        %v419 = vpack.c.b16 %v408, %v407
        %v420 = vpack.c.b16 %v410, %v409
        %v421 = vpack.c.b16 %v411, %v411
        %vm431 = vcmask 187392
        %v433 = vsel %vm431, %v369, 0
        %v436 = vsel %vm431, %v371, 0
        %vm438 = vcmask 1042432
        %vm439 = vcmask 1043456
        %v440 = vsel %vm438, 4294967295, 65535
        %v441 = vsel %vm439, %v440, 0
        %v443 = vand.u32 %v421, %v441
        %445 = vmatprep.subr.bf16.mxu0 0
        %446 = vmatpush1.bf16.msra.mxu0 %v412
        %447 = vmatprep.subr.bf16.mxu0 0
        %448 = vmatpush1.bf16.msra.mxu0 %v413
        %449 = vmatprep.subr.bf16.mxu0 0
        %450 = vmatpush1.bf16.msra.mxu0 %v414
        %451 = vmatprep.subr.bf16.mxu0 0
        %452 = vmatpush1.bf16.msra.mxu0 %v415
        %453 = vmatprep.subr.bf16.mxu0 0
        %454 = vmatpush1.bf16.msra.mxu0 %v416
        %455 = vmatprep.subr.bf16.mxu0 0
        %456 = vmatpush1.bf16.msra.mxu0 %v417
        %457 = vmatprep.subr.bf16.mxu0 0
        %458 = vmatpush1.bf16.msra.mxu0 %v418
        %459 = vmatprep.subr.bf16.mxu0 0
        %460 = vmatpush1.bf16.msra.mxu0 %v419
        %461 = vmatprep.subr.bf16.mxu0 0
        %462 = vmatpush1.bf16.msra.mxu0 %v420
        %463 = vmatprep.subr.bf16.mxu0 0
        %464 = vmatpush1.bf16.msra.mxu0 %v443
        %465 = vmatprep.subr.bf16.mxu0 0
        %466 = vmatpush1.bf16.msra.mxu0 0
        %467 = vmatprep.subr.bf16.mxu0 0
        %468 = vmatpush1.bf16.msra.mxu0 0
        %469 = vmatprep.subr.bf16.mxu0 0
        %470 = vmatpush1.bf16.msra.mxu0 0
        %471 = vmatprep.subr.bf16.mxu0 0
        %472 = vmatpush1.bf16.msra.mxu0 0
        %473 = vmatprep.subr.bf16.mxu0 0
        %474 = vmatpush1.bf16.msra.mxu0 0
        %475 = vmatprep.subr.bf16.mxu0 0
        %476 = vmatpush1.bf16.msra.mxu0 0
        %477 = vmatprep.mubr.bf16.mxu0 %v433
        %478 = vmatmul.mubr.bf16.gmra.mrb[0].mxu0 %v368
        %v479 = vpop.f32.mrb[0].mxu0
        %v480 = vadd.f32 0.0, %v479
        %v481 = vpop.f32.mrb[0].mxu0
        %v482 = vpop.f32.mrb[0].mxu0
        %v483 = vadd.f32 0.0, %v482
        %v484 = vpop.f32.mrb[0].mxu0
        %485 = vmatprep.mubr.bf16.mxu0 %v436
        %486 = vmatmul.mubr.bf16.gmra.mrb[0].mxu0 %v370
        %v487 = vpop.f32.mrb[0].mxu0
        %v488 = vadd.f32 0.0, %v487
        %v489 = vpop.f32.mrb[0].mxu0
        %v490 = vpop.f32.mrb[0].mxu0
        %v491 = vadd.f32 0.0, %v490
        %v492 = vpop.f32.mrb[0].mxu0
        %493 = vdwg.mxu0
        %s494 = scalar_lea.vmem %s303, 32 [#allocation2]
        %v495 = vld [vmem:[%s494] sm:$0xff]
        %v496 = vld [vmem:[%s494 + $0x8] sm:$0xff]
        %v497 = vld [vmem:[%s494 + $0x10] sm:$0xff]
        %v498 = vld [vmem:[%s494 + $0x18] sm:$0xff]
        %v503 = vunpack.c.l.b16 %v495
        %v504 = vunpack.c.h.b16 %v495
        %v505 = vunpack.c.l.b16 %v496
        %v506 = vunpack.c.h.b16 %v496
        %v507 = vunpack.c.l.b16 %v497
        %v508 = vunpack.c.h.b16 %v497
        %v509 = vunpack.c.l.b16 %v498
        %v510 = vunpack.c.h.b16 %v498
        %v511 = vpack.c.b16 %v505, %v503
        %v512 = vpack.c.b16 %v506, %v504
        %v513 = vpack.c.b16 %v509, %v507
        %v514 = vpack.c.b16 %v510, %v508
        %v518 = vsel %vm431, %v512, 0
        %v521 = vsel %vm431, %v514, 0
        %523 = vmatprep.subr.bf16.mxu0 0
        %524 = vmatpush1.bf16.msra.mxu0 %v412
        %525 = vmatprep.subr.bf16.mxu0 0
        %526 = vmatpush1.bf16.msra.mxu0 %v413
        %527 = vmatprep.subr.bf16.mxu0 0
        %528 = vmatpush1.bf16.msra.mxu0 %v414
        %529 = vmatprep.subr.bf16.mxu0 0
        %530 = vmatpush1.bf16.msra.mxu0 %v415
        %531 = vmatprep.subr.bf16.mxu0 0
        %532 = vmatpush1.bf16.msra.mxu0 %v416
        %533 = vmatprep.subr.bf16.mxu0 0
        %534 = vmatpush1.bf16.msra.mxu0 %v417
        %535 = vmatprep.subr.bf16.mxu0 0
        %536 = vmatpush1.bf16.msra.mxu0 %v418
        %537 = vmatprep.subr.bf16.mxu0 0
        %538 = vmatpush1.bf16.msra.mxu0 %v419
        %539 = vmatprep.subr.bf16.mxu0 0
        %540 = vmatpush1.bf16.msra.mxu0 %v420
        %541 = vmatprep.subr.bf16.mxu0 0
        %542 = vmatpush1.bf16.msra.mxu0 %v443
        %543 = vmatprep.subr.bf16.mxu0 0
        %544 = vmatpush1.bf16.msra.mxu0 0
        %545 = vmatprep.subr.bf16.mxu0 0
        %546 = vmatpush1.bf16.msra.mxu0 0
        %547 = vmatprep.subr.bf16.mxu0 0
        %548 = vmatpush1.bf16.msra.mxu0 0
        %549 = vmatprep.subr.bf16.mxu0 0
        %550 = vmatpush1.bf16.msra.mxu0 0
        %551 = vmatprep.subr.bf16.mxu0 0
        %552 = vmatpush1.bf16.msra.mxu0 0
        %553 = vmatprep.subr.bf16.mxu0 0
        %554 = vmatpush1.bf16.msra.mxu0 0
        %555 = vmatprep.mubr.bf16.mxu0 %v518
        %556 = vmatmul.mubr.bf16.gmra.mrb[0].mxu0 %v511
        %v557 = vpop.f32.mrb[0].mxu0
        %v558 = vadd.f32 0.0, %v557
        %v559 = vpop.f32.mrb[0].mxu0
        %v560 = vpop.f32.mrb[0].mxu0
        %v561 = vadd.f32 0.0, %v560
        %v562 = vpop.f32.mrb[0].mxu0
        %563 = vmatprep.mubr.bf16.mxu0 %v521
        %564 = vmatmul.mubr.bf16.gmra.mrb[0].mxu0 %v513
        %v565 = vpop.f32.mrb[0].mxu0
        %v566 = vadd.f32 0.0, %v565
        %v567 = vpop.f32.mrb[0].mxu0
        %v568 = vpop.f32.mrb[0].mxu0
        %v569 = vadd.f32 0.0, %v568
        %v570 = vpop.f32.mrb[0].mxu0
        %571 = vdwg.mxu0
        %v572 = vmax.f32 %v480, %v558
        %v573 = vmax.f32 %v483, %v561
        %v574 = vmax.f32 %v488, %v566
        %v575 = vmax.f32 %v491, %v569
        %s576 = scalar_lea.vmem %s303, 64 [#allocation2]
        %v577 = vld [vmem:[%s576] sm:$0xff]
        %v578 = vld [vmem:[%s576 + $0x8] sm:$0xff]
        %v579 = vld [vmem:[%s576 + $0x10] sm:$0xff]
        %v580 = vld [vmem:[%s576 + $0x18] sm:$0xff]
        %v585 = vunpack.c.l.b16 %v577
        %v586 = vunpack.c.h.b16 %v577
        %v587 = vunpack.c.l.b16 %v578
        %v588 = vunpack.c.h.b16 %v578
        %v589 = vunpack.c.l.b16 %v579
        %v590 = vunpack.c.h.b16 %v579
        %v591 = vunpack.c.l.b16 %v580
        %v592 = vunpack.c.h.b16 %v580
        %v593 = vpack.c.b16 %v587, %v585
        %v594 = vpack.c.b16 %v588, %v586
        %v595 = vpack.c.b16 %v591, %v589
        %v596 = vpack.c.b16 %v592, %v590
        %v600 = vsel %vm431, %v594, 0
        %v603 = vsel %vm431, %v596, 0
        %605 = vmatprep.subr.bf16.mxu0 0
        %606 = vmatpush1.bf16.msra.mxu0 %v412
        %607 = vmatprep.subr.bf16.mxu0 0
        %608 = vmatpush1.bf16.msra.mxu0 %v413
        %609 = vmatprep.subr.bf16.mxu0 0
        %610 = vmatpush1.bf16.msra.mxu0 %v414
        %611 = vmatprep.subr.bf16.mxu0 0
        %612 = vmatpush1.bf16.msra.mxu0 %v415
        %613 = vmatprep.subr.bf16.mxu0 0
        %614 = vmatpush1.bf16.msra.mxu0 %v416
        %615 = vmatprep.subr.bf16.mxu0 0
        %616 = vmatpush1.bf16.msra.mxu0 %v417
        %617 = vmatprep.subr.bf16.mxu0 0
        %618 = vmatpush1.bf16.msra.mxu0 %v418
        %619 = vmatprep.subr.bf16.mxu0 0
        %620 = vmatpush1.bf16.msra.mxu0 %v419
        %621 = vmatprep.subr.bf16.mxu0 0
        %622 = vmatpush1.bf16.msra.mxu0 %v420
        %623 = vmatprep.subr.bf16.mxu0 0
        %624 = vmatpush1.bf16.msra.mxu0 %v443
        %625 = vmatprep.subr.bf16.mxu0 0
        %626 = vmatpush1.bf16.msra.mxu0 0
        %627 = vmatprep.subr.bf16.mxu0 0
        %628 = vmatpush1.bf16.msra.mxu0 0
        %629 = vmatprep.subr.bf16.mxu0 0
        %630 = vmatpush1.bf16.msra.mxu0 0
        %631 = vmatprep.subr.bf16.mxu0 0
        %632 = vmatpush1.bf16.msra.mxu0 0
        %633 = vmatprep.subr.bf16.mxu0 0
        %634 = vmatpush1.bf16.msra.mxu0 0
        %635 = vmatprep.subr.bf16.mxu0 0
        %636 = vmatpush1.bf16.msra.mxu0 0
        %637 = vmatprep.mubr.bf16.mxu0 %v600
        %638 = vmatmul.mubr.bf16.gmra.mrb[0].mxu0 %v593
        %v639 = vpop.f32.mrb[0].mxu0
        %v640 = vadd.f32 0.0, %v639
        %v641 = vpop.f32.mrb[0].mxu0
        %v642 = vpop.f32.mrb[0].mxu0
        %v643 = vadd.f32 0.0, %v642
        %v644 = vpop.f32.mrb[0].mxu0
        %645 = vmatprep.mubr.bf16.mxu0 %v603
        %646 = vmatmul.mubr.bf16.gmra.mrb[0].mxu0 %v595
        %v647 = vpop.f32.mrb[0].mxu0
        %v648 = vadd.f32 0.0, %v647
        %v649 = vpop.f32.mrb[0].mxu0
        %v650 = vpop.f32.mrb[0].mxu0
        %v651 = vadd.f32 0.0, %v650
        %v652 = vpop.f32.mrb[0].mxu0
        %653 = vdwg.mxu0
        %v654 = vmax.f32 %v572, %v640
        %v655 = vmax.f32 %v573, %v643
        %v656 = vmax.f32 %v574, %v648
        %v657 = vmax.f32 %v575, %v651
        %s658 = scalar_lea.vmem %s303, 96 [#allocation2]
        %v659 = vld [vmem:[%s658] sm:$0xff]
        %v660 = vld [vmem:[%s658 + $0x8] sm:$0xff]
        %v661 = vld [vmem:[%s658 + $0x10] sm:$0xff]
        %v662 = vld [vmem:[%s658 + $0x18] sm:$0xff]
        %v667 = vunpack.c.l.b16 %v659
        %v668 = vunpack.c.h.b16 %v659
        %v669 = vunpack.c.l.b16 %v660
        %v670 = vunpack.c.h.b16 %v660
        %v671 = vunpack.c.l.b16 %v661
        %v672 = vunpack.c.h.b16 %v661
        %v673 = vunpack.c.l.b16 %v662
        %v674 = vunpack.c.h.b16 %v662
        %v675 = vpack.c.b16 %v669, %v667
        %v676 = vpack.c.b16 %v670, %v668
        %v677 = vpack.c.b16 %v673, %v671
        %v678 = vpack.c.b16 %v674, %v672
        %v682 = vsel %vm431, %v676, 0
        %v685 = vsel %vm431, %v678, 0
        %687 = vmatprep.subr.bf16.mxu0 0
        %688 = vmatpush1.bf16.msra.mxu0 %v412
        %689 = vmatprep.subr.bf16.mxu0 0
        %690 = vmatpush1.bf16.msra.mxu0 %v413
        %691 = vmatprep.subr.bf16.mxu0 0
        %692 = vmatpush1.bf16.msra.mxu0 %v414
        %693 = vmatprep.subr.bf16.mxu0 0
        %694 = vmatpush1.bf16.msra.mxu0 %v415
        %695 = vmatprep.subr.bf16.mxu0 0
        %696 = vmatpush1.bf16.msra.mxu0 %v416
        %697 = vmatprep.subr.bf16.mxu0 0
        %698 = vmatpush1.bf16.msra.mxu0 %v417
        %699 = vmatprep.subr.bf16.mxu0 0
        %700 = vmatpush1.bf16.msra.mxu0 %v418
        %701 = vmatprep.subr.bf16.mxu0 0
        %702 = vmatpush1.bf16.msra.mxu0 %v419
        %703 = vmatprep.subr.bf16.mxu0 0
        %704 = vmatpush1.bf16.msra.mxu0 %v420
        %705 = vmatprep.subr.bf16.mxu0 0
        %706 = vmatpush1.bf16.msra.mxu0 %v443
        %707 = vmatprep.subr.bf16.mxu0 0
        %708 = vmatpush1.bf16.msra.mxu0 0
        %709 = vmatprep.subr.bf16.mxu0 0
        %710 = vmatpush1.bf16.msra.mxu0 0
        %711 = vmatprep.subr.bf16.mxu0 0
        %712 = vmatpush1.bf16.msra.mxu0 0
        %713 = vmatprep.subr.bf16.mxu0 0
        %714 = vmatpush1.bf16.msra.mxu0 0
        %715 = vmatprep.subr.bf16.mxu0 0
        %716 = vmatpush1.bf16.msra.mxu0 0
        %717 = vmatprep.subr.bf16.mxu0 0
        %718 = vmatpush1.bf16.msra.mxu0 0
        %719 = vmatprep.mubr.bf16.mxu0 %v682
        %720 = vmatmul.mubr.bf16.gmra.mrb[0].mxu0 %v675
        %v721 = vpop.f32.mrb[0].mxu0
        %v722 = vadd.f32 0.0, %v721
        %v723 = vpop.f32.mrb[0].mxu0
        %v724 = vpop.f32.mrb[0].mxu0
        %v725 = vadd.f32 0.0, %v724
        %v726 = vpop.f32.mrb[0].mxu0
        %727 = vmatprep.mubr.bf16.mxu0 %v685
        %728 = vmatmul.mubr.bf16.gmra.mrb[0].mxu0 %v677
        %v729 = vpop.f32.mrb[0].mxu0
        %v730 = vadd.f32 0.0, %v729
        %v731 = vpop.f32.mrb[0].mxu0
        %v732 = vpop.f32.mrb[0].mxu0
        %v733 = vadd.f32 0.0, %v732
        %v734 = vpop.f32.mrb[0].mxu0
        %735 = vdwg.mxu0
        %v736 = vmax.f32 %v654, %v722
        %v737 = vmax.f32 %v655, %v725
        %v738 = vmax.f32 %v656, %v730
        %v739 = vmax.f32 %v657, %v733
        %v740 = vmax.f32 %v736, 0.0
        %v741 = vmax.f32 %v737, 0.0
        %v742 = vmax.f32 %v738, 0.0
        %v743 = vmax.f32 %v739, 0.0
        %v744 = vpack.c.bf16 %v741, %v740
        %v745 = vpack.c.bf16 %v743, %v742
        %v748 = vunpack.c.l.b16 %v744
        %v749 = vunpack.c.h.b16 %v744
        %v750 = vunpack.c.l.b16 %v745
        %v751 = vunpack.c.h.b16 %v745
        %v752 = vpack.c.b16 %v748, %v748
        %v753 = vpack.c.b16 %v749, %v749
        %v754 = vpack.c.b16 %v750, %v750
        %v755 = vpack.c.b16 %v751, %v751
        %760 = vst [vmem:[%s320] sm:$0xf] %v752
        %761 = vst [vmem:[%s320 + $0x4] sm:$0xf] %v753
        %762 = vst [vmem:[%s320 + $0x8] sm:$0xf] %v754
        %763 = vst [vmem:[%s320 + $0xc] sm:$0xf] %v755
        %s764 = sand.u32 %s68, 1
        %s765 = sand.u32 %s68, 1
        %s766 = smul.addr %s765, 16
        %s767 = scalar_lea.vmem [#allocation3], %s766
        // Predicated region
        $region81: #{lenet_forward.4} parent=75 // pred_check
          %p768 = pneg %p78
        $region82: #{lenet_forward.4} parent=75 // pred_check_branch
          %770 = sbr.rel (%p768) target = $region84
        $region83: #{lenet_forward.4} parent=75 // pred_region
          %s771 = smul.u32 4, %s13
          %s772 = ssub.s32 7, %s771
          %p773 = scmp.lt.s32.totalorder %s772, 4
          %s774 = scalar_select %p773, %s772, 4
          %s775 = smul.u32 64, %s774
          %p776 = scmp.ne.s32.totalorder 0, %s775
          %s777 = smul.addr %s771, 4
          %s778 = scalar_lea.vmem %s2, %s777
          // Predicated region
          $region85: #{lenet_forward.4} parent=83 // pred_check
            %p779 = pneg %p776
          $region86: #{lenet_forward.4} parent=83 // pred_check_branch
            %781 = sbr.rel (%p779) target = $region88
          $region87: #{lenet_forward.4} parent=83 // pred_region
            // Predicated region
            $region89: #{lenet_forward.4} parent=87 // pred_check
              _
            $region90: #{lenet_forward.4} parent=87 // pred_check_branch
              %783 = sbr.rel target = $region92
            $region91: #{lenet_forward.4} parent=87 // pred_region
              // Predicated region
              $region111: #{lenet_forward.4} parent=91 // pred_check
                _
              $region112: #{lenet_forward.4} parent=91 // pred_check_branch
                %838 = sbr.rel (0) target = $region114
              $region113: #{lenet_forward.4} parent=91 // pred_region
                %s840 = sshrl.u32 %s774, 2
                // While loop
                $region115: #{lenet_forward.4} parent=113 // loop_pre_header
                  _
                $region116: #{lenet_forward.4} parent=113 // loop_header
                  %s842 = sphi 0, %s844
                  %p843 = scmp.ge.s32.totalorder %s842, %s840
                  %s847 = sphi 0, %s860
                  %s848 = sphi %s767, %s863
                  %s849 = sphi %s778, %s864
                $region117: #{lenet_forward.4} parent=113 // loop_header_branch
                  %846 = sbr.rel (%p843) target = $region121
                $region118: #{lenet_forward.4} parent=113 // loop_body
                  %v850 = vld [vmem:[%s848] sm:$0xf]
                  %851 = vst [vmem:[%s849] sm:$0xf] %v850
                  %v852 = vld [vmem:[%s848 + $0x4] sm:$0xf]
                  %853 = vst [vmem:[%s849 + $0x4] sm:$0xf] %v852
                  %v854 = vld [vmem:[%s848 + $0x8] sm:$0xf]
                  %855 = vst [vmem:[%s849 + $0x8] sm:$0xf] %v854
                  %v856 = vld [vmem:[%s848 + $0xc] sm:$0xf]
                  %857 = vst [vmem:[%s849 + $0xc] sm:$0xf] %v856
                  %s858 = sadd.s32 1, %s847
                  %p859 = scmp.ge.s32.totalorder %s858, %s840
                  %s860 = scalar_select %p859, 0, %s858
                  %s861 = smul.u32 %s860, 16
                  %s862 = smul.u32 %s860, 16
                  %s863 = scalar_lea.vmem %s767, %s861 [#allocation3]
                  %s864 = scalar_lea.vmem %s778, %s862
                $region119: #{lenet_forward.4} parent=113 // loop_footer
                  %s844 = sadd.s32 %s842, 1
                $region120: #{lenet_forward.4} parent=113 // loop_footer_branch
                  %841 = sbr.rel target = $region116
                $region121: #{lenet_forward.4} parent=113 // loop_exit
                  _
                %s865 = sshrl.u32 %s774, 2
                %s866 = sand.u32 %s774, 3
                %s867 = smul.u32 %s865, 4
                %s868 = smul.u32 4, %s867
                %s869 = scalar_lea.vmem %s767, %s868 [#allocation3]
                %s870 = smul.u32 4, %s867
                %s871 = scalar_lea.vmem %s778, %s870
                // While loop
                $region122: #{lenet_forward.4} parent=113 // loop_pre_header
                  _
                $region123: #{lenet_forward.4} parent=113 // loop_header
                  %s873 = sphi 0, %s875
                  %p874 = scmp.ge.s32.totalorder %s873, %s866
                  %s878 = sphi 0, %s885
                  %s879 = sphi %s869, %s888
                  %s880 = sphi %s871, %s889
                $region124: #{lenet_forward.4} parent=113 // loop_header_branch
                  %877 = sbr.rel (%p874) target = $region128
                $region125: #{lenet_forward.4} parent=113 // loop_body
                  %v881 = vld [vmem:[%s879] sm:$0xf]
                  %882 = vst [vmem:[%s880] sm:$0xf] %v881
                  %s883 = sadd.s32 1, %s878
                  %p884 = scmp.ge.s32.totalorder %s883, %s866
                  %s885 = scalar_select %p884, 0, %s883
                  %s886 = smul.u32 %s885, 4
                  %s887 = smul.u32 %s885, 4
                  %s888 = scalar_lea.vmem %s869, %s886 [#allocation3]
                  %s889 = scalar_lea.vmem %s871, %s887
                $region126: #{lenet_forward.4} parent=113 // loop_footer
                  %s875 = sadd.s32 %s873, 1
                $region127: #{lenet_forward.4} parent=113 // loop_footer_branch
                  %872 = sbr.rel target = $region123
                $region128: #{lenet_forward.4} parent=113 // loop_exit
                  _
              $region114: #{lenet_forward.4} parent=91 // pred_fallthru
                _
            $region92: #{lenet_forward.4} parent=87 // pred_fallthru
              _
            // Predicated region
            $region93: #{lenet_forward.4} parent=87 // pred_check
              _
            $region94: #{lenet_forward.4} parent=87 // pred_check_branch
              %785 = sbr.rel (0) target = $region96
            $region95: #{lenet_forward.4} parent=87 // pred_region
              %s787 = sshrl.u32 %s774, 2
              // While loop
              $region97: #{lenet_forward.4} parent=95 // loop_pre_header
                _
              $region98: #{lenet_forward.4} parent=95 // loop_header
                %s789 = sphi 0, %s791
                %p790 = scmp.ge.s32.totalorder %s789, %s787
                %s794 = sphi 0, %s807
                %s795 = sphi %s767, %s810
                %s796 = sphi %s778, %s811
              $region99: #{lenet_forward.4} parent=95 // loop_header_branch
                %793 = sbr.rel (%p790) target = $region103
              $region100: #{lenet_forward.4} parent=95 // loop_body
                %v797 = vld [vmem:[%s795] sm:$0xf]
                %798 = vst [vmem:[%s796] sm:$0xf] %v797
                %v799 = vld [vmem:[%s795 + $0x4] sm:$0xf]
                %800 = vst [vmem:[%s796 + $0x4] sm:$0xf] %v799
                %v801 = vld [vmem:[%s795 + $0x8] sm:$0xf]
                %802 = vst [vmem:[%s796 + $0x8] sm:$0xf] %v801
                %v803 = vld [vmem:[%s795 + $0xc] sm:$0xf]
                %804 = vst [vmem:[%s796 + $0xc] sm:$0xf] %v803
                %s805 = sadd.s32 1, %s794
                %p806 = scmp.ge.s32.totalorder %s805, %s787
                %s807 = scalar_select %p806, 0, %s805
                %s808 = smul.u32 %s807, 16
                %s809 = smul.u32 %s807, 16
                %s810 = scalar_lea.vmem %s767, %s808 [#allocation3]
                %s811 = scalar_lea.vmem %s778, %s809
              $region101: #{lenet_forward.4} parent=95 // loop_footer
                %s791 = sadd.s32 %s789, 1
              $region102: #{lenet_forward.4} parent=95 // loop_footer_branch
                %788 = sbr.rel target = $region98
              $region103: #{lenet_forward.4} parent=95 // loop_exit
                _
              %s812 = sshrl.u32 %s774, 2
              %s813 = sand.u32 %s774, 3
              %s814 = smul.u32 %s812, 4
              %s815 = smul.u32 4, %s814
              %s816 = scalar_lea.vmem %s767, %s815 [#allocation3]
              %s817 = smul.u32 4, %s814
              %s818 = scalar_lea.vmem %s778, %s817
              // While loop
              $region104: #{lenet_forward.4} parent=95 // loop_pre_header
                _
              $region105: #{lenet_forward.4} parent=95 // loop_header
                %s820 = sphi 0, %s822
                %p821 = scmp.ge.s32.totalorder %s820, %s813
                %s825 = sphi 0, %s832
                %s826 = sphi %s816, %s835
                %s827 = sphi %s818, %s836
              $region106: #{lenet_forward.4} parent=95 // loop_header_branch
                %824 = sbr.rel (%p821) target = $region110
              $region107: #{lenet_forward.4} parent=95 // loop_body
                %v828 = vld [vmem:[%s826] sm:$0xf]
                %829 = vst [vmem:[%s827] sm:$0xf] %v828
                %s830 = sadd.s32 1, %s825
                %p831 = scmp.ge.s32.totalorder %s830, %s813
                %s832 = scalar_select %p831, 0, %s830
                %s833 = smul.u32 %s832, 4
                %s834 = smul.u32 %s832, 4
                %s835 = scalar_lea.vmem %s816, %s833 [#allocation3]
                %s836 = scalar_lea.vmem %s818, %s834
              $region108: #{lenet_forward.4} parent=95 // loop_footer
                %s822 = sadd.s32 %s820, 1
              $region109: #{lenet_forward.4} parent=95 // loop_footer_branch
                %819 = sbr.rel target = $region105
              $region110: #{lenet_forward.4} parent=95 // loop_exit
                _
            $region96: #{lenet_forward.4} parent=87 // pred_fallthru
              _
          $region88: #{lenet_forward.4} parent=83 // pred_fallthru
            _
          %890 = vnop
        $region84: #{lenet_forward.4} parent=75 // pred_fallthru
          _
      $region76: #{lenet_forward.4} parent=5 // pred_fallthru
        _
      %p891 = scmp.le.s32.totalorder 2, %s8
      // Predicated region
      $region129: #{lenet_forward.4} parent=5 // pred_check
        %p892 = pneg %p891
      $region130: #{lenet_forward.4} parent=5 // pred_check_branch
        %894 = sbr.rel (%p892) target = $region132
      $region131: #{lenet_forward.4} parent=5 // pred_region
        %s895 = ssub.s32 %s8, 2
        // Predicated region
        $region133: #{lenet_forward.4} parent=131 // pred_check
          %p896 = pneg %p84
        $region134: #{lenet_forward.4} parent=131 // pred_check_branch
          %898 = sbr.rel (%p896) target = $region136
        $region135: #{lenet_forward.4} parent=131 // pred_region
          %s899 = sand.u32 %s69, 1
          %s900 = sand.u32 %s69, 1
          %s901 = smul.addr %s900, 16
          %s902 = scalar_lea.vmem [#allocation3], %s901
        $region136: #{lenet_forward.4} parent=131 // pred_fallthru
          _
      $region132: #{lenet_forward.4} parent=5 // pred_fallthru
        _
    $region6: #{lenet_forward.4} parent=1 // loop_footer
      %s12 = sadd.s32 1, %s8
    $region7: #{lenet_forward.4} parent=1 // loop_footer_branch
      %7 = sbr.rel target = $region3
    $region8: #{lenet_forward.4} parent=1 // loop_exit
      _

// kernel: lenet_forward.5
$region0: #{lenet_forward.5}
  #allocation0 [shape = 'u32[]', space=smem, size = 0x4, offset = 0x4, fixed_abs, tag = 'smem constant byte address 0x4 - core index']
  #allocation1 [shape = 'u32[144,128]{1,0:T(1,128)}', space=vmem, size = 0x12000, scoped, tag = 'internal scratch']
  %s0 = inlined_call_operand.vmem [shape: bf16[2,400], index: 0, kind: input, shape index: {}]
  %s1 = inlined_call_operand.vmem [shape: bf16[400,128], index: 1, kind: input, shape index: {}]
  %s2 = inlined_call_operand.vmem [shape: bf16[128,128], index: 2, kind: input, shape index: {}]
  %s3 = inlined_call_operand.vmem [shape: bf16[128,128], index: 3, kind: input, shape index: {}]
  %s4 = inlined_call_operand.vmem [shape: f32[8,128], index: 4, kind: input, shape index: {}]
  %s5 = inlined_call_operand.hbm [shape: f32[2,128], index: 5, kind: output, shape index: {}]
  %s6 = sld [smem:[#allocation0]]
  $region30: #{lenet_forward.5} parent=0
    _
  %s8 = ssub.s32 1, %s6
  %s9 = scalar_select 0, %s8, %s6
  $region1: #{lenet_forward.5} parent=0
    #allocation2 [shape = 'u8[1024]{0}', space=vmem, size = 0x400, scoped, tag = 'output window, operand 0, single buffered']
    #allocation3 [shape = 's32[1]{0}', space=sflag, size = 0x4, scoped, tag = 'scoped memory for lenet_forward.5']
    %10 = vsyncpa [#allocation3], 0
    // Predicated region
    $region2: #{lenet_forward.5} parent=1 // pred_check
      _
    $region3: #{lenet_forward.5} parent=1 // pred_check_branch
      %12 = sbr.rel (0) target = $region5
    $region4: #{lenet_forward.5} parent=1 // pred_region
      _
    $region5: #{lenet_forward.5} parent=1 // pred_fallthru
      _
    // Predicated region
    $region6: #{lenet_forward.5} parent=1 // pred_check
      _
    $region7: #{lenet_forward.5} parent=1 // pred_check_branch
      %14 = sbr.rel (0) target = $region9
    $region8: #{lenet_forward.5} parent=1 // pred_region
      _
    $region9: #{lenet_forward.5} parent=1 // pred_fallthru
      _
    // Predicated region
    $region10: #{lenet_forward.5} parent=1 // pred_check
      _
    $region11: #{lenet_forward.5} parent=1 // pred_check_branch
      %16 = sbr.rel (0) target = $region13
    $region12: #{lenet_forward.5} parent=1 // pred_region
      _
    $region13: #{lenet_forward.5} parent=1 // pred_fallthru
      _
    // Predicated region
    $region14: #{lenet_forward.5} parent=1 // pred_check
      _
    $region15: #{lenet_forward.5} parent=1 // pred_check_branch
      %18 = sbr.rel (0) target = $region17
    $region16: #{lenet_forward.5} parent=1 // pred_region
      _
    $region17: #{lenet_forward.5} parent=1 // pred_fallthru
      _
    // Predicated region
    $region18: #{lenet_forward.5} parent=1 // pred_check
      _
    $region19: #{lenet_forward.5} parent=1 // pred_check_branch
      %20 = sbr.rel (0) target = $region21
    $region20: #{lenet_forward.5} parent=1 // pred_region
      _
    $region21: #{lenet_forward.5} parent=1 // pred_fallthru
      _
    %v22 = vld [vmem:[%s0] sm:$0xf]
    %v23 = vld [vmem:[%s1] sm:$0xf]
    %v24 = vld [vmem:[%s1 + $0x4] sm:$0xf]
    %v25 = vld [vmem:[%s1 + $0x8] sm:$0xf]
    %v26 = vld [vmem:[%s1 + $0xc] sm:$0xf]
    %v27 = vld [vmem:[%s1 + $0x10] sm:$0xf]
    %v28 = vld [vmem:[%s1 + $0x14] sm:$0xf]
    %v29 = vld [vmem:[%s1 + $0x18] sm:$0xf]
    %v30 = vld [vmem:[%s1 + $0x1c] sm:$0xf]
    %v31 = vld [vmem:[%s1 + $0x20] sm:$0xf]
    %v32 = vld [vmem:[%s1 + $0x24] sm:$0xf]
    %v33 = vld [vmem:[%s1 + $0x28] sm:$0xf]
    %v34 = vld [vmem:[%s1 + $0x2c] sm:$0xf]
    %v35 = vld [vmem:[%s1 + $0x30] sm:$0xf]
    %v36 = vld [vmem:[%s1 + $0x34] sm:$0xf]
    %v37 = vld [vmem:[%s1 + $0x38] sm:$0xf]
    %v38 = vld [vmem:[%s1 + $0x3c] sm:$0xf]
    %v39 = vld [vmem:[%s1 + $0x40] sm:$0xf]
    %v40 = vld [vmem:[%s1 + $0x44] sm:$0xf]
    %v41 = vld [vmem:[%s1 + $0x48] sm:$0xf]
    %v42 = vld [vmem:[%s1 + $0x4c] sm:$0xf]
    %v43 = vld [vmem:[%s1 + $0x50] sm:$0xf]
    %v44 = vld [vmem:[%s1 + $0x54] sm:$0xf]
    %v45 = vld [vmem:[%s1 + $0x58] sm:$0xf]
    %v46 = vld [vmem:[%s1 + $0x5c] sm:$0xf]
    %v47 = vld [vmem:[%s1 + $0x60] sm:$0xf]
    %v48 = vld [vmem:[%s1 + $0x64] sm:$0xf]
    %v49 = vld [vmem:[%s1 + $0x68] sm:$0xf]
    %v50 = vld [vmem:[%s1 + $0x6c] sm:$0xf]
    %v51 = vld [vmem:[%s1 + $0x70] sm:$0xf]
    %v52 = vld [vmem:[%s1 + $0x74] sm:$0xf]
    %v53 = vld [vmem:[%s1 + $0x78] sm:$0xf]
    %v54 = vld [vmem:[%s1 + $0x7c] sm:$0xf]
    %v55 = vld [vmem:[%s1 + $0x80] sm:$0xf]
    %v56 = vld [vmem:[%s1 + $0x84] sm:$0xf]
    %v57 = vld [vmem:[%s1 + $0x88] sm:$0xf]
    %v58 = vld [vmem:[%s1 + $0x8c] sm:$0xf]
    %v59 = vld [vmem:[%s1 + $0x90] sm:$0xf]
    %v60 = vld [vmem:[%s1 + $0x94] sm:$0xf]
    %v61 = vld [vmem:[%s1 + $0x98] sm:$0xf]
    %v62 = vld [vmem:[%s1 + $0x9c] sm:$0xf]
    %v63 = vld [vmem:[%s1 + $0xa0] sm:$0xf]
    %v64 = vld [vmem:[%s1 + $0xa4] sm:$0xf]
    %v65 = vld [vmem:[%s1 + $0xa8] sm:$0xf]
    %v66 = vld [vmem:[%s1 + $0xac] sm:$0xf]
    %v67 = vld [vmem:[%s1 + $0xb0] sm:$0xf]
    %v68 = vld [vmem:[%s1 + $0xb4] sm:$0xf]
    %v69 = vld [vmem:[%s1 + $0xb8] sm:$0xf]
    %v70 = vld [vmem:[%s1 + $0xbc] sm:$0xf]
    %v71 = vld [vmem:[%s1 + $0xc0] sm:$0xf]
    %v72 = vld [vmem:[%s1 + $0xc4] sm:$0xf]
    %v73 = vld [vmem:[%s4] sm:$0x1]
    %v74 = vlaneseq
    %v75 = vshrl.u32 %v74, 7
    %v76 = vsub.s32 0, %v75
    %v77 = vrot.slane %v73, %v76
    %v80 = vunpack.c.l.s4 1966171168
    %v81 = vunpack.c.0.s8 %v80
    %v82 = vlaneseq
    %v83 = vshrl.u32 %v82, 7
    %v84 = vsub.s32 %v81, %v83
    %v85 = vrot.slane %v22, %v84
    %v86 = vcombine.high %v85, %v85
    %v88 = vunpack.c.l.s4 1966171168
    %v89 = vunpack.c.0.s8 %v88
    %v90 = vlaneseq
    %v91 = vshrl.u32 %v90, 7
    %v92 = vsub.s32 %v89, %v91
    %v93 = vrot.slane %v85, %v92
    %v95 = vunpack.c.l.s4 1966171168
    %v96 = vunpack.c.0.s8 %v95
    %v97 = vlaneseq
    %v98 = vshrl.u32 %v97, 7
    %v99 = vsub.s32 %v96, %v98
    %v100 = vrot.slane %v86, %v99
    %v101 = vcombine.high %v93, %v93
    %v102 = vcombine.high %v100, %v100
    %v156 = vunpack.c.l.b16 %v23
    %v157 = vunpack.c.l.b16 %v24
    %v158 = vunpack.c.l.b16 %v25
    %v159 = vunpack.c.l.b16 %v26
    %v160 = vunpack.c.l.b16 %v27
    %v161 = vunpack.c.l.b16 %v28
    %v162 = vunpack.c.l.b16 %v29
    %v163 = vunpack.c.l.b16 %v30
    %v164 = vunpack.c.l.b16 %v31
    %v165 = vunpack.c.l.b16 %v32
    %v166 = vunpack.c.l.b16 %v33
    %v167 = vunpack.c.l.b16 %v34
    %v168 = vunpack.c.l.b16 %v35
    %v169 = vunpack.c.l.b16 %v36
    %v170 = vunpack.c.l.b16 %v37
    %v171 = vunpack.c.l.b16 %v38
    %v172 = vunpack.c.l.b16 %v39
    %v173 = vunpack.c.l.b16 %v40
    %v174 = vunpack.c.l.b16 %v41
    %v175 = vunpack.c.l.b16 %v42
    %v176 = vunpack.c.l.b16 %v43
    %v177 = vunpack.c.l.b16 %v44
    %v178 = vunpack.c.l.b16 %v45
    %v179 = vunpack.c.l.b16 %v46
    %v180 = vunpack.c.l.b16 %v47
    %v181 = vunpack.c.l.b16 %v48
    %v182 = vunpack.c.l.b16 %v49
    %v183 = vunpack.c.l.b16 %v50
    %v184 = vunpack.c.l.b16 %v51
    %v185 = vunpack.c.l.b16 %v52
    %v186 = vunpack.c.l.b16 %v53
    %v187 = vunpack.c.l.b16 %v54
    %v188 = vunpack.c.l.b16 %v55
    %v189 = vunpack.c.l.b16 %v56
    %v190 = vunpack.c.l.b16 %v57
    %v191 = vunpack.c.l.b16 %v58
    %v192 = vunpack.c.l.b16 %v59
    %v193 = vunpack.c.l.b16 %v60
    %v194 = vunpack.c.l.b16 %v61
    %v195 = vunpack.c.l.b16 %v62
    %v196 = vunpack.c.l.b16 %v63
    %v197 = vunpack.c.l.b16 %v64
    %v198 = vunpack.c.l.b16 %v65
    %v199 = vunpack.c.l.b16 %v66
    %v200 = vunpack.c.l.b16 %v67
    %v201 = vunpack.c.l.b16 %v68
    %v202 = vunpack.c.l.b16 %v69
    %v203 = vunpack.c.l.b16 %v70
    %v204 = vunpack.c.l.b16 %v71
    %v205 = vunpack.c.l.b16 %v72
    %v206 = vpack.c.b16 %v157, %v156
    %v207 = vpack.c.b16 %v159, %v158
    %v208 = vpack.c.b16 %v161, %v160
    %v209 = vpack.c.b16 %v163, %v162
    %v210 = vpack.c.b16 %v165, %v164
    %v211 = vpack.c.b16 %v167, %v166
    %v212 = vpack.c.b16 %v169, %v168
    %v213 = vpack.c.b16 %v171, %v170
    %v214 = vpack.c.b16 %v173, %v172
    %v215 = vpack.c.b16 %v175, %v174
    %v216 = vpack.c.b16 %v177, %v176
    %v217 = vpack.c.b16 %v179, %v178
    %v218 = vpack.c.b16 %v181, %v180
    %v219 = vpack.c.b16 %v183, %v182
    %v220 = vpack.c.b16 %v185, %v184
    %v221 = vpack.c.b16 %v187, %v186
    %v222 = vpack.c.b16 %v189, %v188
    %v223 = vpack.c.b16 %v191, %v190
    %v224 = vpack.c.b16 %v193, %v192
    %v225 = vpack.c.b16 %v195, %v194
    %v226 = vpack.c.b16 %v197, %v196
    %v227 = vpack.c.b16 %v199, %v198
    %v228 = vpack.c.b16 %v201, %v200
    %v229 = vpack.c.b16 %v203, %v202
    %v230 = vpack.c.b16 %v205, %v204
    %vm256 = vcmask 130048
    %v258 = vsel %vm256, %v102, 0
    %260 = vmatprep.subr.bf16.mxu0 0
    %261 = vmatpush1.bf16.msra.mxu0 %v206
    %262 = vmatprep.subr.bf16.mxu0 0
    %263 = vmatpush1.bf16.msra.mxu0 %v207
    %264 = vmatprep.subr.bf16.mxu0 0
    %265 = vmatpush1.bf16.msra.mxu0 %v208
    %266 = vmatprep.subr.bf16.mxu0 0
    %267 = vmatpush1.bf16.msra.mxu0 %v209
    %268 = vmatprep.subr.bf16.mxu0 0
    %269 = vmatpush1.bf16.msra.mxu0 %v210
    %270 = vmatprep.subr.bf16.mxu0 0
    %271 = vmatpush1.bf16.msra.mxu0 %v211
    %272 = vmatprep.subr.bf16.mxu0 0
    %273 = vmatpush1.bf16.msra.mxu0 %v212
    %274 = vmatprep.subr.bf16.mxu0 0
    %275 = vmatpush1.bf16.msra.mxu0 %v213
    %276 = vmatprep.subr.bf16.mxu0 0
    %277 = vmatpush1.bf16.msra.mxu0 %v214
    %278 = vmatprep.subr.bf16.mxu0 0
    %279 = vmatpush1.bf16.msra.mxu0 %v215
    %280 = vmatprep.subr.bf16.mxu0 0
    %281 = vmatpush1.bf16.msra.mxu0 %v216
    %282 = vmatprep.subr.bf16.mxu0 0
    %283 = vmatpush1.bf16.msra.mxu0 %v217
    %284 = vmatprep.subr.bf16.mxu0 0
    %285 = vmatpush1.bf16.msra.mxu0 %v218
    %286 = vmatprep.subr.bf16.mxu0 0
    %287 = vmatpush1.bf16.msra.mxu0 %v219
    %288 = vmatprep.subr.bf16.mxu0 0
    %289 = vmatpush1.bf16.msra.mxu0 %v220
    %290 = vmatprep.subr.bf16.mxu0 0
    %291 = vmatpush1.bf16.msra.mxu0 %v221
    %292 = vmatprep.mubr.bf16.mxu0 %v100
    %293 = vmatmul.mubr.bf16.gmra.mrb[0].mxu0 %v93
    %v294 = vpop.f32.mrb[0].mxu0
    %v295 = vadd.f32 %v77, %v294
    %v296 = vpop.f32.mrb[0].mxu0
    %v297 = vpop.f32.mrb[0].mxu0
    %v298 = vpop.f32.mrb[0].mxu0
    %299 = vdwg.mxu0
    %300 = vmatprep.subr.bf16.mxu0 0
    %301 = vmatpush1.bf16.msra.mxu0 %v222
    %302 = vmatprep.subr.bf16.mxu0 0
    %303 = vmatpush1.bf16.msra.mxu0 %v223
    %304 = vmatprep.subr.bf16.mxu0 0
    %305 = vmatpush1.bf16.msra.mxu0 %v224
    %306 = vmatprep.subr.bf16.mxu0 0
    %307 = vmatpush1.bf16.msra.mxu0 %v225
    %308 = vmatprep.subr.bf16.mxu0 0
    %309 = vmatpush1.bf16.msra.mxu0 %v226
    %310 = vmatprep.subr.bf16.mxu0 0
    %311 = vmatpush1.bf16.msra.mxu0 %v227
    %312 = vmatprep.subr.bf16.mxu0 0
    %313 = vmatpush1.bf16.msra.mxu0 %v228
    %314 = vmatprep.subr.bf16.mxu0 0
    %315 = vmatpush1.bf16.msra.mxu0 %v229
    %316 = vmatprep.subr.bf16.mxu0 0
    %317 = vmatpush1.bf16.msra.mxu0 %v230
    %318 = vmatprep.subr.bf16.mxu0 0
    %319 = vmatpush1.bf16.msra.mxu0 0
    %320 = vmatprep.subr.bf16.mxu0 0
    %321 = vmatpush1.bf16.msra.mxu0 0
    %322 = vmatprep.subr.bf16.mxu0 0
    %323 = vmatpush1.bf16.msra.mxu0 0
    %324 = vmatprep.subr.bf16.mxu0 0
    %325 = vmatpush1.bf16.msra.mxu0 0
    %326 = vmatprep.subr.bf16.mxu0 0
    %327 = vmatpush1.bf16.msra.mxu0 0
    %328 = vmatprep.subr.bf16.mxu0 0
    %329 = vmatpush1.bf16.msra.mxu0 0
    %330 = vmatprep.subr.bf16.mxu0 0
    %331 = vmatpush1.bf16.msra.mxu0 0
    %332 = vmatprep.mubr.bf16.mxu0 %v258
    %333 = vmatmul.mubr.bf16.gmra.mrb[0].mxu0 %v101
    %v334 = vpop.f32.mrb[0].mxu0
    %v335 = vadd.f32 %v295, %v334
    %v336 = vpop.f32.mrb[0].mxu0
    %v337 = vpop.f32.mrb[0].mxu0
    %v338 = vpop.f32.mrb[0].mxu0
    %339 = vdwg.mxu0
    %v340 = vmax.f32 %v335, 0.0
    %v341 = vpack.c.bf16 %v340, %v340
    %v342 = vld [vmem:[%s2] sm:$0xf]
    %v343 = vld [vmem:[%s2 + $0x4] sm:$0xf]
    %v344 = vld [vmem:[%s2 + $0x8] sm:$0xf]
    %v345 = vld [vmem:[%s2 + $0xc] sm:$0xf]
    %v346 = vld [vmem:[%s2 + $0x10] sm:$0xf]
    %v347 = vld [vmem:[%s2 + $0x14] sm:$0xf]
    %v348 = vld [vmem:[%s2 + $0x18] sm:$0xf]
    %v349 = vld [vmem:[%s2 + $0x1c] sm:$0xf]
    %v350 = vld [vmem:[%s2 + $0x20] sm:$0xf]
    %v351 = vld [vmem:[%s2 + $0x24] sm:$0xf]
    %v352 = vld [vmem:[%s2 + $0x28] sm:$0xf]
    %v353 = vld [vmem:[%s2 + $0x2c] sm:$0xf]
    %v354 = vld [vmem:[%s2 + $0x30] sm:$0xf]
    %v355 = vld [vmem:[%s2 + $0x34] sm:$0xf]
    %v356 = vld [vmem:[%s2 + $0x38] sm:$0xf]
    %v357 = vld [vmem:[%s2 + $0x3c] sm:$0xf]
    %v358 = vld [vmem:[%s4 + $0x1] sm:$0x1]
    %v359 = vlaneseq
    %v360 = vshrl.u32 %v359, 7
    %v361 = vsub.s32 0, %v360
    %v362 = vrot.slane %v358, %v361
    %v379 = vunpack.c.l.b16 %v342
    %v380 = vunpack.c.l.b16 %v343
    %v381 = vunpack.c.l.b16 %v344
    %v382 = vunpack.c.l.b16 %v345
    %v383 = vunpack.c.l.b16 %v346
    %v384 = vunpack.c.l.b16 %v347
    %v385 = vunpack.c.l.b16 %v348
    %v386 = vunpack.c.l.b16 %v349
    %v387 = vunpack.c.l.b16 %v350
    %v388 = vunpack.c.l.b16 %v351
    %v389 = vunpack.c.l.b16 %v352
    %v390 = vunpack.c.l.b16 %v353
    %v391 = vunpack.c.l.b16 %v354
    %v392 = vunpack.c.l.b16 %v355
    %v393 = vunpack.c.l.b16 %v356
    %v394 = vunpack.c.l.b16 %v357
    %v395 = vpack.c.b16 %v380, %v379
    %v396 = vpack.c.b16 %v382, %v381
    %v397 = vpack.c.b16 %v384, %v383
    %v398 = vpack.c.b16 %v386, %v385
    %v399 = vpack.c.b16 %v388, %v387
    %v400 = vpack.c.b16 %v390, %v389
    %v401 = vpack.c.b16 %v392, %v391
    %v402 = vpack.c.b16 %v394, %v393
    %411 = vmatprep.subr.bf16.mxu0 0
    %412 = vmatpush1.bf16.msra.mxu0 %v395
    %413 = vmatprep.subr.bf16.mxu0 0
    %414 = vmatpush1.bf16.msra.mxu0 %v396
    %415 = vmatprep.subr.bf16.mxu0 0
    %416 = vmatpush1.bf16.msra.mxu0 %v397
    %417 = vmatprep.subr.bf16.mxu0 0
    %418 = vmatpush1.bf16.msra.mxu0 %v398
    %419 = vmatprep.subr.bf16.mxu0 0
    %420 = vmatpush1.bf16.msra.mxu0 %v399
    %421 = vmatprep.subr.bf16.mxu0 0
    %422 = vmatpush1.bf16.msra.mxu0 %v400
    %423 = vmatprep.subr.bf16.mxu0 0
    %424 = vmatpush1.bf16.msra.mxu0 %v401
    %425 = vmatprep.subr.bf16.mxu0 0
    %426 = vmatpush1.bf16.msra.mxu0 %v402
    %427 = vmatprep.subr.bf16.mxu0 0
    %428 = vmatpush1.bf16.msra.mxu0 0
    %429 = vmatprep.subr.bf16.mxu0 0
    %430 = vmatpush1.bf16.msra.mxu0 0
    %431 = vmatprep.subr.bf16.mxu0 0
    %432 = vmatpush1.bf16.msra.mxu0 0
    %433 = vmatprep.subr.bf16.mxu0 0
    %434 = vmatpush1.bf16.msra.mxu0 0
    %435 = vmatprep.subr.bf16.mxu0 0
    %436 = vmatpush1.bf16.msra.mxu0 0
    %437 = vmatprep.subr.bf16.mxu0 0
    %438 = vmatpush1.bf16.msra.mxu0 0
    %439 = vmatprep.subr.bf16.mxu0 0
    %440 = vmatpush1.bf16.msra.mxu0 0
    %441 = vmatprep.subr.bf16.mxu0 0
    %442 = vmatpush1.bf16.msra.mxu0 0
    %443 = vmatprep.mubr.bf16.mxu0 0
    %444 = vmatmul.mubr.bf16.gmra.mrb[0].mxu0 %v341
    %v445 = vpop.f32.mrb[0].mxu0
    %v446 = vadd.f32 %v362, %v445
    %v447 = vpop.f32.mrb[0].mxu0
    %v448 = vpop.f32.mrb[0].mxu0
    %v449 = vpop.f32.mrb[0].mxu0
    %450 = vdwg.mxu0
    %v451 = vmax.f32 %v446, 0.0
    %v452 = vpack.c.bf16 %v451, %v451
    %v453 = vld [vmem:[%s3] sm:$0xf]
    %v454 = vld [vmem:[%s3 + $0x4] sm:$0xf]
    %v455 = vld [vmem:[%s3 + $0x8] sm:$0xf]
    %v456 = vld [vmem:[%s3 + $0xc] sm:$0xf]
    %v457 = vld [vmem:[%s3 + $0x10] sm:$0xf]
    %v458 = vld [vmem:[%s3 + $0x14] sm:$0xf]
    %v459 = vld [vmem:[%s3 + $0x18] sm:$0xf]
    %v460 = vld [vmem:[%s3 + $0x1c] sm:$0xf]
    %v461 = vld [vmem:[%s3 + $0x20] sm:$0xf]
    %v462 = vld [vmem:[%s3 + $0x24] sm:$0xf]
    %v463 = vld [vmem:[%s3 + $0x28] sm:$0xf]
    %v464 = vld [vmem:[%s3 + $0x2c] sm:$0xf]
    %v465 = vld [vmem:[%s3 + $0x30] sm:$0xf]
    %v466 = vld [vmem:[%s3 + $0x34] sm:$0xf]
    %v467 = vld [vmem:[%s3 + $0x38] sm:$0xf]
    %v468 = vld [vmem:[%s3 + $0x3c] sm:$0xf]
    %v469 = vld [vmem:[%s4 + $0x2] sm:$0x1]
    %v470 = vlaneseq
    %v471 = vshrl.u32 %v470, 7
    %v472 = vsub.s32 0, %v471
    %v473 = vrot.slane %v469, %v472
    %v490 = vunpack.c.l.b16 %v453
    %v491 = vunpack.c.l.b16 %v454
    %v492 = vunpack.c.l.b16 %v455
    %v493 = vunpack.c.l.b16 %v456
    %v494 = vunpack.c.l.b16 %v457
    %v495 = vunpack.c.l.b16 %v458
    %v496 = vunpack.c.l.b16 %v459
    %v497 = vunpack.c.l.b16 %v460
    %v498 = vunpack.c.l.b16 %v461
    %v499 = vunpack.c.l.b16 %v462
    %v500 = vunpack.c.l.b16 %v463
    %v501 = vunpack.c.l.b16 %v464
    %v502 = vunpack.c.l.b16 %v465
    %v503 = vunpack.c.l.b16 %v466
    %v504 = vunpack.c.l.b16 %v467
    %v505 = vunpack.c.l.b16 %v468
    %v506 = vpack.c.b16 %v491, %v490
    %v507 = vpack.c.b16 %v493, %v492
    %v508 = vpack.c.b16 %v495, %v494
    %v509 = vpack.c.b16 %v497, %v496
    %v510 = vpack.c.b16 %v499, %v498
    %v511 = vpack.c.b16 %v501, %v500
    %v512 = vpack.c.b16 %v503, %v502
    %v513 = vpack.c.b16 %v505, %v504
    %522 = vmatprep.subr.bf16.mxu0 0
    %523 = vmatpush1.bf16.msra.mxu0 %v506
    %524 = vmatprep.subr.bf16.mxu0 0
    %525 = vmatpush1.bf16.msra.mxu0 %v507
    %526 = vmatprep.subr.bf16.mxu0 0
    %527 = vmatpush1.bf16.msra.mxu0 %v508
    %528 = vmatprep.subr.bf16.mxu0 0
    %529 = vmatpush1.bf16.msra.mxu0 %v509
    %530 = vmatprep.subr.bf16.mxu0 0
    %531 = vmatpush1.bf16.msra.mxu0 %v510
    %532 = vmatprep.subr.bf16.mxu0 0
    %533 = vmatpush1.bf16.msra.mxu0 %v511
    %534 = vmatprep.subr.bf16.mxu0 0
    %535 = vmatpush1.bf16.msra.mxu0 %v512
    %536 = vmatprep.subr.bf16.mxu0 0
    %537 = vmatpush1.bf16.msra.mxu0 %v513
    %538 = vmatprep.subr.bf16.mxu0 0
    %539 = vmatpush1.bf16.msra.mxu0 0
    %540 = vmatprep.subr.bf16.mxu0 0
    %541 = vmatpush1.bf16.msra.mxu0 0
    %542 = vmatprep.subr.bf16.mxu0 0
    %543 = vmatpush1.bf16.msra.mxu0 0
    %544 = vmatprep.subr.bf16.mxu0 0
    %545 = vmatpush1.bf16.msra.mxu0 0
    %546 = vmatprep.subr.bf16.mxu0 0
    %547 = vmatpush1.bf16.msra.mxu0 0
    %548 = vmatprep.subr.bf16.mxu0 0
    %549 = vmatpush1.bf16.msra.mxu0 0
    %550 = vmatprep.subr.bf16.mxu0 0
    %551 = vmatpush1.bf16.msra.mxu0 0
    %552 = vmatprep.subr.bf16.mxu0 0
    %553 = vmatpush1.bf16.msra.mxu0 0
    %554 = vmatprep.mubr.bf16.mxu0 0
    %555 = vmatmul.mubr.bf16.gmra.mrb[0].mxu0 %v452
    %v556 = vpop.f32.mrb[0].mxu0
    %v557 = vadd.f32 %v473, %v556
    %v558 = vpop.f32.mrb[0].mxu0
    %v559 = vpop.f32.mrb[0].mxu0
    %v560 = vpop.f32.mrb[0].mxu0
    %561 = vdwg.mxu0
    %562 = vst [vmem:[#allocation2] sm:$0x3] %v557
    // Predicated region
    $region22: #{lenet_forward.5} parent=1 // pred_check
      _
    $region23: #{lenet_forward.5} parent=1 // pred_check_branch
      %564 = sbr.rel (0) target = $region25
    $region24: #{lenet_forward.5} parent=1 // pred_region
      %s566 = ssub.s32 32, 32
      %567 = vsyncadd [#allocation3], %s566
      %s569 = sshll.u32 [#allocation2], 4
      %s570 = int_to_ptr.vmem [resolvable:$true] %s569
      %572 = dma.vmem_to_hbm [thread:$0]  %s570, 32, %s5, [#allocation3]
    $region25: #{lenet_forward.5} parent=1 // pred_fallthru
      _
    // Predicated region
    $region26: #{lenet_forward.5} parent=1 // pred_check
      _
    $region27: #{lenet_forward.5} parent=1 // pred_check_branch
      %574 = sbr.rel (0) target = $region29
    $region28: #{lenet_forward.5} parent=1 // pred_region
      %575 = dma.done [#allocation3], 32
    $region29: #{lenet_forward.5} parent=1 // pred_fallthru
      _
    %576 = vsyncpa [#allocation3], 1

</llo_original>
